<compile_context>
chip_gen: v5e
topology: v5e:2x2
jax: 0.10.0
libtpu: 0.0.40
codegen_flags: <defaults>
</compile_context>

<pallas_src>
import math

import jax
import jax.numpy as jnp
from jax.experimental import pallas as pl
from jax.experimental.pallas import tpu as pltpu  # noqa: F401  (kept for parity)


MATMUL_DTYPE = jnp.bfloat16   # MXU operand dtype; accumulation & gate math stay f32.


# ----------------------------------------------------------------------------
# Fused Pallas kernel
# ----------------------------------------------------------------------------

def _make_gru_vae_kernel(num_layers, S, BP, Din, H, L, O):
    """Fused GRU-VAE forward. All activations stay in vregs; no scratch."""
    n_params = 8 * num_layers + 4   # 4 per GRU layer (enc+dec) + fused head + out-linear
    cd = MATMUL_DTYPE

    def kernel(*refs):
        x_ref, eps_ref = refs[0], refs[1]
        prm = iter(refs[2:2 + n_params])
        xhat_ref, mv_ref = refs[2 + n_params], refs[3 + n_params]

        def mm(a, w):
            # bf16 operands on the MXU, f32 accumulation.
            return jnp.dot(a.astype(cd), w, preferred_element_type=jnp.float32)

        def input_gi(xs_list, wih_ref, bgi_ref):
            """Per-timestep input contribution gi_t = x_t @ W_ih + b_gi.

            Independent of the recurrence, so these MXU pushes overlap freely
            with the previous layer's tail steps. b_gi already folds b_ih plus
            the r/z parts of b_hh (PyTorch gate order r, z, n).
            """
            wih = wih_ref[...].astype(cd)      # loaded / cast once per layer
            bgi = bgi_ref[...]                 # (1, 3H) f32
            return [mm(x_t, wih) + bgi for x_t in xs_list]

        def run_layer(gi_list, whh_ref, bhn_ref):
            """GRU recurrence; only h @ W_hh stays inside the unrolled loop."""
            whh = whh_ref[...].astype(cd)                     # hoisted load
            b_hn = jnp.broadcast_to(bhn_ref[...], (BP, H))    # hoisted broadcast
            h = jnp.zeros((BP, H), jnp.float32)
            hs = []
            for t in range(S):                                # static -> unrolled
                gi = gi_list[t]
                gh = mm(h, whh)                               # (BP, 3H), no bias
                r = jax.nn.sigmoid(gi[:, :H] + gh[:, :H])
                zg = jax.nn.sigmoid(gi[:, H:2 * H] + gh[:, H:2 * H])
                n = jnp.tanh(gi[:, 2 * H:] + r * (gh[:, 2 * H:] + b_hn))
                h = (1.0 - zg) * n + zg * h
                hs.append(h)
            return hs

        # ---------------- encoder GRU stack ----------------
        x_slab = x_ref[...]                                   # (BP, S*Din) bf16
        xs = [x_slab[:, t * Din:(t + 1) * Din] for t in range(S)]
        for _ in range(num_layers):
            wih, whh, bgi, bhn = next(prm), next(prm), next(prm), next(prm)
            xs = run_layer(input_gi(xs, wih, bgi), whh, bhn)
        h_last = xs[-1]                                       # (BP, H)

        # -------- fused mean|log_var head + reparameterization --------
        wmv, bmv = next(prm), next(prm)
        mv = mm(h_last, wmv[...].astype(cd)) + bmv[...]       # (BP, 2L)
        mv_ref[...] = mv
        mean, log_var = mv[:, :L], mv[:, L:]
        z = mean + jnp.exp(0.5 * log_var) * eps_ref[...]

        # ---------------- decoder GRU stack ----------------
        for l in range(num_layers):
            wih, whh, bgi, bhn = next(prm), next(prm), next(prm), next(prm)
            if l == 0:
                # Decoder input is z repeated over time -> gi is time-invariant.
                gi0 = mm(z, wih[...].astype(cd)) + bgi[...]
                gi_list = [gi0] * S
            else:
                gi_list = input_gi(xs, wih, bgi)
            xs = run_layer(gi_list, whh, bhn)

        # ------------- output linear, lane-dense (BP, S*O) slab -------------
        wl_ref, bl_ref = next(prm), next(prm)
        wl = wl_ref[...].astype(cd)
        bl = bl_ref[...]
        xhat_ref[...] = jnp.concatenate([mm(h, wl) + bl for h in xs], axis=1)

    return kernel


def _fold_gru_biases(layer, H):
    """Fold b_hh(r,z) into b_ih; keep b_hn separate (must stay inside r*(...))."""
    b_ih, b_hh = layer["b_ih"], layer["b_hh"]                 # (1, 3H) f32
    b_gi = b_ih + jnp.concatenate(
        [b_hh[:, :2 * H], jnp.zeros_like(b_hh[:, 2 * H:])], axis=1)
    b_hn = b_hh[:, 2 * H:]                                    # (1, H)
    return [layer["w_ih_t"], layer["w_hh_t"], b_gi, b_hn]


@jax.jit
def gru_vae_forward(params, x, eps):
    """x: (B, S, input_size) batch-first, like nn.GRU(batch_first=True).

    Returns (x_hat, mean, log_var); eps plays the role of torch.randn_like.
    """
    B, S, Din = x.shape
    H = params["enc_gru"][0]["w_hh_t"].shape[0]
    L = params["fc_mean"]["w_t"].shape[1]
    O = params["dec_lin"]["w_t"].shape[1]
    num_layers = len(params["enc_gru"])
    BP = max(8, -(-B // 8) * 8)          # pad batch (sublane dim) to multiple of 8

    flat = []
    for layer in params["enc_gru"]:
        flat += _fold_gru_biases(layer, H)
    # Fused mean|var head: one (H, 2L) matmul instead of two back-to-back.
    wmv = jnp.concatenate([params["fc_mean"]["w_t"], params["fc_var"]["w_t"]], axis=1)
    bmv = jnp.concatenate([params["fc_mean"]["b"], params["fc_var"]["b"]], axis=1)
    flat += [wmv, bmv]
    for layer in params["dec_gru"]:
        flat += _fold_gru_biases(layer, H)
    flat += [params["dec_lin"]["w_t"], params["dec_lin"]["b"]]

    # Lane-dense bf16 input slab: batch on sublanes (zero-padded to BP), time x
    # features on lanes.  (8, S*Din) = (8, 128) is a single vreg; no transpose.
    x_slab = jnp.zeros((BP, S * Din), MATMUL_DTYPE)
    x_slab = x_slab.at[:B].set(x.reshape(B, S * Din).astype(MATMUL_DTYPE))
    eps_pad = jnp.zeros((BP, L), jnp.float32).at[:B].set(eps.astype(jnp.float32))

    kernel = _make_gru_vae_kernel(num_layers, S, BP, Din, H, L, O)
    xhat_slab, mv = pl.pallas_call(
        kernel,
        out_shape=(
            jax.ShapeDtypeStruct((BP, S * O), jnp.float32),   # x_hat slab (lane-dense)
            jax.ShapeDtypeStruct((BP, 2 * L), jnp.float32),   # mean | log_var
        ),
    )(x_slab, eps_pad, *flat)

    x_hat = xhat_slab[:B].reshape(B, S, O)                    # contiguous reshape
    mean, log_var = mv[:B, :L], mv[:B, L:]
    return x_hat, mean, log_var


# ----------------------------------------------------------------------------
# Parameter construction (deterministic, PyTorch-style uniform init)
# ----------------------------------------------------------------------------

def _uniform(key, shape, bound):
    return jax.random.uniform(key, shape, jnp.float32, -bound, bound)


def init_gru_stack(key, input_size, hidden_size, num_layers):
    bound = 1.0 / math.sqrt(hidden_size)
    layers = []
    for l in range(num_layers):
        din = input_size if l == 0 else hidden_size
        key, k1, k2, k3, k4 = jax.random.split(key, 5)
        w_ih = _uniform(k1, (3 * hidden_size, din), bound)          # PyTorch layout
        w_hh = _uniform(k2, (3 * hidden_size, hidden_size), bound)
        b_ih = _uniform(k3, (3 * hidden_size,), bound)
        b_hh = _uniform(k4, (3 * hidden_size,), bound)
        layers.append(dict(
            w_ih_t=w_ih.T.astype(MATMUL_DTYPE),   # (din, 3H) bf16 MXU operand
            w_hh_t=w_hh.T.astype(MATMUL_DTYPE),   # (H, 3H)
            b_ih=b_ih.reshape(1, -1),             # f32
            b_hh=b_hh.reshape(1, -1),             # f32
        ))
    return layers, key


def init_linear(key, in_f, out_f):
    bound = 1.0 / math.sqrt(in_f)
    key, k1, k2 = jax.random.split(key, 3)
    w = _uniform(k1, (out_f, in_f), bound)        # PyTorch layout
    b = _uniform(k2, (out_f,), bound)
    return dict(w_t=w.T.astype(MATMUL_DTYPE), b=b.reshape(1, -1)), key


def init_gru_vae_params(seed, input_size, hidden_size, latent_dim, num_layers):
    key = jax.random.PRNGKey(seed)
    enc_gru, key = init_gru_stack(key, input_size, hidden_size, num_layers)
    fc_mean, key = init_linear(key, hidden_size, latent_dim)
    fc_var, key = init_linear(key, hidden_size, latent_dim)
    dec_gru, key = init_gru_stack(key, latent_dim, hidden_size, num_layers)
    dec_lin, key = init_linear(key, hidden_size, input_size)
    return dict(enc_gru=enc_gru, fc_mean=fc_mean, fc_var=fc_var,
                dec_gru=dec_gru, dec_lin=dec_lin)


# ----------------------------------------------------------------------------
# Pure-JAX f32 reference (PyTorch GRU semantics) for a sanity check
# ----------------------------------------------------------------------------

def _ref_gru_layer(x_tm, layer):
    w_ih = layer["w_ih_t"].astype(jnp.float32)
    w_hh = layer["w_hh_t"].astype(jnp.float32)
    b_ih, b_hh = layer["b_ih"], layer["b_hh"]
    H = w_hh.shape[0]

    def step(h, x_t):
        gi = x_t @ w_ih + b_ih
        gh = h @ w_hh + b_hh
        r = jax.nn.sigmoid(gi[:, :H] + gh[:, :H])
        z = jax.nn.sigmoid(gi[:, H:2 * H] + gh[:, H:2 * H])
        n = jnp.tanh(gi[:, 2 * H:] + r * gh[:, 2 * H:])
        h_new = (1.0 - z) * n + z * h
        return h_new, h_new

    h0 = jnp.zeros((x_tm.shape[1], H), jnp.float32)
    _, ys = jax.lax.scan(step, h0, x_tm)
    return ys                                          # (S, B, H)


@jax.jit
def gru_vae_reference(params, x, eps):
    B, S, _ = x.shape
    f32 = lambda a: a.astype(jnp.float32)
    h_seq = jnp.transpose(x.astype(jnp.float32), (1, 0, 2))
    for layer in params["enc_gru"]:
        h_seq = _ref_gru_layer(h_seq, layer)
    h_last = h_seq[-1]
    mean = h_last @ f32(params["fc_mean"]["w_t"]) + params["fc_mean"]["b"]
    log_var = h_last @ f32(params["fc_var"]["w_t"]) + params["fc_var"]["b"]
    z = mean + jnp.exp(0.5 * log_var) * eps
    d_seq = jnp.broadcast_to(z[None], (S, B, z.shape[-1]))
    for layer in params["dec_gru"]:
        d_seq = _ref_gru_layer(d_seq, layer)
    x_hat = d_seq @ f32(params["dec_lin"]["w_t"]) + params["dec_lin"]["b"]   # (S,B,O)
    return jnp.transpose(x_hat, (1, 0, 2)), mean, log_var


# ----------------------------------------------------------------------------
# Main
# ----------------------------------------------------------------------------

if __name__ == "__main__":
    batch = 2
    seq_len = 8
    input_size = 16
    hidden_size = 32
    latent_dim = 8
    num_layers = 2

    params = init_gru_vae_params(0, input_size, hidden_size, latent_dim, num_layers)

    key = jax.random.PRNGKey(0)
    kx, keps = jax.random.split(key)
    x = jax.random.normal(kx, (batch, seq_len, input_size), jnp.float32)
    eps = jax.random.normal(keps, (batch, latent_dim), jnp.float32)  # reparam noise

    x_hat, mean, log_var = gru_vae_forward(params, x, eps)
    jax.block_until_ready((x_hat, mean, log_var))

    assert x_hat.shape == (batch, seq_len, input_size)
    assert mean.shape == (batch, latent_dim)
    assert log_var.shape == (batch, latent_dim)

    # Sanity check vs. pure-JAX f32 reference (loose tolerance covers the bf16
    # MXU operands used inside the kernel).
    r_hat, r_mean, r_logvar = gru_vae_reference(params, x, eps)
    for got, ref in ((x_hat, r_hat), (mean, r_mean), (log_var, r_logvar)):
        err = float(jnp.max(jnp.abs(got - ref)))
        assert err < 1e-1, f"mismatch vs reference: max abs err {err}"

    print("KERNEL_OK")
</pallas_src>

<mosaic_0001>
module attributes {stable_mosaic.version = 11 : i64} {
  func.func @kernel(%arg0: memref<8x128xbf16, #tpu.memory_space<vmem>>, %arg1: memref<8x8xf32, #tpu.memory_space<vmem>>, %arg2: memref<16x96xbf16, #tpu.memory_space<vmem>>, %arg3: memref<32x96xbf16, #tpu.memory_space<vmem>>, %arg4: memref<1x96xf32, #tpu.memory_space<vmem>>, %arg5: memref<1x32xf32, #tpu.memory_space<vmem>>, %arg6: memref<32x96xbf16, #tpu.memory_space<vmem>>, %arg7: memref<32x96xbf16, #tpu.memory_space<vmem>>, %arg8: memref<1x96xf32, #tpu.memory_space<vmem>>, %arg9: memref<1x32xf32, #tpu.memory_space<vmem>>, %arg10: memref<32x16xbf16, #tpu.memory_space<vmem>>, %arg11: memref<1x16xf32, #tpu.memory_space<vmem>>, %arg12: memref<8x96xbf16, #tpu.memory_space<vmem>>, %arg13: memref<32x96xbf16, #tpu.memory_space<vmem>>, %arg14: memref<1x96xf32, #tpu.memory_space<vmem>>, %arg15: memref<1x32xf32, #tpu.memory_space<vmem>>, %arg16: memref<32x96xbf16, #tpu.memory_space<vmem>>, %arg17: memref<32x96xbf16, #tpu.memory_space<vmem>>, %arg18: memref<1x96xf32, #tpu.memory_space<vmem>>, %arg19: memref<1x32xf32, #tpu.memory_space<vmem>>, %arg20: memref<32x16xbf16, #tpu.memory_space<vmem>>, %arg21: memref<1x16xf32, #tpu.memory_space<vmem>>, %arg22: memref<8x128xf32, #tpu.memory_space<vmem>>, %arg23: memref<8x16xf32, #tpu.memory_space<vmem>>) attributes {dimension_semantics = [], scalar_prefetch = 0 : i64, scratch_operands = 0 : i64, tpu.core_type = #tpu.core_type<tc>} {
    %c0 = arith.constant 0 : index
    %c0_0 = arith.constant 0 : index
    %0 = vector.load %arg0[%c0, %c0_0] : memref<8x128xbf16, #tpu.memory_space<vmem>>, vector<8x128xbf16>
    %1 = vector.extract_strided_slice %0 {offsets = [0, 0], sizes = [8, 16], strides = [1, 1]} : vector<8x128xbf16> to vector<8x16xbf16>
    %2 = vector.extract_strided_slice %0 {offsets = [0, 16], sizes = [8, 16], strides = [1, 1]} : vector<8x128xbf16> to vector<8x16xbf16>
    %3 = vector.extract_strided_slice %0 {offsets = [0, 32], sizes = [8, 16], strides = [1, 1]} : vector<8x128xbf16> to vector<8x16xbf16>
    %4 = vector.extract_strided_slice %0 {offsets = [0, 48], sizes = [8, 16], strides = [1, 1]} : vector<8x128xbf16> to vector<8x16xbf16>
    %5 = vector.extract_strided_slice %0 {offsets = [0, 64], sizes = [8, 16], strides = [1, 1]} : vector<8x128xbf16> to vector<8x16xbf16>
    %6 = vector.extract_strided_slice %0 {offsets = [0, 80], sizes = [8, 16], strides = [1, 1]} : vector<8x128xbf16> to vector<8x16xbf16>
    %7 = vector.extract_strided_slice %0 {offsets = [0, 96], sizes = [8, 16], strides = [1, 1]} : vector<8x128xbf16> to vector<8x16xbf16>
    %8 = vector.extract_strided_slice %0 {offsets = [0, 112], sizes = [8, 16], strides = [1, 1]} : vector<8x128xbf16> to vector<8x16xbf16>
    %c0_1 = arith.constant 0 : index
    %c0_2 = arith.constant 0 : index
    %9 = vector.load %arg2[%c0_1, %c0_2] : memref<16x96xbf16, #tpu.memory_space<vmem>>, vector<16x96xbf16>
    %c0_3 = arith.constant 0 : index
    %c0_4 = arith.constant 0 : index
    %10 = vector.load %arg4[%c0_3, %c0_4] : memref<1x96xf32, #tpu.memory_space<vmem>>, vector<1x96xf32>
    %cst = arith.constant dense<0.000000e+00> : vector<8x96xf32>
    %11 = tpu.matmul %1, %9, %cst {dimension_numbers = #tpu.dot_dimension_numbers<[1], [0], [0], [1], [0, 0, 1, 1], [], []>} : vector<8x16xbf16>, vector<16x96xbf16>, vector<8x96xf32> -> vector<8x96xf32>
    %12 = vector.broadcast %10 : vector<1x96xf32> to vector<8x96xf32>
    %13 = arith.addf %11, %12 : vector<8x96xf32>
    %cst_5 = arith.constant dense<0.000000e+00> : vector<8x96xf32>
    %14 = tpu.matmul %2, %9, %cst_5 {dimension_numbers = #tpu.dot_dimension_numbers<[1], [0], [0], [1], [0, 0, 1, 1], [], []>} : vector<8x16xbf16>, vector<16x96xbf16>, vector<8x96xf32> -> vector<8x96xf32>
    %15 = vector.broadcast %10 : vector<1x96xf32> to vector<8x96xf32>
    %16 = arith.addf %14, %15 : vector<8x96xf32>
    %cst_6 = arith.constant dense<0.000000e+00> : vector<8x96xf32>
    %17 = tpu.matmul %3, %9, %cst_6 {dimension_numbers = #tpu.dot_dimension_numbers<[1], [0], [0], [1], [0, 0, 1, 1], [], []>} : vector<8x16xbf16>, vector<16x96xbf16>, vector<8x96xf32> -> vector<8x96xf32>
    %18 = vector.broadcast %10 : vector<1x96xf32> to vector<8x96xf32>
    %19 = arith.addf %17, %18 : vector<8x96xf32>
    %cst_7 = arith.constant dense<0.000000e+00> : vector<8x96xf32>
    %20 = tpu.matmul %4, %9, %cst_7 {dimension_numbers = #tpu.dot_dimension_numbers<[1], [0], [0], [1], [0, 0, 1, 1], [], []>} : vector<8x16xbf16>, vector<16x96xbf16>, vector<8x96xf32> -> vector<8x96xf32>
    %21 = vector.broadcast %10 : vector<1x96xf32> to vector<8x96xf32>
    %22 = arith.addf %20, %21 : vector<8x96xf32>
    %cst_8 = arith.constant dense<0.000000e+00> : vector<8x96xf32>
    %23 = tpu.matmul %5, %9, %cst_8 {dimension_numbers = #tpu.dot_dimension_numbers<[1], [0], [0], [1], [0, 0, 1, 1], [], []>} : vector<8x16xbf16>, vector<16x96xbf16>, vector<8x96xf32> -> vector<8x96xf32>
    %24 = vector.broadcast %10 : vector<1x96xf32> to vector<8x96xf32>
    %25 = arith.addf %23, %24 : vector<8x96xf32>
    %cst_9 = arith.constant dense<0.000000e+00> : vector<8x96xf32>
    %26 = tpu.matmul %6, %9, %cst_9 {dimension_numbers = #tpu.dot_dimension_numbers<[1], [0], [0], [1], [0, 0, 1, 1], [], []>} : vector<8x16xbf16>, vector<16x96xbf16>, vector<8x96xf32> -> vector<8x96xf32>
    %27 = vector.broadcast %10 : vector<1x96xf32> to vector<8x96xf32>
    %28 = arith.addf %26, %27 : vector<8x96xf32>
    %cst_10 = arith.constant dense<0.000000e+00> : vector<8x96xf32>
    %29 = tpu.matmul %7, %9, %cst_10 {dimension_numbers = #tpu.dot_dimension_numbers<[1], [0], [0], [1], [0, 0, 1, 1], [], []>} : vector<8x16xbf16>, vector<16x96xbf16>, vector<8x96xf32> -> vector<8x96xf32>
    %30 = vector.broadcast %10 : vector<1x96xf32> to vector<8x96xf32>
    %31 = arith.addf %29, %30 : vector<8x96xf32>
    %cst_11 = arith.constant dense<0.000000e+00> : vector<8x96xf32>
    %32 = tpu.matmul %8, %9, %cst_11 {dimension_numbers = #tpu.dot_dimension_numbers<[1], [0], [0], [1], [0, 0, 1, 1], [], []>} : vector<8x16xbf16>, vector<16x96xbf16>, vector<8x96xf32> -> vector<8x96xf32>
    %33 = vector.broadcast %10 : vector<1x96xf32> to vector<8x96xf32>
    %34 = arith.addf %32, %33 : vector<8x96xf32>
    %c0_12 = arith.constant 0 : index
    %c0_13 = arith.constant 0 : index
    %35 = vector.load %arg3[%c0_12, %c0_13] : memref<32x96xbf16, #tpu.memory_space<vmem>>, vector<32x96xbf16>
    %c0_14 = arith.constant 0 : index
    %c0_15 = arith.constant 0 : index
    %36 = vector.load %arg5[%c0_14, %c0_15] : memref<1x32xf32, #tpu.memory_space<vmem>>, vector<1x32xf32>
    %37 = vector.shape_cast %36 : vector<1x32xf32> to vector<1x32xf32>
    %38 = vector.broadcast %37 : vector<1x32xf32> to vector<8x32xf32>
    %cst_16 = arith.constant 0.000000e+00 : f32
    %39 = vector.broadcast %cst_16 : f32 to vector<8x32xf32>
    %40 = arith.truncf %39 : vector<8x32xf32> to vector<8x32xbf16>
    %cst_17 = arith.constant dense<0.000000e+00> : vector<8x96xf32>
    %41 = tpu.matmul %40, %35, %cst_17 {dimension_numbers = #tpu.dot_dimension_numbers<[1], [0], [0], [1], [0, 0, 1, 1], [], []>} : vector<8x32xbf16>, vector<32x96xbf16>, vector<8x96xf32> -> vector<8x96xf32>
    %42 = vector.extract_strided_slice %13 {offsets = [0, 0], sizes = [8, 32], strides = [1, 1]} : vector<8x96xf32> to vector<8x32xf32>
    %43 = vector.extract_strided_slice %41 {offsets = [0, 0], sizes = [8, 32], strides = [1, 1]} : vector<8x96xf32> to vector<8x32xf32>
    %44 = arith.addf %42, %43 : vector<8x32xf32>
    %45 = arith.negf %44 : vector<8x32xf32>
    %46 = math.exp %45 : vector<8x32xf32>
    %cst_18 = arith.constant 1.000000e+00 : f32
    %47 = vector.broadcast %cst_18 : f32 to vector<8x32xf32>
    %48 = arith.addf %47, %46 : vector<8x32xf32>
    %49 = arith.divf %47, %48 : vector<8x32xf32>
    %50 = vector.extract_strided_slice %13 {offsets = [0, 32], sizes = [8, 32], strides = [1, 1]} : vector<8x96xf32> to vector<8x32xf32>
    %51 = vector.extract_strided_slice %41 {offsets = [0, 32], sizes = [8, 32], strides = [1, 1]} : vector<8x96xf32> to vector<8x32xf32>
    %52 = arith.addf %50, %51 : vector<8x32xf32>
    %53 = arith.negf %52 : vector<8x32xf32>
    %54 = math.exp %53 : vector<8x32xf32>
    %cst_19 = arith.constant 1.000000e+00 : f32
    %55 = vector.broadcast %cst_19 : f32 to vector<8x32xf32>
    %56 = arith.addf %55, %54 : vector<8x32xf32>
    %57 = arith.divf %55, %56 : vector<8x32xf32>
    %58 = vector.extract_strided_slice %13 {offsets = [0, 64], sizes = [8, 32], strides = [1, 1]} : vector<8x96xf32> to vector<8x32xf32>
    %59 = vector.extract_strided_slice %41 {offsets = [0, 64], sizes = [8, 32], strides = [1, 1]} : vector<8x96xf32> to vector<8x32xf32>
    %60 = arith.addf %59, %38 : vector<8x32xf32>
    %61 = arith.mulf %49, %60 : vector<8x32xf32>
    %62 = arith.addf %58, %61 : vector<8x32xf32>
    %63 = math.tanh %62 : vector<8x32xf32>
    %cst_20 = arith.constant 1.000000e+00 : f32
    %64 = vector.broadcast %cst_20 : f32 to vector<8x32xf32>
    %65 = arith.subf %64, %57 : vector<8x32xf32>
    %66 = arith.mulf %65, %63 : vector<8x32xf32>
    %67 = arith.mulf %57, %39 : vector<8x32xf32>
    %68 = arith.addf %66, %67 : vector<8x32xf32>
    %69 = arith.truncf %68 : vector<8x32xf32> to vector<8x32xbf16>
    %cst_21 = arith.constant dense<0.000000e+00> : vector<8x96xf32>
    %70 = tpu.matmul %69, %35, %cst_21 {dimension_numbers = #tpu.dot_dimension_numbers<[1], [0], [0], [1], [0, 0, 1, 1], [], []>} : vector<8x32xbf16>, vector<32x96xbf16>, vector<8x96xf32> -> vector<8x96xf32>
    %71 = vector.extract_strided_slice %16 {offsets = [0, 0], sizes = [8, 32], strides = [1, 1]} : vector<8x96xf32> to vector<8x32xf32>
    %72 = vector.extract_strided_slice %70 {offsets = [0, 0], sizes = [8, 32], strides = [1, 1]} : vector<8x96xf32> to vector<8x32xf32>
    %73 = arith.addf %71, %72 : vector<8x32xf32>
    %74 = arith.negf %73 : vector<8x32xf32>
    %75 = math.exp %74 : vector<8x32xf32>
    %cst_22 = arith.constant 1.000000e+00 : f32
    %76 = vector.broadcast %cst_22 : f32 to vector<8x32xf32>
    %77 = arith.addf %76, %75 : vector<8x32xf32>
    %78 = arith.divf %76, %77 : vector<8x32xf32>
    %79 = vector.extract_strided_slice %16 {offsets = [0, 32], sizes = [8, 32], strides = [1, 1]} : vector<8x96xf32> to vector<8x32xf32>
    %80 = vector.extract_strided_slice %70 {offsets = [0, 32], sizes = [8, 32], strides = [1, 1]} : vector<8x96xf32> to vector<8x32xf32>
    %81 = arith.addf %79, %80 : vector<8x32xf32>
    %82 = arith.negf %81 : vector<8x32xf32>
    %83 = math.exp %82 : vector<8x32xf32>
    %cst_23 = arith.constant 1.000000e+00 : f32
    %84 = vector.broadcast %cst_23 : f32 to vector<8x32xf32>
    %85 = arith.addf %84, %83 : vector<8x32xf32>
    %86 = arith.divf %84, %85 : vector<8x32xf32>
    %87 = vector.extract_strided_slice %16 {offsets = [0, 64], sizes = [8, 32], strides = [1, 1]} : vector<8x96xf32> to vector<8x32xf32>
    %88 = vector.extract_strided_slice %70 {offsets = [0, 64], sizes = [8, 32], strides = [1, 1]} : vector<8x96xf32> to vector<8x32xf32>
    %89 = arith.addf %88, %38 : vector<8x32xf32>
    %90 = arith.mulf %78, %89 : vector<8x32xf32>
    %91 = arith.addf %87, %90 : vector<8x32xf32>
    %92 = math.tanh %91 : vector<8x32xf32>
    %cst_24 = arith.constant 1.000000e+00 : f32
    %93 = vector.broadcast %cst_24 : f32 to vector<8x32xf32>
    %94 = arith.subf %93, %86 : vector<8x32xf32>
    %95 = arith.mulf %94, %92 : vector<8x32xf32>
    %96 = arith.mulf %86, %68 : vector<8x32xf32>
    %97 = arith.addf %95, %96 : vector<8x32xf32>
    %98 = arith.truncf %97 : vector<8x32xf32> to vector<8x32xbf16>
    %cst_25 = arith.constant dense<0.000000e+00> : vector<8x96xf32>
    %99 = tpu.matmul %98, %35, %cst_25 {dimension_numbers = #tpu.dot_dimension_numbers<[1], [0], [0], [1], [0, 0, 1, 1], [], []>} : vector<8x32xbf16>, vector<32x96xbf16>, vector<8x96xf32> -> vector<8x96xf32>
    %100 = vector.extract_strided_slice %19 {offsets = [0, 0], sizes = [8, 32], strides = [1, 1]} : vector<8x96xf32> to vector<8x32xf32>
    %101 = vector.extract_strided_slice %99 {offsets = [0, 0], sizes = [8, 32], strides = [1, 1]} : vector<8x96xf32> to vector<8x32xf32>
    %102 = arith.addf %100, %101 : vector<8x32xf32>
    %103 = arith.negf %102 : vector<8x32xf32>
    %104 = math.exp %103 : vector<8x32xf32>
    %cst_26 = arith.constant 1.000000e+00 : f32
    %105 = vector.broadcast %cst_26 : f32 to vector<8x32xf32>
    %106 = arith.addf %105, %104 : vector<8x32xf32>
    %107 = arith.divf %105, %106 : vector<8x32xf32>
    %108 = vector.extract_strided_slice %19 {offsets = [0, 32], sizes = [8, 32], strides = [1, 1]} : vector<8x96xf32> to vector<8x32xf32>
    %109 = vector.extract_strided_slice %99 {offsets = [0, 32], sizes = [8, 32], strides = [1, 1]} : vector<8x96xf32> to vector<8x32xf32>
    %110 = arith.addf %108, %109 : vector<8x32xf32>
    %111 = arith.negf %110 : vector<8x32xf32>
    %112 = math.exp %111 : vector<8x32xf32>
    %cst_27 = arith.constant 1.000000e+00 : f32
    %113 = vector.broadcast %cst_27 : f32 to vector<8x32xf32>
    %114 = arith.addf %113, %112 : vector<8x32xf32>
    %115 = arith.divf %113, %114 : vector<8x32xf32>
    %116 = vector.extract_strided_slice %19 {offsets = [0, 64], sizes = [8, 32], strides = [1, 1]} : vector<8x96xf32> to vector<8x32xf32>
    %117 = vector.extract_strided_slice %99 {offsets = [0, 64], sizes = [8, 32], strides = [1, 1]} : vector<8x96xf32> to vector<8x32xf32>
    %118 = arith.addf %117, %38 : vector<8x32xf32>
    %119 = arith.mulf %107, %118 : vector<8x32xf32>
    %120 = arith.addf %116, %119 : vector<8x32xf32>
    %121 = math.tanh %120 : vector<8x32xf32>
    %cst_28 = arith.constant 1.000000e+00 : f32
    %122 = vector.broadcast %cst_28 : f32 to vector<8x32xf32>
    %123 = arith.subf %122, %115 : vector<8x32xf32>
    %124 = arith.mulf %123, %121 : vector<8x32xf32>
    %125 = arith.mulf %115, %97 : vector<8x32xf32>
    %126 = arith.addf %124, %125 : vector<8x32xf32>
    %127 = arith.truncf %126 : vector<8x32xf32> to vector<8x32xbf16>
    %cst_29 = arith.constant dense<0.000000e+00> : vector<8x96xf32>
    %128 = tpu.matmul %127, %35, %cst_29 {dimension_numbers = #tpu.dot_dimension_numbers<[1], [0], [0], [1], [0, 0, 1, 1], [], []>} : vector<8x32xbf16>, vector<32x96xbf16>, vector<8x96xf32> -> vector<8x96xf32>
    %129 = vector.extract_strided_slice %22 {offsets = [0, 0], sizes = [8, 32], strides = [1, 1]} : vector<8x96xf32> to vector<8x32xf32>
    %130 = vector.extract_strided_slice %128 {offsets = [0, 0], sizes = [8, 32], strides = [1, 1]} : vector<8x96xf32> to vector<8x32xf32>
    %131 = arith.addf %129, %130 : vector<8x32xf32>
    %132 = arith.negf %131 : vector<8x32xf32>
    %133 = math.exp %132 : vector<8x32xf32>
    %cst_30 = arith.constant 1.000000e+00 : f32
    %134 = vector.broadcast %cst_30 : f32 to vector<8x32xf32>
    %135 = arith.addf %134, %133 : vector<8x32xf32>
    %136 = arith.divf %134, %135 : vector<8x32xf32>
    %137 = vector.extract_strided_slice %22 {offsets = [0, 32], sizes = [8, 32], strides = [1, 1]} : vector<8x96xf32> to vector<8x32xf32>
    %138 = vector.extract_strided_slice %128 {offsets = [0, 32], sizes = [8, 32], strides = [1, 1]} : vector<8x96xf32> to vector<8x32xf32>
    %139 = arith.addf %137, %138 : vector<8x32xf32>
    %140 = arith.negf %139 : vector<8x32xf32>
    %141 = math.exp %140 : vector<8x32xf32>
    %cst_31 = arith.constant 1.000000e+00 : f32
    %142 = vector.broadcast %cst_31 : f32 to vector<8x32xf32>
    %143 = arith.addf %142, %141 : vector<8x32xf32>
    %144 = arith.divf %142, %143 : vector<8x32xf32>
    %145 = vector.extract_strided_slice %22 {offsets = [0, 64], sizes = [8, 32], strides = [1, 1]} : vector<8x96xf32> to vector<8x32xf32>
    %146 = vector.extract_strided_slice %128 {offsets = [0, 64], sizes = [8, 32], strides = [1, 1]} : vector<8x96xf32> to vector<8x32xf32>
    %147 = arith.addf %146, %38 : vector<8x32xf32>
    %148 = arith.mulf %136, %147 : vector<8x32xf32>
    %149 = arith.addf %145, %148 : vector<8x32xf32>
    %150 = math.tanh %149 : vector<8x32xf32>
    %cst_32 = arith.constant 1.000000e+00 : f32
    %151 = vector.broadcast %cst_32 : f32 to vector<8x32xf32>
    %152 = arith.subf %151, %144 : vector<8x32xf32>
    %153 = arith.mulf %152, %150 : vector<8x32xf32>
    %154 = arith.mulf %144, %126 : vector<8x32xf32>
    %155 = arith.addf %153, %154 : vector<8x32xf32>
    %156 = arith.truncf %155 : vector<8x32xf32> to vector<8x32xbf16>
    %cst_33 = arith.constant dense<0.000000e+00> : vector<8x96xf32>
    %157 = tpu.matmul %156, %35, %cst_33 {dimension_numbers = #tpu.dot_dimension_numbers<[1], [0], [0], [1], [0, 0, 1, 1], [], []>} : vector<8x32xbf16>, vector<32x96xbf16>, vector<8x96xf32> -> vector<8x96xf32>
    %158 = vector.extract_strided_slice %25 {offsets = [0, 0], sizes = [8, 32], strides = [1, 1]} : vector<8x96xf32> to vector<8x32xf32>
    %159 = vector.extract_strided_slice %157 {offsets = [0, 0], sizes = [8, 32], strides = [1, 1]} : vector<8x96xf32> to vector<8x32xf32>
    %160 = arith.addf %158, %159 : vector<8x32xf32>
    %161 = arith.negf %160 : vector<8x32xf32>
    %162 = math.exp %161 : vector<8x32xf32>
    %cst_34 = arith.constant 1.000000e+00 : f32
    %163 = vector.broadcast %cst_34 : f32 to vector<8x32xf32>
    %164 = arith.addf %163, %162 : vector<8x32xf32>
    %165 = arith.divf %163, %164 : vector<8x32xf32>
    %166 = vector.extract_strided_slice %25 {offsets = [0, 32], sizes = [8, 32], strides = [1, 1]} : vector<8x96xf32> to vector<8x32xf32>
    %167 = vector.extract_strided_slice %157 {offsets = [0, 32], sizes = [8, 32], strides = [1, 1]} : vector<8x96xf32> to vector<8x32xf32>
    %168 = arith.addf %166, %167 : vector<8x32xf32>
    %169 = arith.negf %168 : vector<8x32xf32>
    %170 = math.exp %169 : vector<8x32xf32>
    %cst_35 = arith.constant 1.000000e+00 : f32
    %171 = vector.broadcast %cst_35 : f32 to vector<8x32xf32>
    %172 = arith.addf %171, %170 : vector<8x32xf32>
    %173 = arith.divf %171, %172 : vector<8x32xf32>
    %174 = vector.extract_strided_slice %25 {offsets = [0, 64], sizes = [8, 32], strides = [1, 1]} : vector<8x96xf32> to vector<8x32xf32>
    %175 = vector.extract_strided_slice %157 {offsets = [0, 64], sizes = [8, 32], strides = [1, 1]} : vector<8x96xf32> to vector<8x32xf32>
    %176 = arith.addf %175, %38 : vector<8x32xf32>
    %177 = arith.mulf %165, %176 : vector<8x32xf32>
    %178 = arith.addf %174, %177 : vector<8x32xf32>
    %179 = math.tanh %178 : vector<8x32xf32>
    %cst_36 = arith.constant 1.000000e+00 : f32
    %180 = vector.broadcast %cst_36 : f32 to vector<8x32xf32>
    %181 = arith.subf %180, %173 : vector<8x32xf32>
    %182 = arith.mulf %181, %179 : vector<8x32xf32>
    %183 = arith.mulf %173, %155 : vector<8x32xf32>
    %184 = arith.addf %182, %183 : vector<8x32xf32>
    %185 = arith.truncf %184 : vector<8x32xf32> to vector<8x32xbf16>
    %cst_37 = arith.constant dense<0.000000e+00> : vector<8x96xf32>
    %186 = tpu.matmul %185, %35, %cst_37 {dimension_numbers = #tpu.dot_dimension_numbers<[1], [0], [0], [1], [0, 0, 1, 1], [], []>} : vector<8x32xbf16>, vector<32x96xbf16>, vector<8x96xf32> -> vector<8x96xf32>
    %187 = vector.extract_strided_slice %28 {offsets = [0, 0], sizes = [8, 32], strides = [1, 1]} : vector<8x96xf32> to vector<8x32xf32>
    %188 = vector.extract_strided_slice %186 {offsets = [0, 0], sizes = [8, 32], strides = [1, 1]} : vector<8x96xf32> to vector<8x32xf32>
    %189 = arith.addf %187, %188 : vector<8x32xf32>
    %190 = arith.negf %189 : vector<8x32xf32>
    %191 = math.exp %190 : vector<8x32xf32>
    %cst_38 = arith.constant 1.000000e+00 : f32
    %192 = vector.broadcast %cst_38 : f32 to vector<8x32xf32>
    %193 = arith.addf %192, %191 : vector<8x32xf32>
    %194 = arith.divf %192, %193 : vector<8x32xf32>
    %195 = vector.extract_strided_slice %28 {offsets = [0, 32], sizes = [8, 32], strides = [1, 1]} : vector<8x96xf32> to vector<8x32xf32>
    %196 = vector.extract_strided_slice %186 {offsets = [0, 32], sizes = [8, 32], strides = [1, 1]} : vector<8x96xf32> to vector<8x32xf32>
    %197 = arith.addf %195, %196 : vector<8x32xf32>
    %198 = arith.negf %197 : vector<8x32xf32>
    %199 = math.exp %198 : vector<8x32xf32>
    %cst_39 = arith.constant 1.000000e+00 : f32
    %200 = vector.broadcast %cst_39 : f32 to vector<8x32xf32>
    %201 = arith.addf %200, %199 : vector<8x32xf32>
    %202 = arith.divf %200, %201 : vector<8x32xf32>
    %203 = vector.extract_strided_slice %28 {offsets = [0, 64], sizes = [8, 32], strides = [1, 1]} : vector<8x96xf32> to vector<8x32xf32>
    %204 = vector.extract_strided_slice %186 {offsets = [0, 64], sizes = [8, 32], strides = [1, 1]} : vector<8x96xf32> to vector<8x32xf32>
    %205 = arith.addf %204, %38 : vector<8x32xf32>
    %206 = arith.mulf %194, %205 : vector<8x32xf32>
    %207 = arith.addf %203, %206 : vector<8x32xf32>
    %208 = math.tanh %207 : vector<8x32xf32>
    %cst_40 = arith.constant 1.000000e+00 : f32
    %209 = vector.broadcast %cst_40 : f32 to vector<8x32xf32>
    %210 = arith.subf %209, %202 : vector<8x32xf32>
    %211 = arith.mulf %210, %208 : vector<8x32xf32>
    %212 = arith.mulf %202, %184 : vector<8x32xf32>
    %213 = arith.addf %211, %212 : vector<8x32xf32>
    %214 = arith.truncf %213 : vector<8x32xf32> to vector<8x32xbf16>
    %cst_41 = arith.constant dense<0.000000e+00> : vector<8x96xf32>
    %215 = tpu.matmul %214, %35, %cst_41 {dimension_numbers = #tpu.dot_dimension_numbers<[1], [0], [0], [1], [0, 0, 1, 1], [], []>} : vector<8x32xbf16>, vector<32x96xbf16>, vector<8x96xf32> -> vector<8x96xf32>
    %216 = vector.extract_strided_slice %31 {offsets = [0, 0], sizes = [8, 32], strides = [1, 1]} : vector<8x96xf32> to vector<8x32xf32>
    %217 = vector.extract_strided_slice %215 {offsets = [0, 0], sizes = [8, 32], strides = [1, 1]} : vector<8x96xf32> to vector<8x32xf32>
    %218 = arith.addf %216, %217 : vector<8x32xf32>
    %219 = arith.negf %218 : vector<8x32xf32>
    %220 = math.exp %219 : vector<8x32xf32>
    %cst_42 = arith.constant 1.000000e+00 : f32
    %221 = vector.broadcast %cst_42 : f32 to vector<8x32xf32>
    %222 = arith.addf %221, %220 : vector<8x32xf32>
    %223 = arith.divf %221, %222 : vector<8x32xf32>
    %224 = vector.extract_strided_slice %31 {offsets = [0, 32], sizes = [8, 32], strides = [1, 1]} : vector<8x96xf32> to vector<8x32xf32>
    %225 = vector.extract_strided_slice %215 {offsets = [0, 32], sizes = [8, 32], strides = [1, 1]} : vector<8x96xf32> to vector<8x32xf32>
    %226 = arith.addf %224, %225 : vector<8x32xf32>
    %227 = arith.negf %226 : vector<8x32xf32>
    %228 = math.exp %227 : vector<8x32xf32>
    %cst_43 = arith.constant 1.000000e+00 : f32
    %229 = vector.broadcast %cst_43 : f32 to vector<8x32xf32>
    %230 = arith.addf %229, %228 : vector<8x32xf32>
    %231 = arith.divf %229, %230 : vector<8x32xf32>
    %232 = vector.extract_strided_slice %31 {offsets = [0, 64], sizes = [8, 32], strides = [1, 1]} : vector<8x96xf32> to vector<8x32xf32>
    %233 = vector.extract_strided_slice %215 {offsets = [0, 64], sizes = [8, 32], strides = [1, 1]} : vector<8x96xf32> to vector<8x32xf32>
    %234 = arith.addf %233, %38 : vector<8x32xf32>
    %235 = arith.mulf %223, %234 : vector<8x32xf32>
    %236 = arith.addf %232, %235 : vector<8x32xf32>
    %237 = math.tanh %236 : vector<8x32xf32>
    %cst_44 = arith.constant 1.000000e+00 : f32
    %238 = vector.broadcast %cst_44 : f32 to vector<8x32xf32>
    %239 = arith.subf %238, %231 : vector<8x32xf32>
    %240 = arith.mulf %239, %237 : vector<8x32xf32>
    %241 = arith.mulf %231, %213 : vector<8x32xf32>
    %242 = arith.addf %240, %241 : vector<8x32xf32>
    %243 = arith.truncf %242 : vector<8x32xf32> to vector<8x32xbf16>
    %cst_45 = arith.constant dense<0.000000e+00> : vector<8x96xf32>
    %244 = tpu.matmul %243, %35, %cst_45 {dimension_numbers = #tpu.dot_dimension_numbers<[1], [0], [0], [1], [0, 0, 1, 1], [], []>} : vector<8x32xbf16>, vector<32x96xbf16>, vector<8x96xf32> -> vector<8x96xf32>
    %245 = vector.extract_strided_slice %34 {offsets = [0, 0], sizes = [8, 32], strides = [1, 1]} : vector<8x96xf32> to vector<8x32xf32>
    %246 = vector.extract_strided_slice %244 {offsets = [0, 0], sizes = [8, 32], strides = [1, 1]} : vector<8x96xf32> to vector<8x32xf32>
    %247 = arith.addf %245, %246 : vector<8x32xf32>
    %248 = arith.negf %247 : vector<8x32xf32>
    %249 = math.exp %248 : vector<8x32xf32>
    %cst_46 = arith.constant 1.000000e+00 : f32
    %250 = vector.broadcast %cst_46 : f32 to vector<8x32xf32>
    %251 = arith.addf %250, %249 : vector<8x32xf32>
    %252 = arith.divf %250, %251 : vector<8x32xf32>
    %253 = vector.extract_strided_slice %34 {offsets = [0, 32], sizes = [8, 32], strides = [1, 1]} : vector<8x96xf32> to vector<8x32xf32>
    %254 = vector.extract_strided_slice %244 {offsets = [0, 32], sizes = [8, 32], strides = [1, 1]} : vector<8x96xf32> to vector<8x32xf32>
    %255 = arith.addf %253, %254 : vector<8x32xf32>
    %256 = arith.negf %255 : vector<8x32xf32>
    %257 = math.exp %256 : vector<8x32xf32>
    %cst_47 = arith.constant 1.000000e+00 : f32
    %258 = vector.broadcast %cst_47 : f32 to vector<8x32xf32>
    %259 = arith.addf %258, %257 : vector<8x32xf32>
    %260 = arith.divf %258, %259 : vector<8x32xf32>
    %261 = vector.extract_strided_slice %34 {offsets = [0, 64], sizes = [8, 32], strides = [1, 1]} : vector<8x96xf32> to vector<8x32xf32>
    %262 = vector.extract_strided_slice %244 {offsets = [0, 64], sizes = [8, 32], strides = [1, 1]} : vector<8x96xf32> to vector<8x32xf32>
    %263 = arith.addf %262, %38 : vector<8x32xf32>
    %264 = arith.mulf %252, %263 : vector<8x32xf32>
    %265 = arith.addf %261, %264 : vector<8x32xf32>
    %266 = math.tanh %265 : vector<8x32xf32>
    %cst_48 = arith.constant 1.000000e+00 : f32
    %267 = vector.broadcast %cst_48 : f32 to vector<8x32xf32>
    %268 = arith.subf %267, %260 : vector<8x32xf32>
    %269 = arith.mulf %268, %266 : vector<8x32xf32>
    %270 = arith.mulf %260, %242 : vector<8x32xf32>
    %271 = arith.addf %269, %270 : vector<8x32xf32>
    %c0_49 = arith.constant 0 : index
    %c0_50 = arith.constant 0 : index
    %272 = vector.load %arg6[%c0_49, %c0_50] : memref<32x96xbf16, #tpu.memory_space<vmem>>, vector<32x96xbf16>
    %c0_51 = arith.constant 0 : index
    %c0_52 = arith.constant 0 : index
    %273 = vector.load %arg8[%c0_51, %c0_52] : memref<1x96xf32, #tpu.memory_space<vmem>>, vector<1x96xf32>
    %274 = arith.truncf %68 : vector<8x32xf32> to vector<8x32xbf16>
    %cst_53 = arith.constant dense<0.000000e+00> : vector<8x96xf32>
    %275 = tpu.matmul %274, %272, %cst_53 {dimension_numbers = #tpu.dot_dimension_numbers<[1], [0], [0], [1], [0, 0, 1, 1], [], []>} : vector<8x32xbf16>, vector<32x96xbf16>, vector<8x96xf32> -> vector<8x96xf32>
    %276 = vector.broadcast %273 : vector<1x96xf32> to vector<8x96xf32>
    %277 = arith.addf %275, %276 : vector<8x96xf32>
    %278 = arith.truncf %97 : vector<8x32xf32> to vector<8x32xbf16>
    %cst_54 = arith.constant dense<0.000000e+00> : vector<8x96xf32>
    %279 = tpu.matmul %278, %272, %cst_54 {dimension_numbers = #tpu.dot_dimension_numbers<[1], [0], [0], [1], [0, 0, 1, 1], [], []>} : vector<8x32xbf16>, vector<32x96xbf16>, vector<8x96xf32> -> vector<8x96xf32>
    %280 = vector.broadcast %273 : vector<1x96xf32> to vector<8x96xf32>
    %281 = arith.addf %279, %280 : vector<8x96xf32>
    %282 = arith.truncf %126 : vector<8x32xf32> to vector<8x32xbf16>
    %cst_55 = arith.constant dense<0.000000e+00> : vector<8x96xf32>
    %283 = tpu.matmul %282, %272, %cst_55 {dimension_numbers = #tpu.dot_dimension_numbers<[1], [0], [0], [1], [0, 0, 1, 1], [], []>} : vector<8x32xbf16>, vector<32x96xbf16>, vector<8x96xf32> -> vector<8x96xf32>
    %284 = vector.broadcast %273 : vector<1x96xf32> to vector<8x96xf32>
    %285 = arith.addf %283, %284 : vector<8x96xf32>
    %286 = arith.truncf %155 : vector<8x32xf32> to vector<8x32xbf16>
    %cst_56 = arith.constant dense<0.000000e+00> : vector<8x96xf32>
    %287 = tpu.matmul %286, %272, %cst_56 {dimension_numbers = #tpu.dot_dimension_numbers<[1], [0], [0], [1], [0, 0, 1, 1], [], []>} : vector<8x32xbf16>, vector<32x96xbf16>, vector<8x96xf32> -> vector<8x96xf32>
    %288 = vector.broadcast %273 : vector<1x96xf32> to vector<8x96xf32>
    %289 = arith.addf %287, %288 : vector<8x96xf32>
    %290 = arith.truncf %184 : vector<8x32xf32> to vector<8x32xbf16>
    %cst_57 = arith.constant dense<0.000000e+00> : vector<8x96xf32>
    %291 = tpu.matmul %290, %272, %cst_57 {dimension_numbers = #tpu.dot_dimension_numbers<[1], [0], [0], [1], [0, 0, 1, 1], [], []>} : vector<8x32xbf16>, vector<32x96xbf16>, vector<8x96xf32> -> vector<8x96xf32>
    %292 = vector.broadcast %273 : vector<1x96xf32> to vector<8x96xf32>
    %293 = arith.addf %291, %292 : vector<8x96xf32>
    %294 = arith.truncf %213 : vector<8x32xf32> to vector<8x32xbf16>
    %cst_58 = arith.constant dense<0.000000e+00> : vector<8x96xf32>
    %295 = tpu.matmul %294, %272, %cst_58 {dimension_numbers = #tpu.dot_dimension_numbers<[1], [0], [0], [1], [0, 0, 1, 1], [], []>} : vector<8x32xbf16>, vector<32x96xbf16>, vector<8x96xf32> -> vector<8x96xf32>
    %296 = vector.broadcast %273 : vector<1x96xf32> to vector<8x96xf32>
    %297 = arith.addf %295, %296 : vector<8x96xf32>
    %298 = arith.truncf %242 : vector<8x32xf32> to vector<8x32xbf16>
    %cst_59 = arith.constant dense<0.000000e+00> : vector<8x96xf32>
    %299 = tpu.matmul %298, %272, %cst_59 {dimension_numbers = #tpu.dot_dimension_numbers<[1], [0], [0], [1], [0, 0, 1, 1], [], []>} : vector<8x32xbf16>, vector<32x96xbf16>, vector<8x96xf32> -> vector<8x96xf32>
    %300 = vector.broadcast %273 : vector<1x96xf32> to vector<8x96xf32>
    %301 = arith.addf %299, %300 : vector<8x96xf32>
    %302 = arith.truncf %271 : vector<8x32xf32> to vector<8x32xbf16>
    %cst_60 = arith.constant dense<0.000000e+00> : vector<8x96xf32>
    %303 = tpu.matmul %302, %272, %cst_60 {dimension_numbers = #tpu.dot_dimension_numbers<[1], [0], [0], [1], [0, 0, 1, 1], [], []>} : vector<8x32xbf16>, vector<32x96xbf16>, vector<8x96xf32> -> vector<8x96xf32>
    %304 = vector.broadcast %273 : vector<1x96xf32> to vector<8x96xf32>
    %305 = arith.addf %303, %304 : vector<8x96xf32>
    %c0_61 = arith.constant 0 : index
    %c0_62 = arith.constant 0 : index
    %306 = vector.load %arg7[%c0_61, %c0_62] : memref<32x96xbf16, #tpu.memory_space<vmem>>, vector<32x96xbf16>
    %c0_63 = arith.constant 0 : index
    %c0_64 = arith.constant 0 : index
    %307 = vector.load %arg9[%c0_63, %c0_64] : memref<1x32xf32, #tpu.memory_space<vmem>>, vector<1x32xf32>
    %308 = vector.shape_cast %307 : vector<1x32xf32> to vector<1x32xf32>
    %309 = vector.broadcast %308 : vector<1x32xf32> to vector<8x32xf32>
    %cst_65 = arith.constant 0.000000e+00 : f32
    %310 = vector.broadcast %cst_65 : f32 to vector<8x32xf32>
    %311 = arith.truncf %310 : vector<8x32xf32> to vector<8x32xbf16>
    %cst_66 = arith.constant dense<0.000000e+00> : vector<8x96xf32>
    %312 = tpu.matmul %311, %306, %cst_66 {dimension_numbers = #tpu.dot_dimension_numbers<[1], [0], [0], [1], [0, 0, 1, 1], [], []>} : vector<8x32xbf16>, vector<32x96xbf16>, vector<8x96xf32> -> vector<8x96xf32>
    %313 = vector.extract_strided_slice %277 {offsets = [0, 0], sizes = [8, 32], strides = [1, 1]} : vector<8x96xf32> to vector<8x32xf32>
    %314 = vector.extract_strided_slice %312 {offsets = [0, 0], sizes = [8, 32], strides = [1, 1]} : vector<8x96xf32> to vector<8x32xf32>
    %315 = arith.addf %313, %314 : vector<8x32xf32>
    %316 = arith.negf %315 : vector<8x32xf32>
    %317 = math.exp %316 : vector<8x32xf32>
    %cst_67 = arith.constant 1.000000e+00 : f32
    %318 = vector.broadcast %cst_67 : f32 to vector<8x32xf32>
    %319 = arith.addf %318, %317 : vector<8x32xf32>
    %320 = arith.divf %318, %319 : vector<8x32xf32>
    %321 = vector.extract_strided_slice %277 {offsets = [0, 32], sizes = [8, 32], strides = [1, 1]} : vector<8x96xf32> to vector<8x32xf32>
    %322 = vector.extract_strided_slice %312 {offsets = [0, 32], sizes = [8, 32], strides = [1, 1]} : vector<8x96xf32> to vector<8x32xf32>
    %323 = arith.addf %321, %322 : vector<8x32xf32>
    %324 = arith.negf %323 : vector<8x32xf32>
    %325 = math.exp %324 : vector<8x32xf32>
    %cst_68 = arith.constant 1.000000e+00 : f32
    %326 = vector.broadcast %cst_68 : f32 to vector<8x32xf32>
    %327 = arith.addf %326, %325 : vector<8x32xf32>
    %328 = arith.divf %326, %327 : vector<8x32xf32>
    %329 = vector.extract_strided_slice %277 {offsets = [0, 64], sizes = [8, 32], strides = [1, 1]} : vector<8x96xf32> to vector<8x32xf32>
    %330 = vector.extract_strided_slice %312 {offsets = [0, 64], sizes = [8, 32], strides = [1, 1]} : vector<8x96xf32> to vector<8x32xf32>
    %331 = arith.addf %330, %309 : vector<8x32xf32>
    %332 = arith.mulf %320, %331 : vector<8x32xf32>
    %333 = arith.addf %329, %332 : vector<8x32xf32>
    %334 = math.tanh %333 : vector<8x32xf32>
    %cst_69 = arith.constant 1.000000e+00 : f32
    %335 = vector.broadcast %cst_69 : f32 to vector<8x32xf32>
    %336 = arith.subf %335, %328 : vector<8x32xf32>
    %337 = arith.mulf %336, %334 : vector<8x32xf32>
    %338 = arith.mulf %328, %310 : vector<8x32xf32>
    %339 = arith.addf %337, %338 : vector<8x32xf32>
    %340 = arith.truncf %339 : vector<8x32xf32> to vector<8x32xbf16>
    %cst_70 = arith.constant dense<0.000000e+00> : vector<8x96xf32>
    %341 = tpu.matmul %340, %306, %cst_70 {dimension_numbers = #tpu.dot_dimension_numbers<[1], [0], [0], [1], [0, 0, 1, 1], [], []>} : vector<8x32xbf16>, vector<32x96xbf16>, vector<8x96xf32> -> vector<8x96xf32>
    %342 = vector.extract_strided_slice %281 {offsets = [0, 0], sizes = [8, 32], strides = [1, 1]} : vector<8x96xf32> to vector<8x32xf32>
    %343 = vector.extract_strided_slice %341 {offsets = [0, 0], sizes = [8, 32], strides = [1, 1]} : vector<8x96xf32> to vector<8x32xf32>
    %344 = arith.addf %342, %343 : vector<8x32xf32>
    %345 = arith.negf %344 : vector<8x32xf32>
    %346 = math.exp %345 : vector<8x32xf32>
    %cst_71 = arith.constant 1.000000e+00 : f32
    %347 = vector.broadcast %cst_71 : f32 to vector<8x32xf32>
    %348 = arith.addf %347, %346 : vector<8x32xf32>
    %349 = arith.divf %347, %348 : vector<8x32xf32>
    %350 = vector.extract_strided_slice %281 {offsets = [0, 32], sizes = [8, 32], strides = [1, 1]} : vector<8x96xf32> to vector<8x32xf32>
    %351 = vector.extract_strided_slice %341 {offsets = [0, 32], sizes = [8, 32], strides = [1, 1]} : vector<8x96xf32> to vector<8x32xf32>
    %352 = arith.addf %350, %351 : vector<8x32xf32>
    %353 = arith.negf %352 : vector<8x32xf32>
    %354 = math.exp %353 : vector<8x32xf32>
    %cst_72 = arith.constant 1.000000e+00 : f32
    %355 = vector.broadcast %cst_72 : f32 to vector<8x32xf32>
    %356 = arith.addf %355, %354 : vector<8x32xf32>
    %357 = arith.divf %355, %356 : vector<8x32xf32>
    %358 = vector.extract_strided_slice %281 {offsets = [0, 64], sizes = [8, 32], strides = [1, 1]} : vector<8x96xf32> to vector<8x32xf32>
    %359 = vector.extract_strided_slice %341 {offsets = [0, 64], sizes = [8, 32], strides = [1, 1]} : vector<8x96xf32> to vector<8x32xf32>
    %360 = arith.addf %359, %309 : vector<8x32xf32>
    %361 = arith.mulf %349, %360 : vector<8x32xf32>
    %362 = arith.addf %358, %361 : vector<8x32xf32>
    %363 = math.tanh %362 : vector<8x32xf32>
    %cst_73 = arith.constant 1.000000e+00 : f32
    %364 = vector.broadcast %cst_73 : f32 to vector<8x32xf32>
    %365 = arith.subf %364, %357 : vector<8x32xf32>
    %366 = arith.mulf %365, %363 : vector<8x32xf32>
    %367 = arith.mulf %357, %339 : vector<8x32xf32>
    %368 = arith.addf %366, %367 : vector<8x32xf32>
    %369 = arith.truncf %368 : vector<8x32xf32> to vector<8x32xbf16>
    %cst_74 = arith.constant dense<0.000000e+00> : vector<8x96xf32>
    %370 = tpu.matmul %369, %306, %cst_74 {dimension_numbers = #tpu.dot_dimension_numbers<[1], [0], [0], [1], [0, 0, 1, 1], [], []>} : vector<8x32xbf16>, vector<32x96xbf16>, vector<8x96xf32> -> vector<8x96xf32>
    %371 = vector.extract_strided_slice %285 {offsets = [0, 0], sizes = [8, 32], strides = [1, 1]} : vector<8x96xf32> to vector<8x32xf32>
    %372 = vector.extract_strided_slice %370 {offsets = [0, 0], sizes = [8, 32], strides = [1, 1]} : vector<8x96xf32> to vector<8x32xf32>
    %373 = arith.addf %371, %372 : vector<8x32xf32>
    %374 = arith.negf %373 : vector<8x32xf32>
    %375 = math.exp %374 : vector<8x32xf32>
    %cst_75 = arith.constant 1.000000e+00 : f32
    %376 = vector.broadcast %cst_75 : f32 to vector<8x32xf32>
    %377 = arith.addf %376, %375 : vector<8x32xf32>
    %378 = arith.divf %376, %377 : vector<8x32xf32>
    %379 = vector.extract_strided_slice %285 {offsets = [0, 32], sizes = [8, 32], strides = [1, 1]} : vector<8x96xf32> to vector<8x32xf32>
    %380 = vector.extract_strided_slice %370 {offsets = [0, 32], sizes = [8, 32], strides = [1, 1]} : vector<8x96xf32> to vector<8x32xf32>
    %381 = arith.addf %379, %380 : vector<8x32xf32>
    %382 = arith.negf %381 : vector<8x32xf32>
    %383 = math.exp %382 : vector<8x32xf32>
    %cst_76 = arith.constant 1.000000e+00 : f32
    %384 = vector.broadcast %cst_76 : f32 to vector<8x32xf32>
    %385 = arith.addf %384, %383 : vector<8x32xf32>
    %386 = arith.divf %384, %385 : vector<8x32xf32>
    %387 = vector.extract_strided_slice %285 {offsets = [0, 64], sizes = [8, 32], strides = [1, 1]} : vector<8x96xf32> to vector<8x32xf32>
    %388 = vector.extract_strided_slice %370 {offsets = [0, 64], sizes = [8, 32], strides = [1, 1]} : vector<8x96xf32> to vector<8x32xf32>
    %389 = arith.addf %388, %309 : vector<8x32xf32>
    %390 = arith.mulf %378, %389 : vector<8x32xf32>
    %391 = arith.addf %387, %390 : vector<8x32xf32>
    %392 = math.tanh %391 : vector<8x32xf32>
    %cst_77 = arith.constant 1.000000e+00 : f32
    %393 = vector.broadcast %cst_77 : f32 to vector<8x32xf32>
    %394 = arith.subf %393, %386 : vector<8x32xf32>
    %395 = arith.mulf %394, %392 : vector<8x32xf32>
    %396 = arith.mulf %386, %368 : vector<8x32xf32>
    %397 = arith.addf %395, %396 : vector<8x32xf32>
    %398 = arith.truncf %397 : vector<8x32xf32> to vector<8x32xbf16>
    %cst_78 = arith.constant dense<0.000000e+00> : vector<8x96xf32>
    %399 = tpu.matmul %398, %306, %cst_78 {dimension_numbers = #tpu.dot_dimension_numbers<[1], [0], [0], [1], [0, 0, 1, 1], [], []>} : vector<8x32xbf16>, vector<32x96xbf16>, vector<8x96xf32> -> vector<8x96xf32>
    %400 = vector.extract_strided_slice %289 {offsets = [0, 0], sizes = [8, 32], strides = [1, 1]} : vector<8x96xf32> to vector<8x32xf32>
    %401 = vector.extract_strided_slice %399 {offsets = [0, 0], sizes = [8, 32], strides = [1, 1]} : vector<8x96xf32> to vector<8x32xf32>
    %402 = arith.addf %400, %401 : vector<8x32xf32>
    %403 = arith.negf %402 : vector<8x32xf32>
    %404 = math.exp %403 : vector<8x32xf32>
    %cst_79 = arith.constant 1.000000e+00 : f32
    %405 = vector.broadcast %cst_79 : f32 to vector<8x32xf32>
    %406 = arith.addf %405, %404 : vector<8x32xf32>
    %407 = arith.divf %405, %406 : vector<8x32xf32>
    %408 = vector.extract_strided_slice %289 {offsets = [0, 32], sizes = [8, 32], strides = [1, 1]} : vector<8x96xf32> to vector<8x32xf32>
    %409 = vector.extract_strided_slice %399 {offsets = [0, 32], sizes = [8, 32], strides = [1, 1]} : vector<8x96xf32> to vector<8x32xf32>
    %410 = arith.addf %408, %409 : vector<8x32xf32>
    %411 = arith.negf %410 : vector<8x32xf32>
    %412 = math.exp %411 : vector<8x32xf32>
    %cst_80 = arith.constant 1.000000e+00 : f32
    %413 = vector.broadcast %cst_80 : f32 to vector<8x32xf32>
    %414 = arith.addf %413, %412 : vector<8x32xf32>
    %415 = arith.divf %413, %414 : vector<8x32xf32>
    %416 = vector.extract_strided_slice %289 {offsets = [0, 64], sizes = [8, 32], strides = [1, 1]} : vector<8x96xf32> to vector<8x32xf32>
    %417 = vector.extract_strided_slice %399 {offsets = [0, 64], sizes = [8, 32], strides = [1, 1]} : vector<8x96xf32> to vector<8x32xf32>
    %418 = arith.addf %417, %309 : vector<8x32xf32>
    %419 = arith.mulf %407, %418 : vector<8x32xf32>
    %420 = arith.addf %416, %419 : vector<8x32xf32>
    %421 = math.tanh %420 : vector<8x32xf32>
    %cst_81 = arith.constant 1.000000e+00 : f32
    %422 = vector.broadcast %cst_81 : f32 to vector<8x32xf32>
    %423 = arith.subf %422, %415 : vector<8x32xf32>
    %424 = arith.mulf %423, %421 : vector<8x32xf32>
    %425 = arith.mulf %415, %397 : vector<8x32xf32>
    %426 = arith.addf %424, %425 : vector<8x32xf32>
    %427 = arith.truncf %426 : vector<8x32xf32> to vector<8x32xbf16>
    %cst_82 = arith.constant dense<0.000000e+00> : vector<8x96xf32>
    %428 = tpu.matmul %427, %306, %cst_82 {dimension_numbers = #tpu.dot_dimension_numbers<[1], [0], [0], [1], [0, 0, 1, 1], [], []>} : vector<8x32xbf16>, vector<32x96xbf16>, vector<8x96xf32> -> vector<8x96xf32>
    %429 = vector.extract_strided_slice %293 {offsets = [0, 0], sizes = [8, 32], strides = [1, 1]} : vector<8x96xf32> to vector<8x32xf32>
    %430 = vector.extract_strided_slice %428 {offsets = [0, 0], sizes = [8, 32], strides = [1, 1]} : vector<8x96xf32> to vector<8x32xf32>
    %431 = arith.addf %429, %430 : vector<8x32xf32>
    %432 = arith.negf %431 : vector<8x32xf32>
    %433 = math.exp %432 : vector<8x32xf32>
    %cst_83 = arith.constant 1.000000e+00 : f32
    %434 = vector.broadcast %cst_83 : f32 to vector<8x32xf32>
    %435 = arith.addf %434, %433 : vector<8x32xf32>
    %436 = arith.divf %434, %435 : vector<8x32xf32>
    %437 = vector.extract_strided_slice %293 {offsets = [0, 32], sizes = [8, 32], strides = [1, 1]} : vector<8x96xf32> to vector<8x32xf32>
    %438 = vector.extract_strided_slice %428 {offsets = [0, 32], sizes = [8, 32], strides = [1, 1]} : vector<8x96xf32> to vector<8x32xf32>
    %439 = arith.addf %437, %438 : vector<8x32xf32>
    %440 = arith.negf %439 : vector<8x32xf32>
    %441 = math.exp %440 : vector<8x32xf32>
    %cst_84 = arith.constant 1.000000e+00 : f32
    %442 = vector.broadcast %cst_84 : f32 to vector<8x32xf32>
    %443 = arith.addf %442, %441 : vector<8x32xf32>
    %444 = arith.divf %442, %443 : vector<8x32xf32>
    %445 = vector.extract_strided_slice %293 {offsets = [0, 64], sizes = [8, 32], strides = [1, 1]} : vector<8x96xf32> to vector<8x32xf32>
    %446 = vector.extract_strided_slice %428 {offsets = [0, 64], sizes = [8, 32], strides = [1, 1]} : vector<8x96xf32> to vector<8x32xf32>
    %447 = arith.addf %446, %309 : vector<8x32xf32>
    %448 = arith.mulf %436, %447 : vector<8x32xf32>
    %449 = arith.addf %445, %448 : vector<8x32xf32>
    %450 = math.tanh %449 : vector<8x32xf32>
    %cst_85 = arith.constant 1.000000e+00 : f32
    %451 = vector.broadcast %cst_85 : f32 to vector<8x32xf32>
    %452 = arith.subf %451, %444 : vector<8x32xf32>
    %453 = arith.mulf %452, %450 : vector<8x32xf32>
    %454 = arith.mulf %444, %426 : vector<8x32xf32>
    %455 = arith.addf %453, %454 : vector<8x32xf32>
    %456 = arith.truncf %455 : vector<8x32xf32> to vector<8x32xbf16>
    %cst_86 = arith.constant dense<0.000000e+00> : vector<8x96xf32>
    %457 = tpu.matmul %456, %306, %cst_86 {dimension_numbers = #tpu.dot_dimension_numbers<[1], [0], [0], [1], [0, 0, 1, 1], [], []>} : vector<8x32xbf16>, vector<32x96xbf16>, vector<8x96xf32> -> vector<8x96xf32>
    %458 = vector.extract_strided_slice %297 {offsets = [0, 0], sizes = [8, 32], strides = [1, 1]} : vector<8x96xf32> to vector<8x32xf32>
    %459 = vector.extract_strided_slice %457 {offsets = [0, 0], sizes = [8, 32], strides = [1, 1]} : vector<8x96xf32> to vector<8x32xf32>
    %460 = arith.addf %458, %459 : vector<8x32xf32>
    %461 = arith.negf %460 : vector<8x32xf32>
    %462 = math.exp %461 : vector<8x32xf32>
    %cst_87 = arith.constant 1.000000e+00 : f32
    %463 = vector.broadcast %cst_87 : f32 to vector<8x32xf32>
    %464 = arith.addf %463, %462 : vector<8x32xf32>
    %465 = arith.divf %463, %464 : vector<8x32xf32>
    %466 = vector.extract_strided_slice %297 {offsets = [0, 32], sizes = [8, 32], strides = [1, 1]} : vector<8x96xf32> to vector<8x32xf32>
    %467 = vector.extract_strided_slice %457 {offsets = [0, 32], sizes = [8, 32], strides = [1, 1]} : vector<8x96xf32> to vector<8x32xf32>
    %468 = arith.addf %466, %467 : vector<8x32xf32>
    %469 = arith.negf %468 : vector<8x32xf32>
    %470 = math.exp %469 : vector<8x32xf32>
    %cst_88 = arith.constant 1.000000e+00 : f32
    %471 = vector.broadcast %cst_88 : f32 to vector<8x32xf32>
    %472 = arith.addf %471, %470 : vector<8x32xf32>
    %473 = arith.divf %471, %472 : vector<8x32xf32>
    %474 = vector.extract_strided_slice %297 {offsets = [0, 64], sizes = [8, 32], strides = [1, 1]} : vector<8x96xf32> to vector<8x32xf32>
    %475 = vector.extract_strided_slice %457 {offsets = [0, 64], sizes = [8, 32], strides = [1, 1]} : vector<8x96xf32> to vector<8x32xf32>
    %476 = arith.addf %475, %309 : vector<8x32xf32>
    %477 = arith.mulf %465, %476 : vector<8x32xf32>
    %478 = arith.addf %474, %477 : vector<8x32xf32>
    %479 = math.tanh %478 : vector<8x32xf32>
    %cst_89 = arith.constant 1.000000e+00 : f32
    %480 = vector.broadcast %cst_89 : f32 to vector<8x32xf32>
    %481 = arith.subf %480, %473 : vector<8x32xf32>
    %482 = arith.mulf %481, %479 : vector<8x32xf32>
    %483 = arith.mulf %473, %455 : vector<8x32xf32>
    %484 = arith.addf %482, %483 : vector<8x32xf32>
    %485 = arith.truncf %484 : vector<8x32xf32> to vector<8x32xbf16>
    %cst_90 = arith.constant dense<0.000000e+00> : vector<8x96xf32>
    %486 = tpu.matmul %485, %306, %cst_90 {dimension_numbers = #tpu.dot_dimension_numbers<[1], [0], [0], [1], [0, 0, 1, 1], [], []>} : vector<8x32xbf16>, vector<32x96xbf16>, vector<8x96xf32> -> vector<8x96xf32>
    %487 = vector.extract_strided_slice %301 {offsets = [0, 0], sizes = [8, 32], strides = [1, 1]} : vector<8x96xf32> to vector<8x32xf32>
    %488 = vector.extract_strided_slice %486 {offsets = [0, 0], sizes = [8, 32], strides = [1, 1]} : vector<8x96xf32> to vector<8x32xf32>
    %489 = arith.addf %487, %488 : vector<8x32xf32>
    %490 = arith.negf %489 : vector<8x32xf32>
    %491 = math.exp %490 : vector<8x32xf32>
    %cst_91 = arith.constant 1.000000e+00 : f32
    %492 = vector.broadcast %cst_91 : f32 to vector<8x32xf32>
    %493 = arith.addf %492, %491 : vector<8x32xf32>
    %494 = arith.divf %492, %493 : vector<8x32xf32>
    %495 = vector.extract_strided_slice %301 {offsets = [0, 32], sizes = [8, 32], strides = [1, 1]} : vector<8x96xf32> to vector<8x32xf32>
    %496 = vector.extract_strided_slice %486 {offsets = [0, 32], sizes = [8, 32], strides = [1, 1]} : vector<8x96xf32> to vector<8x32xf32>
    %497 = arith.addf %495, %496 : vector<8x32xf32>
    %498 = arith.negf %497 : vector<8x32xf32>
    %499 = math.exp %498 : vector<8x32xf32>
    %cst_92 = arith.constant 1.000000e+00 : f32
    %500 = vector.broadcast %cst_92 : f32 to vector<8x32xf32>
    %501 = arith.addf %500, %499 : vector<8x32xf32>
    %502 = arith.divf %500, %501 : vector<8x32xf32>
    %503 = vector.extract_strided_slice %301 {offsets = [0, 64], sizes = [8, 32], strides = [1, 1]} : vector<8x96xf32> to vector<8x32xf32>
    %504 = vector.extract_strided_slice %486 {offsets = [0, 64], sizes = [8, 32], strides = [1, 1]} : vector<8x96xf32> to vector<8x32xf32>
    %505 = arith.addf %504, %309 : vector<8x32xf32>
    %506 = arith.mulf %494, %505 : vector<8x32xf32>
    %507 = arith.addf %503, %506 : vector<8x32xf32>
    %508 = math.tanh %507 : vector<8x32xf32>
    %cst_93 = arith.constant 1.000000e+00 : f32
    %509 = vector.broadcast %cst_93 : f32 to vector<8x32xf32>
    %510 = arith.subf %509, %502 : vector<8x32xf32>
    %511 = arith.mulf %510, %508 : vector<8x32xf32>
    %512 = arith.mulf %502, %484 : vector<8x32xf32>
    %513 = arith.addf %511, %512 : vector<8x32xf32>
    %514 = arith.truncf %513 : vector<8x32xf32> to vector<8x32xbf16>
    %cst_94 = arith.constant dense<0.000000e+00> : vector<8x96xf32>
    %515 = tpu.matmul %514, %306, %cst_94 {dimension_numbers = #tpu.dot_dimension_numbers<[1], [0], [0], [1], [0, 0, 1, 1], [], []>} : vector<8x32xbf16>, vector<32x96xbf16>, vector<8x96xf32> -> vector<8x96xf32>
    %516 = vector.extract_strided_slice %305 {offsets = [0, 0], sizes = [8, 32], strides = [1, 1]} : vector<8x96xf32> to vector<8x32xf32>
    %517 = vector.extract_strided_slice %515 {offsets = [0, 0], sizes = [8, 32], strides = [1, 1]} : vector<8x96xf32> to vector<8x32xf32>
    %518 = arith.addf %516, %517 : vector<8x32xf32>
    %519 = arith.negf %518 : vector<8x32xf32>
    %520 = math.exp %519 : vector<8x32xf32>
    %cst_95 = arith.constant 1.000000e+00 : f32
    %521 = vector.broadcast %cst_95 : f32 to vector<8x32xf32>
    %522 = arith.addf %521, %520 : vector<8x32xf32>
    %523 = arith.divf %521, %522 : vector<8x32xf32>
    %524 = vector.extract_strided_slice %305 {offsets = [0, 32], sizes = [8, 32], strides = [1, 1]} : vector<8x96xf32> to vector<8x32xf32>
    %525 = vector.extract_strided_slice %515 {offsets = [0, 32], sizes = [8, 32], strides = [1, 1]} : vector<8x96xf32> to vector<8x32xf32>
    %526 = arith.addf %524, %525 : vector<8x32xf32>
    %527 = arith.negf %526 : vector<8x32xf32>
    %528 = math.exp %527 : vector<8x32xf32>
    %cst_96 = arith.constant 1.000000e+00 : f32
    %529 = vector.broadcast %cst_96 : f32 to vector<8x32xf32>
    %530 = arith.addf %529, %528 : vector<8x32xf32>
    %531 = arith.divf %529, %530 : vector<8x32xf32>
    %532 = vector.extract_strided_slice %305 {offsets = [0, 64], sizes = [8, 32], strides = [1, 1]} : vector<8x96xf32> to vector<8x32xf32>
    %533 = vector.extract_strided_slice %515 {offsets = [0, 64], sizes = [8, 32], strides = [1, 1]} : vector<8x96xf32> to vector<8x32xf32>
    %534 = arith.addf %533, %309 : vector<8x32xf32>
    %535 = arith.mulf %523, %534 : vector<8x32xf32>
    %536 = arith.addf %532, %535 : vector<8x32xf32>
    %537 = math.tanh %536 : vector<8x32xf32>
    %cst_97 = arith.constant 1.000000e+00 : f32
    %538 = vector.broadcast %cst_97 : f32 to vector<8x32xf32>
    %539 = arith.subf %538, %531 : vector<8x32xf32>
    %540 = arith.mulf %539, %537 : vector<8x32xf32>
    %541 = arith.mulf %531, %513 : vector<8x32xf32>
    %542 = arith.addf %540, %541 : vector<8x32xf32>
    %c0_98 = arith.constant 0 : index
    %c0_99 = arith.constant 0 : index
    %543 = vector.load %arg10[%c0_98, %c0_99] : memref<32x16xbf16, #tpu.memory_space<vmem>>, vector<32x16xbf16>
    %544 = arith.truncf %542 : vector<8x32xf32> to vector<8x32xbf16>
    %cst_100 = arith.constant dense<0.000000e+00> : vector<8x16xf32>
    %545 = tpu.matmul %544, %543, %cst_100 {dimension_numbers = #tpu.dot_dimension_numbers<[1], [0], [0], [1], [0, 0, 1, 1], [], []>} : vector<8x32xbf16>, vector<32x16xbf16>, vector<8x16xf32> -> vector<8x16xf32>
    %c0_101 = arith.constant 0 : index
    %c0_102 = arith.constant 0 : index
    %546 = vector.load %arg11[%c0_101, %c0_102] : memref<1x16xf32, #tpu.memory_space<vmem>>, vector<1x16xf32>
    %547 = vector.broadcast %546 : vector<1x16xf32> to vector<8x16xf32>
    %548 = arith.addf %545, %547 : vector<8x16xf32>
    %c0_103 = arith.constant 0 : index
    %c0_104 = arith.constant 0 : index
    %549 = vector.load %arg23[%c0_103, %c0_104] : memref<8x16xf32, #tpu.memory_space<vmem>>, vector<8x16xf32>
    tpu.vector_store %arg23[%c0_103, %c0_104], %548 {strides = array<i32>} : memref<8x16xf32, #tpu.memory_space<vmem>>, vector<8x16xf32>,
    %550 = vector.extract_strided_slice %548 {offsets = [0, 0], sizes = [8, 8], strides = [1, 1]} : vector<8x16xf32> to vector<8x8xf32>
    %551 = vector.extract_strided_slice %548 {offsets = [0, 8], sizes = [8, 8], strides = [1, 1]} : vector<8x16xf32> to vector<8x8xf32>
    %cst_105 = arith.constant 5.000000e-01 : f32
    %552 = vector.broadcast %cst_105 : f32 to vector<8x8xf32>
    %553 = arith.mulf %552, %551 : vector<8x8xf32>
    %554 = math.exp %553 : vector<8x8xf32>
    %c0_106 = arith.constant 0 : index
    %c0_107 = arith.constant 0 : index
    %555 = vector.load %arg1[%c0_106, %c0_107] : memref<8x8xf32, #tpu.memory_space<vmem>>, vector<8x8xf32>
    %556 = arith.mulf %554, %555 : vector<8x8xf32>
    %557 = arith.addf %550, %556 : vector<8x8xf32>
    %c0_108 = arith.constant 0 : index
    %c0_109 = arith.constant 0 : index
    %558 = vector.load %arg12[%c0_108, %c0_109] : memref<8x96xbf16, #tpu.memory_space<vmem>>, vector<8x96xbf16>
    %559 = arith.truncf %557 : vector<8x8xf32> to vector<8x8xbf16>
    %cst_110 = arith.constant dense<0.000000e+00> : vector<8x96xf32>
    %560 = tpu.matmul %559, %558, %cst_110 {dimension_numbers = #tpu.dot_dimension_numbers<[1], [0], [0], [1], [0, 0, 1, 1], [], []>} : vector<8x8xbf16>, vector<8x96xbf16>, vector<8x96xf32> -> vector<8x96xf32>
    %c0_111 = arith.constant 0 : index
    %c0_112 = arith.constant 0 : index
    %561 = vector.load %arg14[%c0_111, %c0_112] : memref<1x96xf32, #tpu.memory_space<vmem>>, vector<1x96xf32>
    %562 = vector.broadcast %561 : vector<1x96xf32> to vector<8x96xf32>
    %563 = arith.addf %560, %562 : vector<8x96xf32>
    %c0_113 = arith.constant 0 : index
    %c0_114 = arith.constant 0 : index
    %564 = vector.load %arg13[%c0_113, %c0_114] : memref<32x96xbf16, #tpu.memory_space<vmem>>, vector<32x96xbf16>
    %c0_115 = arith.constant 0 : index
    %c0_116 = arith.constant 0 : index
    %565 = vector.load %arg15[%c0_115, %c0_116] : memref<1x32xf32, #tpu.memory_space<vmem>>, vector<1x32xf32>
    %566 = vector.shape_cast %565 : vector<1x32xf32> to vector<1x32xf32>
    %567 = vector.broadcast %566 : vector<1x32xf32> to vector<8x32xf32>
    %cst_117 = arith.constant 0.000000e+00 : f32
    %568 = vector.broadcast %cst_117 : f32 to vector<8x32xf32>
    %569 = arith.truncf %568 : vector<8x32xf32> to vector<8x32xbf16>
    %cst_118 = arith.constant dense<0.000000e+00> : vector<8x96xf32>
    %570 = tpu.matmul %569, %564, %cst_118 {dimension_numbers = #tpu.dot_dimension_numbers<[1], [0], [0], [1], [0, 0, 1, 1], [], []>} : vector<8x32xbf16>, vector<32x96xbf16>, vector<8x96xf32> -> vector<8x96xf32>
    %571 = vector.extract_strided_slice %563 {offsets = [0, 0], sizes = [8, 32], strides = [1, 1]} : vector<8x96xf32> to vector<8x32xf32>
    %572 = vector.extract_strided_slice %570 {offsets = [0, 0], sizes = [8, 32], strides = [1, 1]} : vector<8x96xf32> to vector<8x32xf32>
    %573 = arith.addf %571, %572 : vector<8x32xf32>
    %574 = arith.negf %573 : vector<8x32xf32>
    %575 = math.exp %574 : vector<8x32xf32>
    %cst_119 = arith.constant 1.000000e+00 : f32
    %576 = vector.broadcast %cst_119 : f32 to vector<8x32xf32>
    %577 = arith.addf %576, %575 : vector<8x32xf32>
    %578 = arith.divf %576, %577 : vector<8x32xf32>
    %579 = vector.extract_strided_slice %563 {offsets = [0, 32], sizes = [8, 32], strides = [1, 1]} : vector<8x96xf32> to vector<8x32xf32>
    %580 = vector.extract_strided_slice %570 {offsets = [0, 32], sizes = [8, 32], strides = [1, 1]} : vector<8x96xf32> to vector<8x32xf32>
    %581 = arith.addf %579, %580 : vector<8x32xf32>
    %582 = arith.negf %581 : vector<8x32xf32>
    %583 = math.exp %582 : vector<8x32xf32>
    %cst_120 = arith.constant 1.000000e+00 : f32
    %584 = vector.broadcast %cst_120 : f32 to vector<8x32xf32>
    %585 = arith.addf %584, %583 : vector<8x32xf32>
    %586 = arith.divf %584, %585 : vector<8x32xf32>
    %587 = vector.extract_strided_slice %563 {offsets = [0, 64], sizes = [8, 32], strides = [1, 1]} : vector<8x96xf32> to vector<8x32xf32>
    %588 = vector.extract_strided_slice %570 {offsets = [0, 64], sizes = [8, 32], strides = [1, 1]} : vector<8x96xf32> to vector<8x32xf32>
    %589 = arith.addf %588, %567 : vector<8x32xf32>
    %590 = arith.mulf %578, %589 : vector<8x32xf32>
    %591 = arith.addf %587, %590 : vector<8x32xf32>
    %592 = math.tanh %591 : vector<8x32xf32>
    %cst_121 = arith.constant 1.000000e+00 : f32
    %593 = vector.broadcast %cst_121 : f32 to vector<8x32xf32>
    %594 = arith.subf %593, %586 : vector<8x32xf32>
    %595 = arith.mulf %594, %592 : vector<8x32xf32>
    %596 = arith.mulf %586, %568 : vector<8x32xf32>
    %597 = arith.addf %595, %596 : vector<8x32xf32>
    %598 = arith.truncf %597 : vector<8x32xf32> to vector<8x32xbf16>
    %cst_122 = arith.constant dense<0.000000e+00> : vector<8x96xf32>
    %599 = tpu.matmul %598, %564, %cst_122 {dimension_numbers = #tpu.dot_dimension_numbers<[1], [0], [0], [1], [0, 0, 1, 1], [], []>} : vector<8x32xbf16>, vector<32x96xbf16>, vector<8x96xf32> -> vector<8x96xf32>
    %600 = vector.extract_strided_slice %563 {offsets = [0, 0], sizes = [8, 32], strides = [1, 1]} : vector<8x96xf32> to vector<8x32xf32>
    %601 = vector.extract_strided_slice %599 {offsets = [0, 0], sizes = [8, 32], strides = [1, 1]} : vector<8x96xf32> to vector<8x32xf32>
    %602 = arith.addf %600, %601 : vector<8x32xf32>
    %603 = arith.negf %602 : vector<8x32xf32>
    %604 = math.exp %603 : vector<8x32xf32>
    %cst_123 = arith.constant 1.000000e+00 : f32
    %605 = vector.broadcast %cst_123 : f32 to vector<8x32xf32>
    %606 = arith.addf %605, %604 : vector<8x32xf32>
    %607 = arith.divf %605, %606 : vector<8x32xf32>
    %608 = vector.extract_strided_slice %563 {offsets = [0, 32], sizes = [8, 32], strides = [1, 1]} : vector<8x96xf32> to vector<8x32xf32>
    %609 = vector.extract_strided_slice %599 {offsets = [0, 32], sizes = [8, 32], strides = [1, 1]} : vector<8x96xf32> to vector<8x32xf32>
    %610 = arith.addf %608, %609 : vector<8x32xf32>
    %611 = arith.negf %610 : vector<8x32xf32>
    %612 = math.exp %611 : vector<8x32xf32>
    %cst_124 = arith.constant 1.000000e+00 : f32
    %613 = vector.broadcast %cst_124 : f32 to vector<8x32xf32>
    %614 = arith.addf %613, %612 : vector<8x32xf32>
    %615 = arith.divf %613, %614 : vector<8x32xf32>
    %616 = vector.extract_strided_slice %563 {offsets = [0, 64], sizes = [8, 32], strides = [1, 1]} : vector<8x96xf32> to vector<8x32xf32>
    %617 = vector.extract_strided_slice %599 {offsets = [0, 64], sizes = [8, 32], strides = [1, 1]} : vector<8x96xf32> to vector<8x32xf32>
    %618 = arith.addf %617, %567 : vector<8x32xf32>
    %619 = arith.mulf %607, %618 : vector<8x32xf32>
    %620 = arith.addf %616, %619 : vector<8x32xf32>
    %621 = math.tanh %620 : vector<8x32xf32>
    %cst_125 = arith.constant 1.000000e+00 : f32
    %622 = vector.broadcast %cst_125 : f32 to vector<8x32xf32>
    %623 = arith.subf %622, %615 : vector<8x32xf32>
    %624 = arith.mulf %623, %621 : vector<8x32xf32>
    %625 = arith.mulf %615, %597 : vector<8x32xf32>
    %626 = arith.addf %624, %625 : vector<8x32xf32>
    %627 = arith.truncf %626 : vector<8x32xf32> to vector<8x32xbf16>
    %cst_126 = arith.constant dense<0.000000e+00> : vector<8x96xf32>
    %628 = tpu.matmul %627, %564, %cst_126 {dimension_numbers = #tpu.dot_dimension_numbers<[1], [0], [0], [1], [0, 0, 1, 1], [], []>} : vector<8x32xbf16>, vector<32x96xbf16>, vector<8x96xf32> -> vector<8x96xf32>
    %629 = vector.extract_strided_slice %563 {offsets = [0, 0], sizes = [8, 32], strides = [1, 1]} : vector<8x96xf32> to vector<8x32xf32>
    %630 = vector.extract_strided_slice %628 {offsets = [0, 0], sizes = [8, 32], strides = [1, 1]} : vector<8x96xf32> to vector<8x32xf32>
    %631 = arith.addf %629, %630 : vector<8x32xf32>
    %632 = arith.negf %631 : vector<8x32xf32>
    %633 = math.exp %632 : vector<8x32xf32>
    %cst_127 = arith.constant 1.000000e+00 : f32
    %634 = vector.broadcast %cst_127 : f32 to vector<8x32xf32>
    %635 = arith.addf %634, %633 : vector<8x32xf32>
    %636 = arith.divf %634, %635 : vector<8x32xf32>
    %637 = vector.extract_strided_slice %563 {offsets = [0, 32], sizes = [8, 32], strides = [1, 1]} : vector<8x96xf32> to vector<8x32xf32>
    %638 = vector.extract_strided_slice %628 {offsets = [0, 32], sizes = [8, 32], strides = [1, 1]} : vector<8x96xf32> to vector<8x32xf32>
    %639 = arith.addf %637, %638 : vector<8x32xf32>
    %640 = arith.negf %639 : vector<8x32xf32>
    %641 = math.exp %640 : vector<8x32xf32>
    %cst_128 = arith.constant 1.000000e+00 : f32
    %642 = vector.broadcast %cst_128 : f32 to vector<8x32xf32>
    %643 = arith.addf %642, %641 : vector<8x32xf32>
    %644 = arith.divf %642, %643 : vector<8x32xf32>
    %645 = vector.extract_strided_slice %563 {offsets = [0, 64], sizes = [8, 32], strides = [1, 1]} : vector<8x96xf32> to vector<8x32xf32>
    %646 = vector.extract_strided_slice %628 {offsets = [0, 64], sizes = [8, 32], strides = [1, 1]} : vector<8x96xf32> to vector<8x32xf32>
    %647 = arith.addf %646, %567 : vector<8x32xf32>
    %648 = arith.mulf %636, %647 : vector<8x32xf32>
    %649 = arith.addf %645, %648 : vector<8x32xf32>
    %650 = math.tanh %649 : vector<8x32xf32>
    %cst_129 = arith.constant 1.000000e+00 : f32
    %651 = vector.broadcast %cst_129 : f32 to vector<8x32xf32>
    %652 = arith.subf %651, %644 : vector<8x32xf32>
    %653 = arith.mulf %652, %650 : vector<8x32xf32>
    %654 = arith.mulf %644, %626 : vector<8x32xf32>
    %655 = arith.addf %653, %654 : vector<8x32xf32>
    %656 = arith.truncf %655 : vector<8x32xf32> to vector<8x32xbf16>
    %cst_130 = arith.constant dense<0.000000e+00> : vector<8x96xf32>
    %657 = tpu.matmul %656, %564, %cst_130 {dimension_numbers = #tpu.dot_dimension_numbers<[1], [0], [0], [1], [0, 0, 1, 1], [], []>} : vector<8x32xbf16>, vector<32x96xbf16>, vector<8x96xf32> -> vector<8x96xf32>
    %658 = vector.extract_strided_slice %563 {offsets = [0, 0], sizes = [8, 32], strides = [1, 1]} : vector<8x96xf32> to vector<8x32xf32>
    %659 = vector.extract_strided_slice %657 {offsets = [0, 0], sizes = [8, 32], strides = [1, 1]} : vector<8x96xf32> to vector<8x32xf32>
    %660 = arith.addf %658, %659 : vector<8x32xf32>
    %661 = arith.negf %660 : vector<8x32xf32>
    %662 = math.exp %661 : vector<8x32xf32>
    %cst_131 = arith.constant 1.000000e+00 : f32
    %663 = vector.broadcast %cst_131 : f32 to vector<8x32xf32>
    %664 = arith.addf %663, %662 : vector<8x32xf32>
    %665 = arith.divf %663, %664 : vector<8x32xf32>
    %666 = vector.extract_strided_slice %563 {offsets = [0, 32], sizes = [8, 32], strides = [1, 1]} : vector<8x96xf32> to vector<8x32xf32>
    %667 = vector.extract_strided_slice %657 {offsets = [0, 32], sizes = [8, 32], strides = [1, 1]} : vector<8x96xf32> to vector<8x32xf32>
    %668 = arith.addf %666, %667 : vector<8x32xf32>
    %669 = arith.negf %668 : vector<8x32xf32>
    %670 = math.exp %669 : vector<8x32xf32>
    %cst_132 = arith.constant 1.000000e+00 : f32
    %671 = vector.broadcast %cst_132 : f32 to vector<8x32xf32>
    %672 = arith.addf %671, %670 : vector<8x32xf32>
    %673 = arith.divf %671, %672 : vector<8x32xf32>
    %674 = vector.extract_strided_slice %563 {offsets = [0, 64], sizes = [8, 32], strides = [1, 1]} : vector<8x96xf32> to vector<8x32xf32>
    %675 = vector.extract_strided_slice %657 {offsets = [0, 64], sizes = [8, 32], strides = [1, 1]} : vector<8x96xf32> to vector<8x32xf32>
    %676 = arith.addf %675, %567 : vector<8x32xf32>
    %677 = arith.mulf %665, %676 : vector<8x32xf32>
    %678 = arith.addf %674, %677 : vector<8x32xf32>
    %679 = math.tanh %678 : vector<8x32xf32>
    %cst_133 = arith.constant 1.000000e+00 : f32
    %680 = vector.broadcast %cst_133 : f32 to vector<8x32xf32>
    %681 = arith.subf %680, %673 : vector<8x32xf32>
    %682 = arith.mulf %681, %679 : vector<8x32xf32>
    %683 = arith.mulf %673, %655 : vector<8x32xf32>
    %684 = arith.addf %682, %683 : vector<8x32xf32>
    %685 = arith.truncf %684 : vector<8x32xf32> to vector<8x32xbf16>
    %cst_134 = arith.constant dense<0.000000e+00> : vector<8x96xf32>
    %686 = tpu.matmul %685, %564, %cst_134 {dimension_numbers = #tpu.dot_dimension_numbers<[1], [0], [0], [1], [0, 0, 1, 1], [], []>} : vector<8x32xbf16>, vector<32x96xbf16>, vector<8x96xf32> -> vector<8x96xf32>
    %687 = vector.extract_strided_slice %563 {offsets = [0, 0], sizes = [8, 32], strides = [1, 1]} : vector<8x96xf32> to vector<8x32xf32>
    %688 = vector.extract_strided_slice %686 {offsets = [0, 0], sizes = [8, 32], strides = [1, 1]} : vector<8x96xf32> to vector<8x32xf32>
    %689 = arith.addf %687, %688 : vector<8x32xf32>
    %690 = arith.negf %689 : vector<8x32xf32>
    %691 = math.exp %690 : vector<8x32xf32>
    %cst_135 = arith.constant 1.000000e+00 : f32
    %692 = vector.broadcast %cst_135 : f32 to vector<8x32xf32>
    %693 = arith.addf %692, %691 : vector<8x32xf32>
    %694 = arith.divf %692, %693 : vector<8x32xf32>
    %695 = vector.extract_strided_slice %563 {offsets = [0, 32], sizes = [8, 32], strides = [1, 1]} : vector<8x96xf32> to vector<8x32xf32>
    %696 = vector.extract_strided_slice %686 {offsets = [0, 32], sizes = [8, 32], strides = [1, 1]} : vector<8x96xf32> to vector<8x32xf32>
    %697 = arith.addf %695, %696 : vector<8x32xf32>
    %698 = arith.negf %697 : vector<8x32xf32>
    %699 = math.exp %698 : vector<8x32xf32>
    %cst_136 = arith.constant 1.000000e+00 : f32
    %700 = vector.broadcast %cst_136 : f32 to vector<8x32xf32>
    %701 = arith.addf %700, %699 : vector<8x32xf32>
    %702 = arith.divf %700, %701 : vector<8x32xf32>
    %703 = vector.extract_strided_slice %563 {offsets = [0, 64], sizes = [8, 32], strides = [1, 1]} : vector<8x96xf32> to vector<8x32xf32>
    %704 = vector.extract_strided_slice %686 {offsets = [0, 64], sizes = [8, 32], strides = [1, 1]} : vector<8x96xf32> to vector<8x32xf32>
    %705 = arith.addf %704, %567 : vector<8x32xf32>
    %706 = arith.mulf %694, %705 : vector<8x32xf32>
    %707 = arith.addf %703, %706 : vector<8x32xf32>
    %708 = math.tanh %707 : vector<8x32xf32>
    %cst_137 = arith.constant 1.000000e+00 : f32
    %709 = vector.broadcast %cst_137 : f32 to vector<8x32xf32>
    %710 = arith.subf %709, %702 : vector<8x32xf32>
    %711 = arith.mulf %710, %708 : vector<8x32xf32>
    %712 = arith.mulf %702, %684 : vector<8x32xf32>
    %713 = arith.addf %711, %712 : vector<8x32xf32>
    %714 = arith.truncf %713 : vector<8x32xf32> to vector<8x32xbf16>
    %cst_138 = arith.constant dense<0.000000e+00> : vector<8x96xf32>
    %715 = tpu.matmul %714, %564, %cst_138 {dimension_numbers = #tpu.dot_dimension_numbers<[1], [0], [0], [1], [0, 0, 1, 1], [], []>} : vector<8x32xbf16>, vector<32x96xbf16>, vector<8x96xf32> -> vector<8x96xf32>
    %716 = vector.extract_strided_slice %563 {offsets = [0, 0], sizes = [8, 32], strides = [1, 1]} : vector<8x96xf32> to vector<8x32xf32>
    %717 = vector.extract_strided_slice %715 {offsets = [0, 0], sizes = [8, 32], strides = [1, 1]} : vector<8x96xf32> to vector<8x32xf32>
    %718 = arith.addf %716, %717 : vector<8x32xf32>
    %719 = arith.negf %718 : vector<8x32xf32>
    %720 = math.exp %719 : vector<8x32xf32>
    %cst_139 = arith.constant 1.000000e+00 : f32
    %721 = vector.broadcast %cst_139 : f32 to vector<8x32xf32>
    %722 = arith.addf %721, %720 : vector<8x32xf32>
    %723 = arith.divf %721, %722 : vector<8x32xf32>
    %724 = vector.extract_strided_slice %563 {offsets = [0, 32], sizes = [8, 32], strides = [1, 1]} : vector<8x96xf32> to vector<8x32xf32>
    %725 = vector.extract_strided_slice %715 {offsets = [0, 32], sizes = [8, 32], strides = [1, 1]} : vector<8x96xf32> to vector<8x32xf32>
    %726 = arith.addf %724, %725 : vector<8x32xf32>
    %727 = arith.negf %726 : vector<8x32xf32>
    %728 = math.exp %727 : vector<8x32xf32>
    %cst_140 = arith.constant 1.000000e+00 : f32
    %729 = vector.broadcast %cst_140 : f32 to vector<8x32xf32>
    %730 = arith.addf %729, %728 : vector<8x32xf32>
    %731 = arith.divf %729, %730 : vector<8x32xf32>
    %732 = vector.extract_strided_slice %563 {offsets = [0, 64], sizes = [8, 32], strides = [1, 1]} : vector<8x96xf32> to vector<8x32xf32>
    %733 = vector.extract_strided_slice %715 {offsets = [0, 64], sizes = [8, 32], strides = [1, 1]} : vector<8x96xf32> to vector<8x32xf32>
    %734 = arith.addf %733, %567 : vector<8x32xf32>
    %735 = arith.mulf %723, %734 : vector<8x32xf32>
    %736 = arith.addf %732, %735 : vector<8x32xf32>
    %737 = math.tanh %736 : vector<8x32xf32>
    %cst_141 = arith.constant 1.000000e+00 : f32
    %738 = vector.broadcast %cst_141 : f32 to vector<8x32xf32>
    %739 = arith.subf %738, %731 : vector<8x32xf32>
    %740 = arith.mulf %739, %737 : vector<8x32xf32>
    %741 = arith.mulf %731, %713 : vector<8x32xf32>
    %742 = arith.addf %740, %741 : vector<8x32xf32>
    %743 = arith.truncf %742 : vector<8x32xf32> to vector<8x32xbf16>
    %cst_142 = arith.constant dense<0.000000e+00> : vector<8x96xf32>
    %744 = tpu.matmul %743, %564, %cst_142 {dimension_numbers = #tpu.dot_dimension_numbers<[1], [0], [0], [1], [0, 0, 1, 1], [], []>} : vector<8x32xbf16>, vector<32x96xbf16>, vector<8x96xf32> -> vector<8x96xf32>
    %745 = vector.extract_strided_slice %563 {offsets = [0, 0], sizes = [8, 32], strides = [1, 1]} : vector<8x96xf32> to vector<8x32xf32>
    %746 = vector.extract_strided_slice %744 {offsets = [0, 0], sizes = [8, 32], strides = [1, 1]} : vector<8x96xf32> to vector<8x32xf32>
    %747 = arith.addf %745, %746 : vector<8x32xf32>
    %748 = arith.negf %747 : vector<8x32xf32>
    %749 = math.exp %748 : vector<8x32xf32>
    %cst_143 = arith.constant 1.000000e+00 : f32
    %750 = vector.broadcast %cst_143 : f32 to vector<8x32xf32>
    %751 = arith.addf %750, %749 : vector<8x32xf32>
    %752 = arith.divf %750, %751 : vector<8x32xf32>
    %753 = vector.extract_strided_slice %563 {offsets = [0, 32], sizes = [8, 32], strides = [1, 1]} : vector<8x96xf32> to vector<8x32xf32>
    %754 = vector.extract_strided_slice %744 {offsets = [0, 32], sizes = [8, 32], strides = [1, 1]} : vector<8x96xf32> to vector<8x32xf32>
    %755 = arith.addf %753, %754 : vector<8x32xf32>
    %756 = arith.negf %755 : vector<8x32xf32>
    %757 = math.exp %756 : vector<8x32xf32>
    %cst_144 = arith.constant 1.000000e+00 : f32
    %758 = vector.broadcast %cst_144 : f32 to vector<8x32xf32>
    %759 = arith.addf %758, %757 : vector<8x32xf32>
    %760 = arith.divf %758, %759 : vector<8x32xf32>
    %761 = vector.extract_strided_slice %563 {offsets = [0, 64], sizes = [8, 32], strides = [1, 1]} : vector<8x96xf32> to vector<8x32xf32>
    %762 = vector.extract_strided_slice %744 {offsets = [0, 64], sizes = [8, 32], strides = [1, 1]} : vector<8x96xf32> to vector<8x32xf32>
    %763 = arith.addf %762, %567 : vector<8x32xf32>
    %764 = arith.mulf %752, %763 : vector<8x32xf32>
    %765 = arith.addf %761, %764 : vector<8x32xf32>
    %766 = math.tanh %765 : vector<8x32xf32>
    %cst_145 = arith.constant 1.000000e+00 : f32
    %767 = vector.broadcast %cst_145 : f32 to vector<8x32xf32>
    %768 = arith.subf %767, %760 : vector<8x32xf32>
    %769 = arith.mulf %768, %766 : vector<8x32xf32>
    %770 = arith.mulf %760, %742 : vector<8x32xf32>
    %771 = arith.addf %769, %770 : vector<8x32xf32>
    %772 = arith.truncf %771 : vector<8x32xf32> to vector<8x32xbf16>
    %cst_146 = arith.constant dense<0.000000e+00> : vector<8x96xf32>
    %773 = tpu.matmul %772, %564, %cst_146 {dimension_numbers = #tpu.dot_dimension_numbers<[1], [0], [0], [1], [0, 0, 1, 1], [], []>} : vector<8x32xbf16>, vector<32x96xbf16>, vector<8x96xf32> -> vector<8x96xf32>
    %774 = vector.extract_strided_slice %563 {offsets = [0, 0], sizes = [8, 32], strides = [1, 1]} : vector<8x96xf32> to vector<8x32xf32>
    %775 = vector.extract_strided_slice %773 {offsets = [0, 0], sizes = [8, 32], strides = [1, 1]} : vector<8x96xf32> to vector<8x32xf32>
    %776 = arith.addf %774, %775 : vector<8x32xf32>
    %777 = arith.negf %776 : vector<8x32xf32>
    %778 = math.exp %777 : vector<8x32xf32>
    %cst_147 = arith.constant 1.000000e+00 : f32
    %779 = vector.broadcast %cst_147 : f32 to vector<8x32xf32>
    %780 = arith.addf %779, %778 : vector<8x32xf32>
    %781 = arith.divf %779, %780 : vector<8x32xf32>
    %782 = vector.extract_strided_slice %563 {offsets = [0, 32], sizes = [8, 32], strides = [1, 1]} : vector<8x96xf32> to vector<8x32xf32>
    %783 = vector.extract_strided_slice %773 {offsets = [0, 32], sizes = [8, 32], strides = [1, 1]} : vector<8x96xf32> to vector<8x32xf32>
    %784 = arith.addf %782, %783 : vector<8x32xf32>
    %785 = arith.negf %784 : vector<8x32xf32>
    %786 = math.exp %785 : vector<8x32xf32>
    %cst_148 = arith.constant 1.000000e+00 : f32
    %787 = vector.broadcast %cst_148 : f32 to vector<8x32xf32>
    %788 = arith.addf %787, %786 : vector<8x32xf32>
    %789 = arith.divf %787, %788 : vector<8x32xf32>
    %790 = vector.extract_strided_slice %563 {offsets = [0, 64], sizes = [8, 32], strides = [1, 1]} : vector<8x96xf32> to vector<8x32xf32>
    %791 = vector.extract_strided_slice %773 {offsets = [0, 64], sizes = [8, 32], strides = [1, 1]} : vector<8x96xf32> to vector<8x32xf32>
    %792 = arith.addf %791, %567 : vector<8x32xf32>
    %793 = arith.mulf %781, %792 : vector<8x32xf32>
    %794 = arith.addf %790, %793 : vector<8x32xf32>
    %795 = math.tanh %794 : vector<8x32xf32>
    %cst_149 = arith.constant 1.000000e+00 : f32
    %796 = vector.broadcast %cst_149 : f32 to vector<8x32xf32>
    %797 = arith.subf %796, %789 : vector<8x32xf32>
    %798 = arith.mulf %797, %795 : vector<8x32xf32>
    %799 = arith.mulf %789, %771 : vector<8x32xf32>
    %800 = arith.addf %798, %799 : vector<8x32xf32>
    %c0_150 = arith.constant 0 : index
    %c0_151 = arith.constant 0 : index
    %801 = vector.load %arg16[%c0_150, %c0_151] : memref<32x96xbf16, #tpu.memory_space<vmem>>, vector<32x96xbf16>
    %c0_152 = arith.constant 0 : index
    %c0_153 = arith.constant 0 : index
    %802 = vector.load %arg18[%c0_152, %c0_153] : memref<1x96xf32, #tpu.memory_space<vmem>>, vector<1x96xf32>
    %803 = arith.truncf %597 : vector<8x32xf32> to vector<8x32xbf16>
    %cst_154 = arith.constant dense<0.000000e+00> : vector<8x96xf32>
    %804 = tpu.matmul %803, %801, %cst_154 {dimension_numbers = #tpu.dot_dimension_numbers<[1], [0], [0], [1], [0, 0, 1, 1], [], []>} : vector<8x32xbf16>, vector<32x96xbf16>, vector<8x96xf32> -> vector<8x96xf32>
    %805 = vector.broadcast %802 : vector<1x96xf32> to vector<8x96xf32>
    %806 = arith.addf %804, %805 : vector<8x96xf32>
    %807 = arith.truncf %626 : vector<8x32xf32> to vector<8x32xbf16>
    %cst_155 = arith.constant dense<0.000000e+00> : vector<8x96xf32>
    %808 = tpu.matmul %807, %801, %cst_155 {dimension_numbers = #tpu.dot_dimension_numbers<[1], [0], [0], [1], [0, 0, 1, 1], [], []>} : vector<8x32xbf16>, vector<32x96xbf16>, vector<8x96xf32> -> vector<8x96xf32>
    %809 = vector.broadcast %802 : vector<1x96xf32> to vector<8x96xf32>
    %810 = arith.addf %808, %809 : vector<8x96xf32>
    %811 = arith.truncf %655 : vector<8x32xf32> to vector<8x32xbf16>
    %cst_156 = arith.constant dense<0.000000e+00> : vector<8x96xf32>
    %812 = tpu.matmul %811, %801, %cst_156 {dimension_numbers = #tpu.dot_dimension_numbers<[1], [0], [0], [1], [0, 0, 1, 1], [], []>} : vector<8x32xbf16>, vector<32x96xbf16>, vector<8x96xf32> -> vector<8x96xf32>
    %813 = vector.broadcast %802 : vector<1x96xf32> to vector<8x96xf32>
    %814 = arith.addf %812, %813 : vector<8x96xf32>
    %815 = arith.truncf %684 : vector<8x32xf32> to vector<8x32xbf16>
    %cst_157 = arith.constant dense<0.000000e+00> : vector<8x96xf32>
    %816 = tpu.matmul %815, %801, %cst_157 {dimension_numbers = #tpu.dot_dimension_numbers<[1], [0], [0], [1], [0, 0, 1, 1], [], []>} : vector<8x32xbf16>, vector<32x96xbf16>, vector<8x96xf32> -> vector<8x96xf32>
    %817 = vector.broadcast %802 : vector<1x96xf32> to vector<8x96xf32>
    %818 = arith.addf %816, %817 : vector<8x96xf32>
    %819 = arith.truncf %713 : vector<8x32xf32> to vector<8x32xbf16>
    %cst_158 = arith.constant dense<0.000000e+00> : vector<8x96xf32>
    %820 = tpu.matmul %819, %801, %cst_158 {dimension_numbers = #tpu.dot_dimension_numbers<[1], [0], [0], [1], [0, 0, 1, 1], [], []>} : vector<8x32xbf16>, vector<32x96xbf16>, vector<8x96xf32> -> vector<8x96xf32>
    %821 = vector.broadcast %802 : vector<1x96xf32> to vector<8x96xf32>
    %822 = arith.addf %820, %821 : vector<8x96xf32>
    %823 = arith.truncf %742 : vector<8x32xf32> to vector<8x32xbf16>
    %cst_159 = arith.constant dense<0.000000e+00> : vector<8x96xf32>
    %824 = tpu.matmul %823, %801, %cst_159 {dimension_numbers = #tpu.dot_dimension_numbers<[1], [0], [0], [1], [0, 0, 1, 1], [], []>} : vector<8x32xbf16>, vector<32x96xbf16>, vector<8x96xf32> -> vector<8x96xf32>
    %825 = vector.broadcast %802 : vector<1x96xf32> to vector<8x96xf32>
    %826 = arith.addf %824, %825 : vector<8x96xf32>
    %827 = arith.truncf %771 : vector<8x32xf32> to vector<8x32xbf16>
    %cst_160 = arith.constant dense<0.000000e+00> : vector<8x96xf32>
    %828 = tpu.matmul %827, %801, %cst_160 {dimension_numbers = #tpu.dot_dimension_numbers<[1], [0], [0], [1], [0, 0, 1, 1], [], []>} : vector<8x32xbf16>, vector<32x96xbf16>, vector<8x96xf32> -> vector<8x96xf32>
    %829 = vector.broadcast %802 : vector<1x96xf32> to vector<8x96xf32>
    %830 = arith.addf %828, %829 : vector<8x96xf32>
    %831 = arith.truncf %800 : vector<8x32xf32> to vector<8x32xbf16>
    %cst_161 = arith.constant dense<0.000000e+00> : vector<8x96xf32>
    %832 = tpu.matmul %831, %801, %cst_161 {dimension_numbers = #tpu.dot_dimension_numbers<[1], [0], [0], [1], [0, 0, 1, 1], [], []>} : vector<8x32xbf16>, vector<32x96xbf16>, vector<8x96xf32> -> vector<8x96xf32>
    %833 = vector.broadcast %802 : vector<1x96xf32> to vector<8x96xf32>
    %834 = arith.addf %832, %833 : vector<8x96xf32>
    %c0_162 = arith.constant 0 : index
    %c0_163 = arith.constant 0 : index
    %835 = vector.load %arg17[%c0_162, %c0_163] : memref<32x96xbf16, #tpu.memory_space<vmem>>, vector<32x96xbf16>
    %c0_164 = arith.constant 0 : index
    %c0_165 = arith.constant 0 : index
    %836 = vector.load %arg19[%c0_164, %c0_165] : memref<1x32xf32, #tpu.memory_space<vmem>>, vector<1x32xf32>
    %837 = vector.shape_cast %836 : vector<1x32xf32> to vector<1x32xf32>
    %838 = vector.broadcast %837 : vector<1x32xf32> to vector<8x32xf32>
    %cst_166 = arith.constant 0.000000e+00 : f32
    %839 = vector.broadcast %cst_166 : f32 to vector<8x32xf32>
    %840 = arith.truncf %839 : vector<8x32xf32> to vector<8x32xbf16>
    %cst_167 = arith.constant dense<0.000000e+00> : vector<8x96xf32>
    %841 = tpu.matmul %840, %835, %cst_167 {dimension_numbers = #tpu.dot_dimension_numbers<[1], [0], [0], [1], [0, 0, 1, 1], [], []>} : vector<8x32xbf16>, vector<32x96xbf16>, vector<8x96xf32> -> vector<8x96xf32>
    %842 = vector.extract_strided_slice %806 {offsets = [0, 0], sizes = [8, 32], strides = [1, 1]} : vector<8x96xf32> to vector<8x32xf32>
    %843 = vector.extract_strided_slice %841 {offsets = [0, 0], sizes = [8, 32], strides = [1, 1]} : vector<8x96xf32> to vector<8x32xf32>
    %844 = arith.addf %842, %843 : vector<8x32xf32>
    %845 = arith.negf %844 : vector<8x32xf32>
    %846 = math.exp %845 : vector<8x32xf32>
    %cst_168 = arith.constant 1.000000e+00 : f32
    %847 = vector.broadcast %cst_168 : f32 to vector<8x32xf32>
    %848 = arith.addf %847, %846 : vector<8x32xf32>
    %849 = arith.divf %847, %848 : vector<8x32xf32>
    %850 = vector.extract_strided_slice %806 {offsets = [0, 32], sizes = [8, 32], strides = [1, 1]} : vector<8x96xf32> to vector<8x32xf32>
    %851 = vector.extract_strided_slice %841 {offsets = [0, 32], sizes = [8, 32], strides = [1, 1]} : vector<8x96xf32> to vector<8x32xf32>
    %852 = arith.addf %850, %851 : vector<8x32xf32>
    %853 = arith.negf %852 : vector<8x32xf32>
    %854 = math.exp %853 : vector<8x32xf32>
    %cst_169 = arith.constant 1.000000e+00 : f32
    %855 = vector.broadcast %cst_169 : f32 to vector<8x32xf32>
    %856 = arith.addf %855, %854 : vector<8x32xf32>
    %857 = arith.divf %855, %856 : vector<8x32xf32>
    %858 = vector.extract_strided_slice %806 {offsets = [0, 64], sizes = [8, 32], strides = [1, 1]} : vector<8x96xf32> to vector<8x32xf32>
    %859 = vector.extract_strided_slice %841 {offsets = [0, 64], sizes = [8, 32], strides = [1, 1]} : vector<8x96xf32> to vector<8x32xf32>
    %860 = arith.addf %859, %838 : vector<8x32xf32>
    %861 = arith.mulf %849, %860 : vector<8x32xf32>
    %862 = arith.addf %858, %861 : vector<8x32xf32>
    %863 = math.tanh %862 : vector<8x32xf32>
    %cst_170 = arith.constant 1.000000e+00 : f32
    %864 = vector.broadcast %cst_170 : f32 to vector<8x32xf32>
    %865 = arith.subf %864, %857 : vector<8x32xf32>
    %866 = arith.mulf %865, %863 : vector<8x32xf32>
    %867 = arith.mulf %857, %839 : vector<8x32xf32>
    %868 = arith.addf %866, %867 : vector<8x32xf32>
    %869 = arith.truncf %868 : vector<8x32xf32> to vector<8x32xbf16>
    %cst_171 = arith.constant dense<0.000000e+00> : vector<8x96xf32>
    %870 = tpu.matmul %869, %835, %cst_171 {dimension_numbers = #tpu.dot_dimension_numbers<[1], [0], [0], [1], [0, 0, 1, 1], [], []>} : vector<8x32xbf16>, vector<32x96xbf16>, vector<8x96xf32> -> vector<8x96xf32>
    %871 = vector.extract_strided_slice %810 {offsets = [0, 0], sizes = [8, 32], strides = [1, 1]} : vector<8x96xf32> to vector<8x32xf32>
    %872 = vector.extract_strided_slice %870 {offsets = [0, 0], sizes = [8, 32], strides = [1, 1]} : vector<8x96xf32> to vector<8x32xf32>
    %873 = arith.addf %871, %872 : vector<8x32xf32>
    %874 = arith.negf %873 : vector<8x32xf32>
    %875 = math.exp %874 : vector<8x32xf32>
    %cst_172 = arith.constant 1.000000e+00 : f32
    %876 = vector.broadcast %cst_172 : f32 to vector<8x32xf32>
    %877 = arith.addf %876, %875 : vector<8x32xf32>
    %878 = arith.divf %876, %877 : vector<8x32xf32>
    %879 = vector.extract_strided_slice %810 {offsets = [0, 32], sizes = [8, 32], strides = [1, 1]} : vector<8x96xf32> to vector<8x32xf32>
    %880 = vector.extract_strided_slice %870 {offsets = [0, 32], sizes = [8, 32], strides = [1, 1]} : vector<8x96xf32> to vector<8x32xf32>
    %881 = arith.addf %879, %880 : vector<8x32xf32>
    %882 = arith.negf %881 : vector<8x32xf32>
    %883 = math.exp %882 : vector<8x32xf32>
    %cst_173 = arith.constant 1.000000e+00 : f32
    %884 = vector.broadcast %cst_173 : f32 to vector<8x32xf32>
    %885 = arith.addf %884, %883 : vector<8x32xf32>
    %886 = arith.divf %884, %885 : vector<8x32xf32>
    %887 = vector.extract_strided_slice %810 {offsets = [0, 64], sizes = [8, 32], strides = [1, 1]} : vector<8x96xf32> to vector<8x32xf32>
    %888 = vector.extract_strided_slice %870 {offsets = [0, 64], sizes = [8, 32], strides = [1, 1]} : vector<8x96xf32> to vector<8x32xf32>
    %889 = arith.addf %888, %838 : vector<8x32xf32>
    %890 = arith.mulf %878, %889 : vector<8x32xf32>
    %891 = arith.addf %887, %890 : vector<8x32xf32>
    %892 = math.tanh %891 : vector<8x32xf32>
    %cst_174 = arith.constant 1.000000e+00 : f32
    %893 = vector.broadcast %cst_174 : f32 to vector<8x32xf32>
    %894 = arith.subf %893, %886 : vector<8x32xf32>
    %895 = arith.mulf %894, %892 : vector<8x32xf32>
    %896 = arith.mulf %886, %868 : vector<8x32xf32>
    %897 = arith.addf %895, %896 : vector<8x32xf32>
    %898 = arith.truncf %897 : vector<8x32xf32> to vector<8x32xbf16>
    %cst_175 = arith.constant dense<0.000000e+00> : vector<8x96xf32>
    %899 = tpu.matmul %898, %835, %cst_175 {dimension_numbers = #tpu.dot_dimension_numbers<[1], [0], [0], [1], [0, 0, 1, 1], [], []>} : vector<8x32xbf16>, vector<32x96xbf16>, vector<8x96xf32> -> vector<8x96xf32>
    %900 = vector.extract_strided_slice %814 {offsets = [0, 0], sizes = [8, 32], strides = [1, 1]} : vector<8x96xf32> to vector<8x32xf32>
    %901 = vector.extract_strided_slice %899 {offsets = [0, 0], sizes = [8, 32], strides = [1, 1]} : vector<8x96xf32> to vector<8x32xf32>
    %902 = arith.addf %900, %901 : vector<8x32xf32>
    %903 = arith.negf %902 : vector<8x32xf32>
    %904 = math.exp %903 : vector<8x32xf32>
    %cst_176 = arith.constant 1.000000e+00 : f32
    %905 = vector.broadcast %cst_176 : f32 to vector<8x32xf32>
    %906 = arith.addf %905, %904 : vector<8x32xf32>
    %907 = arith.divf %905, %906 : vector<8x32xf32>
    %908 = vector.extract_strided_slice %814 {offsets = [0, 32], sizes = [8, 32], strides = [1, 1]} : vector<8x96xf32> to vector<8x32xf32>
    %909 = vector.extract_strided_slice %899 {offsets = [0, 32], sizes = [8, 32], strides = [1, 1]} : vector<8x96xf32> to vector<8x32xf32>
    %910 = arith.addf %908, %909 : vector<8x32xf32>
    %911 = arith.negf %910 : vector<8x32xf32>
    %912 = math.exp %911 : vector<8x32xf32>
    %cst_177 = arith.constant 1.000000e+00 : f32
    %913 = vector.broadcast %cst_177 : f32 to vector<8x32xf32>
    %914 = arith.addf %913, %912 : vector<8x32xf32>
    %915 = arith.divf %913, %914 : vector<8x32xf32>
    %916 = vector.extract_strided_slice %814 {offsets = [0, 64], sizes = [8, 32], strides = [1, 1]} : vector<8x96xf32> to vector<8x32xf32>
    %917 = vector.extract_strided_slice %899 {offsets = [0, 64], sizes = [8, 32], strides = [1, 1]} : vector<8x96xf32> to vector<8x32xf32>
    %918 = arith.addf %917, %838 : vector<8x32xf32>
    %919 = arith.mulf %907, %918 : vector<8x32xf32>
    %920 = arith.addf %916, %919 : vector<8x32xf32>
    %921 = math.tanh %920 : vector<8x32xf32>
    %cst_178 = arith.constant 1.000000e+00 : f32
    %922 = vector.broadcast %cst_178 : f32 to vector<8x32xf32>
    %923 = arith.subf %922, %915 : vector<8x32xf32>
    %924 = arith.mulf %923, %921 : vector<8x32xf32>
    %925 = arith.mulf %915, %897 : vector<8x32xf32>
    %926 = arith.addf %924, %925 : vector<8x32xf32>
    %927 = arith.truncf %926 : vector<8x32xf32> to vector<8x32xbf16>
    %cst_179 = arith.constant dense<0.000000e+00> : vector<8x96xf32>
    %928 = tpu.matmul %927, %835, %cst_179 {dimension_numbers = #tpu.dot_dimension_numbers<[1], [0], [0], [1], [0, 0, 1, 1], [], []>} : vector<8x32xbf16>, vector<32x96xbf16>, vector<8x96xf32> -> vector<8x96xf32>
    %929 = vector.extract_strided_slice %818 {offsets = [0, 0], sizes = [8, 32], strides = [1, 1]} : vector<8x96xf32> to vector<8x32xf32>
    %930 = vector.extract_strided_slice %928 {offsets = [0, 0], sizes = [8, 32], strides = [1, 1]} : vector<8x96xf32> to vector<8x32xf32>
    %931 = arith.addf %929, %930 : vector<8x32xf32>
    %932 = arith.negf %931 : vector<8x32xf32>
    %933 = math.exp %932 : vector<8x32xf32>
    %cst_180 = arith.constant 1.000000e+00 : f32
    %934 = vector.broadcast %cst_180 : f32 to vector<8x32xf32>
    %935 = arith.addf %934, %933 : vector<8x32xf32>
    %936 = arith.divf %934, %935 : vector<8x32xf32>
    %937 = vector.extract_strided_slice %818 {offsets = [0, 32], sizes = [8, 32], strides = [1, 1]} : vector<8x96xf32> to vector<8x32xf32>
    %938 = vector.extract_strided_slice %928 {offsets = [0, 32], sizes = [8, 32], strides = [1, 1]} : vector<8x96xf32> to vector<8x32xf32>
    %939 = arith.addf %937, %938 : vector<8x32xf32>
    %940 = arith.negf %939 : vector<8x32xf32>
    %941 = math.exp %940 : vector<8x32xf32>
    %cst_181 = arith.constant 1.000000e+00 : f32
    %942 = vector.broadcast %cst_181 : f32 to vector<8x32xf32>
    %943 = arith.addf %942, %941 : vector<8x32xf32>
    %944 = arith.divf %942, %943 : vector<8x32xf32>
    %945 = vector.extract_strided_slice %818 {offsets = [0, 64], sizes = [8, 32], strides = [1, 1]} : vector<8x96xf32> to vector<8x32xf32>
    %946 = vector.extract_strided_slice %928 {offsets = [0, 64], sizes = [8, 32], strides = [1, 1]} : vector<8x96xf32> to vector<8x32xf32>
    %947 = arith.addf %946, %838 : vector<8x32xf32>
    %948 = arith.mulf %936, %947 : vector<8x32xf32>
    %949 = arith.addf %945, %948 : vector<8x32xf32>
    %950 = math.tanh %949 : vector<8x32xf32>
    %cst_182 = arith.constant 1.000000e+00 : f32
    %951 = vector.broadcast %cst_182 : f32 to vector<8x32xf32>
    %952 = arith.subf %951, %944 : vector<8x32xf32>
    %953 = arith.mulf %952, %950 : vector<8x32xf32>
    %954 = arith.mulf %944, %926 : vector<8x32xf32>
    %955 = arith.addf %953, %954 : vector<8x32xf32>
    %956 = arith.truncf %955 : vector<8x32xf32> to vector<8x32xbf16>
    %cst_183 = arith.constant dense<0.000000e+00> : vector<8x96xf32>
    %957 = tpu.matmul %956, %835, %cst_183 {dimension_numbers = #tpu.dot_dimension_numbers<[1], [0], [0], [1], [0, 0, 1, 1], [], []>} : vector<8x32xbf16>, vector<32x96xbf16>, vector<8x96xf32> -> vector<8x96xf32>
    %958 = vector.extract_strided_slice %822 {offsets = [0, 0], sizes = [8, 32], strides = [1, 1]} : vector<8x96xf32> to vector<8x32xf32>
    %959 = vector.extract_strided_slice %957 {offsets = [0, 0], sizes = [8, 32], strides = [1, 1]} : vector<8x96xf32> to vector<8x32xf32>
    %960 = arith.addf %958, %959 : vector<8x32xf32>
    %961 = arith.negf %960 : vector<8x32xf32>
    %962 = math.exp %961 : vector<8x32xf32>
    %cst_184 = arith.constant 1.000000e+00 : f32
    %963 = vector.broadcast %cst_184 : f32 to vector<8x32xf32>
    %964 = arith.addf %963, %962 : vector<8x32xf32>
    %965 = arith.divf %963, %964 : vector<8x32xf32>
    %966 = vector.extract_strided_slice %822 {offsets = [0, 32], sizes = [8, 32], strides = [1, 1]} : vector<8x96xf32> to vector<8x32xf32>
    %967 = vector.extract_strided_slice %957 {offsets = [0, 32], sizes = [8, 32], strides = [1, 1]} : vector<8x96xf32> to vector<8x32xf32>
    %968 = arith.addf %966, %967 : vector<8x32xf32>
    %969 = arith.negf %968 : vector<8x32xf32>
    %970 = math.exp %969 : vector<8x32xf32>
    %cst_185 = arith.constant 1.000000e+00 : f32
    %971 = vector.broadcast %cst_185 : f32 to vector<8x32xf32>
    %972 = arith.addf %971, %970 : vector<8x32xf32>
    %973 = arith.divf %971, %972 : vector<8x32xf32>
    %974 = vector.extract_strided_slice %822 {offsets = [0, 64], sizes = [8, 32], strides = [1, 1]} : vector<8x96xf32> to vector<8x32xf32>
    %975 = vector.extract_strided_slice %957 {offsets = [0, 64], sizes = [8, 32], strides = [1, 1]} : vector<8x96xf32> to vector<8x32xf32>
    %976 = arith.addf %975, %838 : vector<8x32xf32>
    %977 = arith.mulf %965, %976 : vector<8x32xf32>
    %978 = arith.addf %974, %977 : vector<8x32xf32>
    %979 = math.tanh %978 : vector<8x32xf32>
    %cst_186 = arith.constant 1.000000e+00 : f32
    %980 = vector.broadcast %cst_186 : f32 to vector<8x32xf32>
    %981 = arith.subf %980, %973 : vector<8x32xf32>
    %982 = arith.mulf %981, %979 : vector<8x32xf32>
    %983 = arith.mulf %973, %955 : vector<8x32xf32>
    %984 = arith.addf %982, %983 : vector<8x32xf32>
    %985 = arith.truncf %984 : vector<8x32xf32> to vector<8x32xbf16>
    %cst_187 = arith.constant dense<0.000000e+00> : vector<8x96xf32>
    %986 = tpu.matmul %985, %835, %cst_187 {dimension_numbers = #tpu.dot_dimension_numbers<[1], [0], [0], [1], [0, 0, 1, 1], [], []>} : vector<8x32xbf16>, vector<32x96xbf16>, vector<8x96xf32> -> vector<8x96xf32>
    %987 = vector.extract_strided_slice %826 {offsets = [0, 0], sizes = [8, 32], strides = [1, 1]} : vector<8x96xf32> to vector<8x32xf32>
    %988 = vector.extract_strided_slice %986 {offsets = [0, 0], sizes = [8, 32], strides = [1, 1]} : vector<8x96xf32> to vector<8x32xf32>
    %989 = arith.addf %987, %988 : vector<8x32xf32>
    %990 = arith.negf %989 : vector<8x32xf32>
    %991 = math.exp %990 : vector<8x32xf32>
    %cst_188 = arith.constant 1.000000e+00 : f32
    %992 = vector.broadcast %cst_188 : f32 to vector<8x32xf32>
    %993 = arith.addf %992, %991 : vector<8x32xf32>
    %994 = arith.divf %992, %993 : vector<8x32xf32>
    %995 = vector.extract_strided_slice %826 {offsets = [0, 32], sizes = [8, 32], strides = [1, 1]} : vector<8x96xf32> to vector<8x32xf32>
    %996 = vector.extract_strided_slice %986 {offsets = [0, 32], sizes = [8, 32], strides = [1, 1]} : vector<8x96xf32> to vector<8x32xf32>
    %997 = arith.addf %995, %996 : vector<8x32xf32>
    %998 = arith.negf %997 : vector<8x32xf32>
    %999 = math.exp %998 : vector<8x32xf32>
    %cst_189 = arith.constant 1.000000e+00 : f32
    %1000 = vector.broadcast %cst_189 : f32 to vector<8x32xf32>
    %1001 = arith.addf %1000, %999 : vector<8x32xf32>
    %1002 = arith.divf %1000, %1001 : vector<8x32xf32>
    %1003 = vector.extract_strided_slice %826 {offsets = [0, 64], sizes = [8, 32], strides = [1, 1]} : vector<8x96xf32> to vector<8x32xf32>
    %1004 = vector.extract_strided_slice %986 {offsets = [0, 64], sizes = [8, 32], strides = [1, 1]} : vector<8x96xf32> to vector<8x32xf32>
    %1005 = arith.addf %1004, %838 : vector<8x32xf32>
    %1006 = arith.mulf %994, %1005 : vector<8x32xf32>
    %1007 = arith.addf %1003, %1006 : vector<8x32xf32>
    %1008 = math.tanh %1007 : vector<8x32xf32>
    %cst_190 = arith.constant 1.000000e+00 : f32
    %1009 = vector.broadcast %cst_190 : f32 to vector<8x32xf32>
    %1010 = arith.subf %1009, %1002 : vector<8x32xf32>
    %1011 = arith.mulf %1010, %1008 : vector<8x32xf32>
    %1012 = arith.mulf %1002, %984 : vector<8x32xf32>
    %1013 = arith.addf %1011, %1012 : vector<8x32xf32>
    %1014 = arith.truncf %1013 : vector<8x32xf32> to vector<8x32xbf16>
    %cst_191 = arith.constant dense<0.000000e+00> : vector<8x96xf32>
    %1015 = tpu.matmul %1014, %835, %cst_191 {dimension_numbers = #tpu.dot_dimension_numbers<[1], [0], [0], [1], [0, 0, 1, 1], [], []>} : vector<8x32xbf16>, vector<32x96xbf16>, vector<8x96xf32> -> vector<8x96xf32>
    %1016 = vector.extract_strided_slice %830 {offsets = [0, 0], sizes = [8, 32], strides = [1, 1]} : vector<8x96xf32> to vector<8x32xf32>
    %1017 = vector.extract_strided_slice %1015 {offsets = [0, 0], sizes = [8, 32], strides = [1, 1]} : vector<8x96xf32> to vector<8x32xf32>
    %1018 = arith.addf %1016, %1017 : vector<8x32xf32>
    %1019 = arith.negf %1018 : vector<8x32xf32>
    %1020 = math.exp %1019 : vector<8x32xf32>
    %cst_192 = arith.constant 1.000000e+00 : f32
    %1021 = vector.broadcast %cst_192 : f32 to vector<8x32xf32>
    %1022 = arith.addf %1021, %1020 : vector<8x32xf32>
    %1023 = arith.divf %1021, %1022 : vector<8x32xf32>
    %1024 = vector.extract_strided_slice %830 {offsets = [0, 32], sizes = [8, 32], strides = [1, 1]} : vector<8x96xf32> to vector<8x32xf32>
    %1025 = vector.extract_strided_slice %1015 {offsets = [0, 32], sizes = [8, 32], strides = [1, 1]} : vector<8x96xf32> to vector<8x32xf32>
    %1026 = arith.addf %1024, %1025 : vector<8x32xf32>
    %1027 = arith.negf %1026 : vector<8x32xf32>
    %1028 = math.exp %1027 : vector<8x32xf32>
    %cst_193 = arith.constant 1.000000e+00 : f32
    %1029 = vector.broadcast %cst_193 : f32 to vector<8x32xf32>
    %1030 = arith.addf %1029, %1028 : vector<8x32xf32>
    %1031 = arith.divf %1029, %1030 : vector<8x32xf32>
    %1032 = vector.extract_strided_slice %830 {offsets = [0, 64], sizes = [8, 32], strides = [1, 1]} : vector<8x96xf32> to vector<8x32xf32>
    %1033 = vector.extract_strided_slice %1015 {offsets = [0, 64], sizes = [8, 32], strides = [1, 1]} : vector<8x96xf32> to vector<8x32xf32>
    %1034 = arith.addf %1033, %838 : vector<8x32xf32>
    %1035 = arith.mulf %1023, %1034 : vector<8x32xf32>
    %1036 = arith.addf %1032, %1035 : vector<8x32xf32>
    %1037 = math.tanh %1036 : vector<8x32xf32>
    %cst_194 = arith.constant 1.000000e+00 : f32
    %1038 = vector.broadcast %cst_194 : f32 to vector<8x32xf32>
    %1039 = arith.subf %1038, %1031 : vector<8x32xf32>
    %1040 = arith.mulf %1039, %1037 : vector<8x32xf32>
    %1041 = arith.mulf %1031, %1013 : vector<8x32xf32>
    %1042 = arith.addf %1040, %1041 : vector<8x32xf32>
    %1043 = arith.truncf %1042 : vector<8x32xf32> to vector<8x32xbf16>
    %cst_195 = arith.constant dense<0.000000e+00> : vector<8x96xf32>
    %1044 = tpu.matmul %1043, %835, %cst_195 {dimension_numbers = #tpu.dot_dimension_numbers<[1], [0], [0], [1], [0, 0, 1, 1], [], []>} : vector<8x32xbf16>, vector<32x96xbf16>, vector<8x96xf32> -> vector<8x96xf32>
    %1045 = vector.extract_strided_slice %834 {offsets = [0, 0], sizes = [8, 32], strides = [1, 1]} : vector<8x96xf32> to vector<8x32xf32>
    %1046 = vector.extract_strided_slice %1044 {offsets = [0, 0], sizes = [8, 32], strides = [1, 1]} : vector<8x96xf32> to vector<8x32xf32>
    %1047 = arith.addf %1045, %1046 : vector<8x32xf32>
    %1048 = arith.negf %1047 : vector<8x32xf32>
    %1049 = math.exp %1048 : vector<8x32xf32>
    %cst_196 = arith.constant 1.000000e+00 : f32
    %1050 = vector.broadcast %cst_196 : f32 to vector<8x32xf32>
    %1051 = arith.addf %1050, %1049 : vector<8x32xf32>
    %1052 = arith.divf %1050, %1051 : vector<8x32xf32>
    %1053 = vector.extract_strided_slice %834 {offsets = [0, 32], sizes = [8, 32], strides = [1, 1]} : vector<8x96xf32> to vector<8x32xf32>
    %1054 = vector.extract_strided_slice %1044 {offsets = [0, 32], sizes = [8, 32], strides = [1, 1]} : vector<8x96xf32> to vector<8x32xf32>
    %1055 = arith.addf %1053, %1054 : vector<8x32xf32>
    %1056 = arith.negf %1055 : vector<8x32xf32>
    %1057 = math.exp %1056 : vector<8x32xf32>
    %cst_197 = arith.constant 1.000000e+00 : f32
    %1058 = vector.broadcast %cst_197 : f32 to vector<8x32xf32>
    %1059 = arith.addf %1058, %1057 : vector<8x32xf32>
    %1060 = arith.divf %1058, %1059 : vector<8x32xf32>
    %1061 = vector.extract_strided_slice %834 {offsets = [0, 64], sizes = [8, 32], strides = [1, 1]} : vector<8x96xf32> to vector<8x32xf32>
    %1062 = vector.extract_strided_slice %1044 {offsets = [0, 64], sizes = [8, 32], strides = [1, 1]} : vector<8x96xf32> to vector<8x32xf32>
    %1063 = arith.addf %1062, %838 : vector<8x32xf32>
    %1064 = arith.mulf %1052, %1063 : vector<8x32xf32>
    %1065 = arith.addf %1061, %1064 : vector<8x32xf32>
    %1066 = math.tanh %1065 : vector<8x32xf32>
    %cst_198 = arith.constant 1.000000e+00 : f32
    %1067 = vector.broadcast %cst_198 : f32 to vector<8x32xf32>
    %1068 = arith.subf %1067, %1060 : vector<8x32xf32>
    %1069 = arith.mulf %1068, %1066 : vector<8x32xf32>
    %1070 = arith.mulf %1060, %1042 : vector<8x32xf32>
    %1071 = arith.addf %1069, %1070 : vector<8x32xf32>
    %c0_199 = arith.constant 0 : index
    %c0_200 = arith.constant 0 : index
    %1072 = vector.load %arg20[%c0_199, %c0_200] : memref<32x16xbf16, #tpu.memory_space<vmem>>, vector<32x16xbf16>
    %c0_201 = arith.constant 0 : index
    %c0_202 = arith.constant 0 : index
    %1073 = vector.load %arg21[%c0_201, %c0_202] : memref<1x16xf32, #tpu.memory_space<vmem>>, vector<1x16xf32>
    %1074 = arith.truncf %868 : vector<8x32xf32> to vector<8x32xbf16>
    %cst_203 = arith.constant dense<0.000000e+00> : vector<8x16xf32>
    %1075 = tpu.matmul %1074, %1072, %cst_203 {dimension_numbers = #tpu.dot_dimension_numbers<[1], [0], [0], [1], [0, 0, 1, 1], [], []>} : vector<8x32xbf16>, vector<32x16xbf16>, vector<8x16xf32> -> vector<8x16xf32>
    %1076 = vector.broadcast %1073 : vector<1x16xf32> to vector<8x16xf32>
    %1077 = arith.addf %1075, %1076 : vector<8x16xf32>
    %1078 = arith.truncf %897 : vector<8x32xf32> to vector<8x32xbf16>
    %cst_204 = arith.constant dense<0.000000e+00> : vector<8x16xf32>
    %1079 = tpu.matmul %1078, %1072, %cst_204 {dimension_numbers = #tpu.dot_dimension_numbers<[1], [0], [0], [1], [0, 0, 1, 1], [], []>} : vector<8x32xbf16>, vector<32x16xbf16>, vector<8x16xf32> -> vector<8x16xf32>
    %1080 = vector.broadcast %1073 : vector<1x16xf32> to vector<8x16xf32>
    %1081 = arith.addf %1079, %1080 : vector<8x16xf32>
    %1082 = arith.truncf %926 : vector<8x32xf32> to vector<8x32xbf16>
    %cst_205 = arith.constant dense<0.000000e+00> : vector<8x16xf32>
    %1083 = tpu.matmul %1082, %1072, %cst_205 {dimension_numbers = #tpu.dot_dimension_numbers<[1], [0], [0], [1], [0, 0, 1, 1], [], []>} : vector<8x32xbf16>, vector<32x16xbf16>, vector<8x16xf32> -> vector<8x16xf32>
    %1084 = vector.broadcast %1073 : vector<1x16xf32> to vector<8x16xf32>
    %1085 = arith.addf %1083, %1084 : vector<8x16xf32>
    %1086 = arith.truncf %955 : vector<8x32xf32> to vector<8x32xbf16>
    %cst_206 = arith.constant dense<0.000000e+00> : vector<8x16xf32>
    %1087 = tpu.matmul %1086, %1072, %cst_206 {dimension_numbers = #tpu.dot_dimension_numbers<[1], [0], [0], [1], [0, 0, 1, 1], [], []>} : vector<8x32xbf16>, vector<32x16xbf16>, vector<8x16xf32> -> vector<8x16xf32>
    %1088 = vector.broadcast %1073 : vector<1x16xf32> to vector<8x16xf32>
    %1089 = arith.addf %1087, %1088 : vector<8x16xf32>
    %1090 = arith.truncf %984 : vector<8x32xf32> to vector<8x32xbf16>
    %cst_207 = arith.constant dense<0.000000e+00> : vector<8x16xf32>
    %1091 = tpu.matmul %1090, %1072, %cst_207 {dimension_numbers = #tpu.dot_dimension_numbers<[1], [0], [0], [1], [0, 0, 1, 1], [], []>} : vector<8x32xbf16>, vector<32x16xbf16>, vector<8x16xf32> -> vector<8x16xf32>
    %1092 = vector.broadcast %1073 : vector<1x16xf32> to vector<8x16xf32>
    %1093 = arith.addf %1091, %1092 : vector<8x16xf32>
    %1094 = arith.truncf %1013 : vector<8x32xf32> to vector<8x32xbf16>
    %cst_208 = arith.constant dense<0.000000e+00> : vector<8x16xf32>
    %1095 = tpu.matmul %1094, %1072, %cst_208 {dimension_numbers = #tpu.dot_dimension_numbers<[1], [0], [0], [1], [0, 0, 1, 1], [], []>} : vector<8x32xbf16>, vector<32x16xbf16>, vector<8x16xf32> -> vector<8x16xf32>
    %1096 = vector.broadcast %1073 : vector<1x16xf32> to vector<8x16xf32>
    %1097 = arith.addf %1095, %1096 : vector<8x16xf32>
    %1098 = arith.truncf %1042 : vector<8x32xf32> to vector<8x32xbf16>
    %cst_209 = arith.constant dense<0.000000e+00> : vector<8x16xf32>
    %1099 = tpu.matmul %1098, %1072, %cst_209 {dimension_numbers = #tpu.dot_dimension_numbers<[1], [0], [0], [1], [0, 0, 1, 1], [], []>} : vector<8x32xbf16>, vector<32x16xbf16>, vector<8x16xf32> -> vector<8x16xf32>
    %1100 = vector.broadcast %1073 : vector<1x16xf32> to vector<8x16xf32>
    %1101 = arith.addf %1099, %1100 : vector<8x16xf32>
    %1102 = arith.truncf %1071 : vector<8x32xf32> to vector<8x32xbf16>
    %cst_210 = arith.constant dense<0.000000e+00> : vector<8x16xf32>
    %1103 = tpu.matmul %1102, %1072, %cst_210 {dimension_numbers = #tpu.dot_dimension_numbers<[1], [0], [0], [1], [0, 0, 1, 1], [], []>} : vector<8x32xbf16>, vector<32x16xbf16>, vector<8x16xf32> -> vector<8x16xf32>
    %1104 = vector.broadcast %1073 : vector<1x16xf32> to vector<8x16xf32>
    %1105 = arith.addf %1103, %1104 : vector<8x16xf32>
    %1106 = tpu.concatenate %1077, %1081, %1085, %1089, %1093, %1097, %1101, %1105 in 1 : vector<8x16xf32>, vector<8x16xf32>, vector<8x16xf32>, vector<8x16xf32>, vector<8x16xf32>, vector<8x16xf32>, vector<8x16xf32>, vector<8x16xf32> -> vector<8x128xf32>
    %c0_211 = arith.constant 0 : index
    %c0_212 = arith.constant 0 : index
    %1107 = vector.load %arg22[%c0_211, %c0_212] : memref<8x128xf32, #tpu.memory_space<vmem>>, vector<8x128xf32>
    tpu.vector_store %arg22[%c0_211, %c0_212], %1106 {strides = array<i32>} : memref<8x128xf32, #tpu.memory_space<vmem>>, vector<8x128xf32>,
    return
  }
}

</mosaic_0001>

<llo_original>
// kernel: gru_vae_forward.1
$region0: #{gru_vae_forward.1}
  #allocation0 [shape = 'u32[]', space=smem, size = 0x4, offset = 0x4, fixed_abs, tag = 'smem constant byte address 0x4 - core index']
  #allocation1 [shape = 'u32[72,128]{1,0:T(1,128)}', space=vmem, size = 0x9000, scoped, tag = 'internal scratch']
  %s0 = inlined_call_operand.vmem [shape: bf16[8,128], index: 0, kind: input, shape index: {}]
  %s1 = inlined_call_operand.vmem [shape: f32[8,8], index: 1, kind: input, shape index: {}]
  %s2 = inlined_call_operand.vmem [shape: bf16[16,96], index: 2, kind: input, shape index: {}]
  %s3 = inlined_call_operand.vmem [shape: bf16[32,96], index: 3, kind: input, shape index: {}]
  %s4 = inlined_call_operand.vmem [shape: f32[1,96], index: 4, kind: input, shape index: {}]
  %s5 = inlined_call_operand.vmem [shape: f32[1,32], index: 5, kind: input, shape index: {}]
  %s6 = inlined_call_operand.vmem [shape: bf16[32,96], index: 6, kind: input, shape index: {}]
  %s7 = inlined_call_operand.vmem [shape: bf16[32,96], index: 7, kind: input, shape index: {}]
  %s8 = inlined_call_operand.vmem [shape: f32[1,96], index: 8, kind: input, shape index: {}]
  %s9 = inlined_call_operand.vmem [shape: f32[1,32], index: 9, kind: input, shape index: {}]
  %s10 = inlined_call_operand.vmem [shape: bf16[32,16], index: 10, kind: input, shape index: {}]
  %s11 = inlined_call_operand.vmem [shape: f32[1,16], index: 11, kind: input, shape index: {}]
  %s12 = inlined_call_operand.vmem [shape: bf16[8,96], index: 12, kind: input, shape index: {}]
  %s13 = inlined_call_operand.vmem [shape: bf16[32,96], index: 13, kind: input, shape index: {}]
  %s14 = inlined_call_operand.vmem [shape: f32[1,96], index: 14, kind: input, shape index: {}]
  %s15 = inlined_call_operand.vmem [shape: f32[1,32], index: 15, kind: input, shape index: {}]
  %s16 = inlined_call_operand.vmem [shape: bf16[32,96], index: 16, kind: input, shape index: {}]
  %s17 = inlined_call_operand.vmem [shape: bf16[32,96], index: 17, kind: input, shape index: {}]
  %s18 = inlined_call_operand.vmem [shape: f32[1,96], index: 18, kind: input, shape index: {}]
  %s19 = inlined_call_operand.vmem [shape: f32[1,32], index: 19, kind: input, shape index: {}]
  %s20 = inlined_call_operand.vmem [shape: bf16[32,16], index: 20, kind: input, shape index: {}]
  %s21 = inlined_call_operand.vmem [shape: f32[1,16], index: 21, kind: input, shape index: {}]
  %s22 = inlined_call_operand.vmem [shape: f32[8,128], index: 22, kind: output, shape index: {0}]
  %s23 = inlined_call_operand.vmem [shape: f32[8,16], index: 23, kind: output, shape index: {1}]
  %24 = xla_tuple %s22, %s23
  %s25 = sld [smem:[#allocation0]]
  $region106: #{gru_vae_forward.1} parent=0
    _
  %s27 = ssub.s32 1, %s25
  %s28 = scalar_select 0, %s27, %s25
  // Predicated region
  $region2: #{gru_vae_forward.1} parent=0 // pred_check
    _
  $region3: #{gru_vae_forward.1} parent=0 // pred_check_branch
    %30 = sbr.rel (0) target = $region5
  $region4: #{gru_vae_forward.1} parent=0 // pred_region
    _
  $region5: #{gru_vae_forward.1} parent=0 // pred_fallthru
    _
  // Predicated region
  $region6: #{gru_vae_forward.1} parent=0 // pred_check
    _
  $region7: #{gru_vae_forward.1} parent=0 // pred_check_branch
    %32 = sbr.rel (0) target = $region9
  $region8: #{gru_vae_forward.1} parent=0 // pred_region
    _
  $region9: #{gru_vae_forward.1} parent=0 // pred_fallthru
    _
  // Predicated region
  $region10: #{gru_vae_forward.1} parent=0 // pred_check
    _
  $region11: #{gru_vae_forward.1} parent=0 // pred_check_branch
    %34 = sbr.rel (0) target = $region13
  $region12: #{gru_vae_forward.1} parent=0 // pred_region
    _
  $region13: #{gru_vae_forward.1} parent=0 // pred_fallthru
    _
  // Predicated region
  $region14: #{gru_vae_forward.1} parent=0 // pred_check
    _
  $region15: #{gru_vae_forward.1} parent=0 // pred_check_branch
    %36 = sbr.rel (0) target = $region17
  $region16: #{gru_vae_forward.1} parent=0 // pred_region
    _
  $region17: #{gru_vae_forward.1} parent=0 // pred_fallthru
    _
  // Predicated region
  $region18: #{gru_vae_forward.1} parent=0 // pred_check
    _
  $region19: #{gru_vae_forward.1} parent=0 // pred_check_branch
    %38 = sbr.rel (0) target = $region21
  $region20: #{gru_vae_forward.1} parent=0 // pred_region
    _
  $region21: #{gru_vae_forward.1} parent=0 // pred_fallthru
    _
  // Predicated region
  $region22: #{gru_vae_forward.1} parent=0 // pred_check
    _
  $region23: #{gru_vae_forward.1} parent=0 // pred_check_branch
    %40 = sbr.rel (0) target = $region25
  $region24: #{gru_vae_forward.1} parent=0 // pred_region
    _
  $region25: #{gru_vae_forward.1} parent=0 // pred_fallthru
    _
  // Predicated region
  $region26: #{gru_vae_forward.1} parent=0 // pred_check
    _
  $region27: #{gru_vae_forward.1} parent=0 // pred_check_branch
    %42 = sbr.rel (0) target = $region29
  $region28: #{gru_vae_forward.1} parent=0 // pred_region
    _
  $region29: #{gru_vae_forward.1} parent=0 // pred_fallthru
    _
  // Predicated region
  $region30: #{gru_vae_forward.1} parent=0 // pred_check
    _
  $region31: #{gru_vae_forward.1} parent=0 // pred_check_branch
    %44 = sbr.rel (0) target = $region33
  $region32: #{gru_vae_forward.1} parent=0 // pred_region
    _
  $region33: #{gru_vae_forward.1} parent=0 // pred_fallthru
    _
  // Predicated region
  $region34: #{gru_vae_forward.1} parent=0 // pred_check
    _
  $region35: #{gru_vae_forward.1} parent=0 // pred_check_branch
    %46 = sbr.rel (0) target = $region37
  $region36: #{gru_vae_forward.1} parent=0 // pred_region
    _
  $region37: #{gru_vae_forward.1} parent=0 // pred_fallthru
    _
  // Predicated region
  $region38: #{gru_vae_forward.1} parent=0 // pred_check
    _
  $region39: #{gru_vae_forward.1} parent=0 // pred_check_branch
    %48 = sbr.rel (0) target = $region41
  $region40: #{gru_vae_forward.1} parent=0 // pred_region
    _
  $region41: #{gru_vae_forward.1} parent=0 // pred_fallthru
    _
  // Predicated region
  $region42: #{gru_vae_forward.1} parent=0 // pred_check
    _
  $region43: #{gru_vae_forward.1} parent=0 // pred_check_branch
    %50 = sbr.rel (0) target = $region45
  $region44: #{gru_vae_forward.1} parent=0 // pred_region
    _
  $region45: #{gru_vae_forward.1} parent=0 // pred_fallthru
    _
  // Predicated region
  $region46: #{gru_vae_forward.1} parent=0 // pred_check
    _
  $region47: #{gru_vae_forward.1} parent=0 // pred_check_branch
    %52 = sbr.rel (0) target = $region49
  $region48: #{gru_vae_forward.1} parent=0 // pred_region
    _
  $region49: #{gru_vae_forward.1} parent=0 // pred_fallthru
    _
  // Predicated region
  $region50: #{gru_vae_forward.1} parent=0 // pred_check
    _
  $region51: #{gru_vae_forward.1} parent=0 // pred_check_branch
    %54 = sbr.rel (0) target = $region53
  $region52: #{gru_vae_forward.1} parent=0 // pred_region
    _
  $region53: #{gru_vae_forward.1} parent=0 // pred_fallthru
    _
  // Predicated region
  $region54: #{gru_vae_forward.1} parent=0 // pred_check
    _
  $region55: #{gru_vae_forward.1} parent=0 // pred_check_branch
    %56 = sbr.rel (0) target = $region57
  $region56: #{gru_vae_forward.1} parent=0 // pred_region
    _
  $region57: #{gru_vae_forward.1} parent=0 // pred_fallthru
    _
  // Predicated region
  $region58: #{gru_vae_forward.1} parent=0 // pred_check
    _
  $region59: #{gru_vae_forward.1} parent=0 // pred_check_branch
    %58 = sbr.rel (0) target = $region61
  $region60: #{gru_vae_forward.1} parent=0 // pred_region
    _
  $region61: #{gru_vae_forward.1} parent=0 // pred_fallthru
    _
  // Predicated region
  $region62: #{gru_vae_forward.1} parent=0 // pred_check
    _
  $region63: #{gru_vae_forward.1} parent=0 // pred_check_branch
    %60 = sbr.rel (0) target = $region65
  $region64: #{gru_vae_forward.1} parent=0 // pred_region
    _
  $region65: #{gru_vae_forward.1} parent=0 // pred_fallthru
    _
  // Predicated region
  $region66: #{gru_vae_forward.1} parent=0 // pred_check
    _
  $region67: #{gru_vae_forward.1} parent=0 // pred_check_branch
    %62 = sbr.rel (0) target = $region69
  $region68: #{gru_vae_forward.1} parent=0 // pred_region
    _
  $region69: #{gru_vae_forward.1} parent=0 // pred_fallthru
    _
  // Predicated region
  $region70: #{gru_vae_forward.1} parent=0 // pred_check
    _
  $region71: #{gru_vae_forward.1} parent=0 // pred_check_branch
    %64 = sbr.rel (0) target = $region73
  $region72: #{gru_vae_forward.1} parent=0 // pred_region
    _
  $region73: #{gru_vae_forward.1} parent=0 // pred_fallthru
    _
  // Predicated region
  $region74: #{gru_vae_forward.1} parent=0 // pred_check
    _
  $region75: #{gru_vae_forward.1} parent=0 // pred_check_branch
    %66 = sbr.rel (0) target = $region77
  $region76: #{gru_vae_forward.1} parent=0 // pred_region
    _
  $region77: #{gru_vae_forward.1} parent=0 // pred_fallthru
    _
  // Predicated region
  $region78: #{gru_vae_forward.1} parent=0 // pred_check
    _
  $region79: #{gru_vae_forward.1} parent=0 // pred_check_branch
    %68 = sbr.rel (0) target = $region81
  $region80: #{gru_vae_forward.1} parent=0 // pred_region
    _
  $region81: #{gru_vae_forward.1} parent=0 // pred_fallthru
    _
  // Predicated region
  $region82: #{gru_vae_forward.1} parent=0 // pred_check
    _
  $region83: #{gru_vae_forward.1} parent=0 // pred_check_branch
    %70 = sbr.rel (0) target = $region85
  $region84: #{gru_vae_forward.1} parent=0 // pred_region
    _
  $region85: #{gru_vae_forward.1} parent=0 // pred_fallthru
    _
  // Predicated region
  $region86: #{gru_vae_forward.1} parent=0 // pred_check
    _
  $region87: #{gru_vae_forward.1} parent=0 // pred_check_branch
    %72 = sbr.rel (0) target = $region89
  $region88: #{gru_vae_forward.1} parent=0 // pred_region
    _
  $region89: #{gru_vae_forward.1} parent=0 // pred_fallthru
    _
  %v74 = vld [vmem:[%s0] sm:$0xf]
  %v75 = vld [vmem:[%s2] sm:$0xf]
  %v76 = vld [vmem:[%s2 + $0x4] sm:$0xf]
  %v77 = vld [vmem:[%s4] sm:$0x1]
  %v79 = vperm.slane %v77, 0
  %v83 = vunpack.c.l.b16 %v75
  %v84 = vunpack.c.l.b16 %v76
  %v85 = vpack.c.b16 %v84, %v83
  %vm87 = vcmask 130048
  %v89 = vsel %vm87, %v74, 0
  %91 = vmatpush.bf16.msra.mxu0 0
  %92 = vmatpush.bf16.msra.mxu0 0
  %93 = vmatpush.bf16.msra.mxu0 0
  %94 = vmatpush.bf16.msra.mxu0 0
  %95 = vmatpush.bf16.msra.mxu0 0
  %96 = vmatpush.bf16.msra.mxu0 0
  %97 = vmatpush.bf16.msra.mxu0 0
  %98 = vmatpush.bf16.msra.mxu0 %v85
  %99 = vmatmul.bf16.gmra.mxu0 %v89
  %v100 = vpop.f32.mrf.mxu0
  %v101 = vadd.f32 %v79, %v100
  %v102 = vpop.f32.mrf.mxu0
  %103 = vdwg.mxu0
  %v105 = vunpack.c.l.b16 %v74
  %v106 = vpack.c.b16 %v105, %v105
  %107 = vrot.lane.b32.xlu0 %v106, 112
  %v108 = vpop.permute.xlu0 %107
  %v110 = vsel %vm87, %v108, 0
  %112 = vmatpush.bf16.msra.mxu0 0
  %113 = vmatpush.bf16.msra.mxu0 0
  %114 = vmatpush.bf16.msra.mxu0 0
  %115 = vmatpush.bf16.msra.mxu0 0
  %116 = vmatpush.bf16.msra.mxu0 0
  %117 = vmatpush.bf16.msra.mxu0 0
  %118 = vmatpush.bf16.msra.mxu0 0
  %119 = vmatpush.bf16.msra.mxu0 %v85
  %120 = vmatmul.bf16.gmra.mxu0 %v110
  %v121 = vpop.f32.mrf.mxu0
  %v122 = vadd.f32 %v79, %v121
  %v123 = vpop.f32.mrf.mxu0
  %124 = vdwg.mxu0
  %125 = vrot.lane.b32.xlu0 %v106, 96
  %v126 = vpop.permute.xlu0 %125
  %v128 = vsel %vm87, %v126, 0
  %130 = vmatpush.bf16.msra.mxu0 0
  %131 = vmatpush.bf16.msra.mxu0 0
  %132 = vmatpush.bf16.msra.mxu0 0
  %133 = vmatpush.bf16.msra.mxu0 0
  %134 = vmatpush.bf16.msra.mxu0 0
  %135 = vmatpush.bf16.msra.mxu0 0
  %136 = vmatpush.bf16.msra.mxu0 0
  %137 = vmatpush.bf16.msra.mxu0 %v85
  %138 = vmatmul.bf16.gmra.mxu0 %v128
  %v139 = vpop.f32.mrf.mxu0
  %v140 = vadd.f32 %v79, %v139
  %v141 = vpop.f32.mrf.mxu0
  %142 = vdwg.mxu0
  %143 = vrot.lane.b32.xlu0 %v106, 80
  %v144 = vpop.permute.xlu0 %143
  %v146 = vsel %vm87, %v144, 0
  %148 = vmatpush.bf16.msra.mxu0 0
  %149 = vmatpush.bf16.msra.mxu0 0
  %150 = vmatpush.bf16.msra.mxu0 0
  %151 = vmatpush.bf16.msra.mxu0 0
  %152 = vmatpush.bf16.msra.mxu0 0
  %153 = vmatpush.bf16.msra.mxu0 0
  %154 = vmatpush.bf16.msra.mxu0 0
  %155 = vmatpush.bf16.msra.mxu0 %v85
  %156 = vmatmul.bf16.gmra.mxu0 %v146
  %v157 = vpop.f32.mrf.mxu0
  %v158 = vadd.f32 %v79, %v157
  %v159 = vpop.f32.mrf.mxu0
  %160 = vdwg.mxu0
  %161 = vrot.lane.b32.xlu0 %v106, 64
  %v162 = vpop.permute.xlu0 %161
  %v164 = vsel %vm87, %v162, 0
  %166 = vmatpush.bf16.msra.mxu0 0
  %167 = vmatpush.bf16.msra.mxu0 0
  %168 = vmatpush.bf16.msra.mxu0 0
  %169 = vmatpush.bf16.msra.mxu0 0
  %170 = vmatpush.bf16.msra.mxu0 0
  %171 = vmatpush.bf16.msra.mxu0 0
  %172 = vmatpush.bf16.msra.mxu0 0
  %173 = vmatpush.bf16.msra.mxu0 %v85
  %174 = vmatmul.bf16.gmra.mxu0 %v164
  %v175 = vpop.f32.mrf.mxu0
  %v176 = vadd.f32 %v79, %v175
  %v177 = vpop.f32.mrf.mxu0
  %178 = vdwg.mxu0
  %179 = vrot.lane.b32.xlu0 %v106, 48
  %v180 = vpop.permute.xlu0 %179
  %v182 = vsel %vm87, %v180, 0
  %184 = vmatpush.bf16.msra.mxu0 0
  %185 = vmatpush.bf16.msra.mxu0 0
  %186 = vmatpush.bf16.msra.mxu0 0
  %187 = vmatpush.bf16.msra.mxu0 0
  %188 = vmatpush.bf16.msra.mxu0 0
  %189 = vmatpush.bf16.msra.mxu0 0
  %190 = vmatpush.bf16.msra.mxu0 0
  %191 = vmatpush.bf16.msra.mxu0 %v85
  %192 = vmatmul.bf16.gmra.mxu0 %v182
  %v193 = vpop.f32.mrf.mxu0
  %v194 = vadd.f32 %v79, %v193
  %v195 = vpop.f32.mrf.mxu0
  %196 = vdwg.mxu0
  %197 = vrot.lane.b32.xlu0 %v106, 32
  %v198 = vpop.permute.xlu0 %197
  %v200 = vsel %vm87, %v198, 0
  %202 = vmatpush.bf16.msra.mxu0 0
  %203 = vmatpush.bf16.msra.mxu0 0
  %204 = vmatpush.bf16.msra.mxu0 0
  %205 = vmatpush.bf16.msra.mxu0 0
  %206 = vmatpush.bf16.msra.mxu0 0
  %207 = vmatpush.bf16.msra.mxu0 0
  %208 = vmatpush.bf16.msra.mxu0 0
  %209 = vmatpush.bf16.msra.mxu0 %v85
  %210 = vmatmul.bf16.gmra.mxu0 %v200
  %v211 = vpop.f32.mrf.mxu0
  %v212 = vadd.f32 %v79, %v211
  %v213 = vpop.f32.mrf.mxu0
  %214 = vdwg.mxu0
  %215 = vrot.lane.b32.xlu0 %v106, 16
  %v216 = vpop.permute.xlu0 %215
  %v218 = vsel %vm87, %v216, 0
  %220 = vmatpush.bf16.msra.mxu0 0
  %221 = vmatpush.bf16.msra.mxu0 0
  %222 = vmatpush.bf16.msra.mxu0 0
  %223 = vmatpush.bf16.msra.mxu0 0
  %224 = vmatpush.bf16.msra.mxu0 0
  %225 = vmatpush.bf16.msra.mxu0 0
  %226 = vmatpush.bf16.msra.mxu0 0
  %227 = vmatpush.bf16.msra.mxu0 %v85
  %228 = vmatmul.bf16.gmra.mxu0 %v218
  %v229 = vpop.f32.mrf.mxu0
  %v230 = vadd.f32 %v79, %v229
  %v231 = vpop.f32.mrf.mxu0
  %232 = vdwg.mxu0
  %v233 = vld [vmem:[%s3] sm:$0xf]
  %v234 = vld [vmem:[%s3 + $0x4] sm:$0xf]
  %v235 = vld [vmem:[%s3 + $0x8] sm:$0xf]
  %v236 = vld [vmem:[%s3 + $0xc] sm:$0xf]
  %v237 = vld [vmem:[%s5] sm:$0x1]
  %v239 = vperm.slane %v237, 0
  %v244 = vunpack.c.l.b16 %v233
  %v245 = vunpack.c.l.b16 %v234
  %v246 = vunpack.c.l.b16 %v235
  %v247 = vunpack.c.l.b16 %v236
  %v248 = vpack.c.b16 %v245, %v244
  %v249 = vpack.c.b16 %v247, %v246
  %vm252 = vcmask 261120
  %v254 = vsel %vm252, 0, 0
  %256 = vmatpush.bf16.msra.mxu0 0
  %257 = vmatpush.bf16.msra.mxu0 0
  %258 = vmatpush.bf16.msra.mxu0 0
  %259 = vmatpush.bf16.msra.mxu0 0
  %260 = vmatpush.bf16.msra.mxu0 0
  %261 = vmatpush.bf16.msra.mxu0 0
  %262 = vmatpush.bf16.msra.mxu0 %v249
  %263 = vmatpush.bf16.msra.mxu0 %v248
  %264 = vmatmul.bf16.gmra.mxu0 %v254
  %v265 = vpop.f32.mrf.mxu0
  %v266 = vadd.f32 0.0, %v265
  %v267 = vpop.f32.mrf.mxu0
  %268 = vdwg.mxu0
  %v269 = vadd.f32 %v101, %v266
  %v270 = vxor.u32 %v269, 2147483648
  %v271 = vmul.f32 %v270, 1.442695
  %v272 = vpow.pop %v271
  %v273 = vadd.f32 %v272, 1.0
  %v274 = vrcp.pop %v273
  %v275 = vmul.f32 %v273, %v274
  %v276 = vsub.f32 1.0, %v275
  %v277 = vmul.f32 %v274, %v276
  %v278 = vadd.f32 %v274, %v277
  %vm279 = vweird.f32 %v273
  %vm280 = vweird.f32 %v274
  %vm281 = vmor %vm279, %vm280
  %v282 = vsel %vm281, %v274, %v278
  %v283 = vand.u32 2147483647, %v273
  %vm284 = vcmp.eq.f32.partialorder %v283, 8.507059e+37
  %v285 = vand.u32 %v273, 2147483648
  %v286 = vor.u32 1.1754944e-38, %v285
  %v287 = vsel %vm284, %v286, %v282
  %v288 = vmul.f32 1.0, %v287
  %289 = vrot.lane.b32.xlu0 %v239, 64
  %v290 = vpop.permute.xlu0 %289
  %v292 = vadd.f32 %v266, %v290
  %294 = vrot.lane.b32.xlu0 %v292, 64
  %v295 = vpop.permute.xlu0 %294
  %v297 = vmul.f32 %v288, %v295
  %299 = vrot.lane.b32.xlu0 %v297, 64
  %v300 = vpop.permute.xlu0 %299
  %v302 = vadd.f32 %v101, %v300
  %v303 = vtanh.pop %v302
  %v304 = vsub.f32 1.0, %v288
  %306 = vrot.lane.b32.xlu0 %v303, 96
  %v307 = vpop.permute.xlu0 %306
  %v309 = vmul.f32 %v304, %v307
  %v310 = vmul.f32 %v288, 0.0
  %v311 = vadd.f32 %v309, %v310
  %v312 = vpack.c.bf16 %v311, %v311
  %314 = vrot.lane.b32.xlu0 %v312, 96
  %v315 = vpop.permute.xlu0 %314
  %v317 = vsel %vm252, %v315, 0
  %319 = vmatpush.bf16.msra.mxu0 0
  %320 = vmatpush.bf16.msra.mxu0 0
  %321 = vmatpush.bf16.msra.mxu0 0
  %322 = vmatpush.bf16.msra.mxu0 0
  %323 = vmatpush.bf16.msra.mxu0 0
  %324 = vmatpush.bf16.msra.mxu0 0
  %325 = vmatpush.bf16.msra.mxu0 %v249
  %326 = vmatpush.bf16.msra.mxu0 %v248
  %327 = vmatmul.bf16.gmra.mxu0 %v317
  %v328 = vpop.f32.mrf.mxu0
  %v329 = vadd.f32 0.0, %v328
  %v330 = vpop.f32.mrf.mxu0
  %331 = vdwg.mxu0
  %v332 = vadd.f32 %v122, %v329
  %v333 = vxor.u32 %v332, 2147483648
  %v334 = vmul.f32 %v333, 1.442695
  %v335 = vpow.pop %v334
  %v336 = vadd.f32 %v335, 1.0
  %v337 = vrcp.pop %v336
  %v338 = vmul.f32 %v336, %v337
  %v339 = vsub.f32 1.0, %v338
  %v340 = vmul.f32 %v337, %v339
  %v341 = vadd.f32 %v337, %v340
  %vm342 = vweird.f32 %v336
  %vm343 = vweird.f32 %v337
  %vm344 = vmor %vm342, %vm343
  %v345 = vsel %vm344, %v337, %v341
  %v346 = vand.u32 2147483647, %v336
  %vm347 = vcmp.eq.f32.partialorder %v346, 8.507059e+37
  %v348 = vand.u32 %v336, 2147483648
  %v349 = vor.u32 1.1754944e-38, %v348
  %v350 = vsel %vm347, %v349, %v345
  %v351 = vmul.f32 1.0, %v350
  %v352 = vadd.f32 %v329, %v290
  %354 = vrot.lane.b32.xlu0 %v352, 64
  %v355 = vpop.permute.xlu0 %354
  %v357 = vmul.f32 %v351, %v355
  %359 = vrot.lane.b32.xlu0 %v357, 64
  %v360 = vpop.permute.xlu0 %359
  %v362 = vadd.f32 %v122, %v360
  %v363 = vtanh.pop %v362
  %v364 = vsub.f32 1.0, %v351
  %366 = vrot.lane.b32.xlu0 %v363, 96
  %v367 = vpop.permute.xlu0 %366
  %v369 = vmul.f32 %v364, %v367
  %v370 = vmul.f32 %v351, %v311
  %v371 = vadd.f32 %v369, %v370
  %v372 = vpack.c.bf16 %v371, %v371
  %374 = vrot.lane.b32.xlu0 %v372, 96
  %v375 = vpop.permute.xlu0 %374
  %v377 = vsel %vm252, %v375, 0
  %379 = vmatpush.bf16.msra.mxu0 0
  %380 = vmatpush.bf16.msra.mxu0 0
  %381 = vmatpush.bf16.msra.mxu0 0
  %382 = vmatpush.bf16.msra.mxu0 0
  %383 = vmatpush.bf16.msra.mxu0 0
  %384 = vmatpush.bf16.msra.mxu0 0
  %385 = vmatpush.bf16.msra.mxu0 %v249
  %386 = vmatpush.bf16.msra.mxu0 %v248
  %387 = vmatmul.bf16.gmra.mxu0 %v377
  %v388 = vpop.f32.mrf.mxu0
  %v389 = vadd.f32 0.0, %v388
  %v390 = vpop.f32.mrf.mxu0
  %391 = vdwg.mxu0
  %v392 = vadd.f32 %v140, %v389
  %v393 = vxor.u32 %v392, 2147483648
  %v394 = vmul.f32 %v393, 1.442695
  %v395 = vpow.pop %v394
  %v396 = vadd.f32 %v395, 1.0
  %v397 = vrcp.pop %v396
  %v398 = vmul.f32 %v396, %v397
  %v399 = vsub.f32 1.0, %v398
  %v400 = vmul.f32 %v397, %v399
  %v401 = vadd.f32 %v397, %v400
  %vm402 = vweird.f32 %v396
  %vm403 = vweird.f32 %v397
  %vm404 = vmor %vm402, %vm403
  %v405 = vsel %vm404, %v397, %v401
  %v406 = vand.u32 2147483647, %v396
  %vm407 = vcmp.eq.f32.partialorder %v406, 8.507059e+37
  %v408 = vand.u32 %v396, 2147483648
  %v409 = vor.u32 1.1754944e-38, %v408
  %v410 = vsel %vm407, %v409, %v405
  %v411 = vmul.f32 1.0, %v410
  %v412 = vadd.f32 %v389, %v290
  %414 = vrot.lane.b32.xlu0 %v412, 64
  %v415 = vpop.permute.xlu0 %414
  %v417 = vmul.f32 %v411, %v415
  %419 = vrot.lane.b32.xlu0 %v417, 64
  %v420 = vpop.permute.xlu0 %419
  %v422 = vadd.f32 %v140, %v420
  %v423 = vtanh.pop %v422
  %v424 = vsub.f32 1.0, %v411
  %426 = vrot.lane.b32.xlu0 %v423, 96
  %v427 = vpop.permute.xlu0 %426
  %v429 = vmul.f32 %v424, %v427
  %v430 = vmul.f32 %v411, %v371
  %v431 = vadd.f32 %v429, %v430
  %v432 = vpack.c.bf16 %v431, %v431
  %434 = vrot.lane.b32.xlu0 %v432, 96
  %v435 = vpop.permute.xlu0 %434
  %v437 = vsel %vm252, %v435, 0
  %439 = vmatpush.bf16.msra.mxu0 0
  %440 = vmatpush.bf16.msra.mxu0 0
  %441 = vmatpush.bf16.msra.mxu0 0
  %442 = vmatpush.bf16.msra.mxu0 0
  %443 = vmatpush.bf16.msra.mxu0 0
  %444 = vmatpush.bf16.msra.mxu0 0
  %445 = vmatpush.bf16.msra.mxu0 %v249
  %446 = vmatpush.bf16.msra.mxu0 %v248
  %447 = vmatmul.bf16.gmra.mxu0 %v437
  %v448 = vpop.f32.mrf.mxu0
  %v449 = vadd.f32 0.0, %v448
  %v450 = vpop.f32.mrf.mxu0
  %451 = vdwg.mxu0
  %v452 = vadd.f32 %v158, %v449
  %v453 = vxor.u32 %v452, 2147483648
  %v454 = vmul.f32 %v453, 1.442695
  %v455 = vpow.pop %v454
  %v456 = vadd.f32 %v455, 1.0
  %v457 = vrcp.pop %v456
  %v458 = vmul.f32 %v456, %v457
  %v459 = vsub.f32 1.0, %v458
  %v460 = vmul.f32 %v457, %v459
  %v461 = vadd.f32 %v457, %v460
  %vm462 = vweird.f32 %v456
  %vm463 = vweird.f32 %v457
  %vm464 = vmor %vm462, %vm463
  %v465 = vsel %vm464, %v457, %v461
  %v466 = vand.u32 2147483647, %v456
  %vm467 = vcmp.eq.f32.partialorder %v466, 8.507059e+37
  %v468 = vand.u32 %v456, 2147483648
  %v469 = vor.u32 1.1754944e-38, %v468
  %v470 = vsel %vm467, %v469, %v465
  %v471 = vmul.f32 1.0, %v470
  %v472 = vadd.f32 %v449, %v290
  %474 = vrot.lane.b32.xlu0 %v472, 64
  %v475 = vpop.permute.xlu0 %474
  %v477 = vmul.f32 %v471, %v475
  %479 = vrot.lane.b32.xlu0 %v477, 64
  %v480 = vpop.permute.xlu0 %479
  %v482 = vadd.f32 %v158, %v480
  %v483 = vtanh.pop %v482
  %v484 = vsub.f32 1.0, %v471
  %486 = vrot.lane.b32.xlu0 %v483, 96
  %v487 = vpop.permute.xlu0 %486
  %v489 = vmul.f32 %v484, %v487
  %v490 = vmul.f32 %v471, %v431
  %v491 = vadd.f32 %v489, %v490
  %v492 = vpack.c.bf16 %v491, %v491
  %494 = vrot.lane.b32.xlu0 %v492, 96
  %v495 = vpop.permute.xlu0 %494
  %v497 = vsel %vm252, %v495, 0
  %499 = vmatpush.bf16.msra.mxu0 0
  %500 = vmatpush.bf16.msra.mxu0 0
  %501 = vmatpush.bf16.msra.mxu0 0
  %502 = vmatpush.bf16.msra.mxu0 0
  %503 = vmatpush.bf16.msra.mxu0 0
  %504 = vmatpush.bf16.msra.mxu0 0
  %505 = vmatpush.bf16.msra.mxu0 %v249
  %506 = vmatpush.bf16.msra.mxu0 %v248
  %507 = vmatmul.bf16.gmra.mxu0 %v497
  %v508 = vpop.f32.mrf.mxu0
  %v509 = vadd.f32 0.0, %v508
  %v510 = vpop.f32.mrf.mxu0
  %511 = vdwg.mxu0
  %v512 = vadd.f32 %v176, %v509
  %v513 = vxor.u32 %v512, 2147483648
  %v514 = vmul.f32 %v513, 1.442695
  %v515 = vpow.pop %v514
  %v516 = vadd.f32 %v515, 1.0
  %v517 = vrcp.pop %v516
  %v518 = vmul.f32 %v516, %v517
  %v519 = vsub.f32 1.0, %v518
  %v520 = vmul.f32 %v517, %v519
  %v521 = vadd.f32 %v517, %v520
  %vm522 = vweird.f32 %v516
  %vm523 = vweird.f32 %v517
  %vm524 = vmor %vm522, %vm523
  %v525 = vsel %vm524, %v517, %v521
  %v526 = vand.u32 2147483647, %v516
  %vm527 = vcmp.eq.f32.partialorder %v526, 8.507059e+37
  %v528 = vand.u32 %v516, 2147483648
  %v529 = vor.u32 1.1754944e-38, %v528
  %v530 = vsel %vm527, %v529, %v525
  %v531 = vmul.f32 1.0, %v530
  %v532 = vadd.f32 %v509, %v290
  %534 = vrot.lane.b32.xlu0 %v532, 64
  %v535 = vpop.permute.xlu0 %534
  %v537 = vmul.f32 %v531, %v535
  %539 = vrot.lane.b32.xlu0 %v537, 64
  %v540 = vpop.permute.xlu0 %539
  %v542 = vadd.f32 %v176, %v540
  %v543 = vtanh.pop %v542
  %v544 = vsub.f32 1.0, %v531
  %546 = vrot.lane.b32.xlu0 %v543, 96
  %v547 = vpop.permute.xlu0 %546
  %v549 = vmul.f32 %v544, %v547
  %v550 = vmul.f32 %v531, %v491
  %v551 = vadd.f32 %v549, %v550
  %v552 = vpack.c.bf16 %v551, %v551
  %554 = vrot.lane.b32.xlu0 %v552, 96
  %v555 = vpop.permute.xlu0 %554
  %v557 = vsel %vm252, %v555, 0
  %559 = vmatpush.bf16.msra.mxu0 0
  %560 = vmatpush.bf16.msra.mxu0 0
  %561 = vmatpush.bf16.msra.mxu0 0
  %562 = vmatpush.bf16.msra.mxu0 0
  %563 = vmatpush.bf16.msra.mxu0 0
  %564 = vmatpush.bf16.msra.mxu0 0
  %565 = vmatpush.bf16.msra.mxu0 %v249
  %566 = vmatpush.bf16.msra.mxu0 %v248
  %567 = vmatmul.bf16.gmra.mxu0 %v557
  %v568 = vpop.f32.mrf.mxu0
  %v569 = vadd.f32 0.0, %v568
  %v570 = vpop.f32.mrf.mxu0
  %571 = vdwg.mxu0
  %v572 = vadd.f32 %v194, %v569
  %v573 = vxor.u32 %v572, 2147483648
  %v574 = vmul.f32 %v573, 1.442695
  %v575 = vpow.pop %v574
  %v576 = vadd.f32 %v575, 1.0
  %v577 = vrcp.pop %v576
  %v578 = vmul.f32 %v576, %v577
  %v579 = vsub.f32 1.0, %v578
  %v580 = vmul.f32 %v577, %v579
  %v581 = vadd.f32 %v577, %v580
  %vm582 = vweird.f32 %v576
  %vm583 = vweird.f32 %v577
  %vm584 = vmor %vm582, %vm583
  %v585 = vsel %vm584, %v577, %v581
  %v586 = vand.u32 2147483647, %v576
  %vm587 = vcmp.eq.f32.partialorder %v586, 8.507059e+37
  %v588 = vand.u32 %v576, 2147483648
  %v589 = vor.u32 1.1754944e-38, %v588
  %v590 = vsel %vm587, %v589, %v585
  %v591 = vmul.f32 1.0, %v590
  %v592 = vadd.f32 %v569, %v290
  %594 = vrot.lane.b32.xlu0 %v592, 64
  %v595 = vpop.permute.xlu0 %594
  %v597 = vmul.f32 %v591, %v595
  %599 = vrot.lane.b32.xlu0 %v597, 64
  %v600 = vpop.permute.xlu0 %599
  %v602 = vadd.f32 %v194, %v600
  %v603 = vtanh.pop %v602
  %v604 = vsub.f32 1.0, %v591
  %606 = vrot.lane.b32.xlu0 %v603, 96
  %v607 = vpop.permute.xlu0 %606
  %v609 = vmul.f32 %v604, %v607
  %v610 = vmul.f32 %v591, %v551
  %v611 = vadd.f32 %v609, %v610
  %v612 = vpack.c.bf16 %v611, %v611
  %614 = vrot.lane.b32.xlu0 %v612, 96
  %v615 = vpop.permute.xlu0 %614
  %v617 = vsel %vm252, %v615, 0
  %619 = vmatpush.bf16.msra.mxu0 0
  %620 = vmatpush.bf16.msra.mxu0 0
  %621 = vmatpush.bf16.msra.mxu0 0
  %622 = vmatpush.bf16.msra.mxu0 0
  %623 = vmatpush.bf16.msra.mxu0 0
  %624 = vmatpush.bf16.msra.mxu0 0
  %625 = vmatpush.bf16.msra.mxu0 %v249
  %626 = vmatpush.bf16.msra.mxu0 %v248
  %627 = vmatmul.bf16.gmra.mxu0 %v617
  %v628 = vpop.f32.mrf.mxu0
  %v629 = vadd.f32 0.0, %v628
  %v630 = vpop.f32.mrf.mxu0
  %631 = vdwg.mxu0
  %v632 = vadd.f32 %v212, %v629
  %v633 = vxor.u32 %v632, 2147483648
  %v634 = vmul.f32 %v633, 1.442695
  %v635 = vpow.pop %v634
  %v636 = vadd.f32 %v635, 1.0
  %v637 = vrcp.pop %v636
  %v638 = vmul.f32 %v636, %v637
  %v639 = vsub.f32 1.0, %v638
  %v640 = vmul.f32 %v637, %v639
  %v641 = vadd.f32 %v637, %v640
  %vm642 = vweird.f32 %v636
  %vm643 = vweird.f32 %v637
  %vm644 = vmor %vm642, %vm643
  %v645 = vsel %vm644, %v637, %v641
  %v646 = vand.u32 2147483647, %v636
  %vm647 = vcmp.eq.f32.partialorder %v646, 8.507059e+37
  %v648 = vand.u32 %v636, 2147483648
  %v649 = vor.u32 1.1754944e-38, %v648
  %v650 = vsel %vm647, %v649, %v645
  %v651 = vmul.f32 1.0, %v650
  %v652 = vadd.f32 %v629, %v290
  %654 = vrot.lane.b32.xlu0 %v652, 64
  %v655 = vpop.permute.xlu0 %654
  %v657 = vmul.f32 %v651, %v655
  %659 = vrot.lane.b32.xlu0 %v657, 64
  %v660 = vpop.permute.xlu0 %659
  %v662 = vadd.f32 %v212, %v660
  %v663 = vtanh.pop %v662
  %v664 = vsub.f32 1.0, %v651
  %666 = vrot.lane.b32.xlu0 %v663, 96
  %v667 = vpop.permute.xlu0 %666
  %v669 = vmul.f32 %v664, %v667
  %v670 = vmul.f32 %v651, %v611
  %v671 = vadd.f32 %v669, %v670
  %v672 = vpack.c.bf16 %v671, %v671
  %674 = vrot.lane.b32.xlu0 %v672, 96
  %v675 = vpop.permute.xlu0 %674
  %v677 = vsel %vm252, %v675, 0
  %679 = vmatpush.bf16.msra.mxu0 0
  %680 = vmatpush.bf16.msra.mxu0 0
  %681 = vmatpush.bf16.msra.mxu0 0
  %682 = vmatpush.bf16.msra.mxu0 0
  %683 = vmatpush.bf16.msra.mxu0 0
  %684 = vmatpush.bf16.msra.mxu0 0
  %685 = vmatpush.bf16.msra.mxu0 %v249
  %686 = vmatpush.bf16.msra.mxu0 %v248
  %687 = vmatmul.bf16.gmra.mxu0 %v677
  %v688 = vpop.f32.mrf.mxu0
  %v689 = vadd.f32 0.0, %v688
  %v690 = vpop.f32.mrf.mxu0
  %691 = vdwg.mxu0
  %v692 = vadd.f32 %v230, %v689
  %v693 = vxor.u32 %v692, 2147483648
  %v694 = vmul.f32 %v693, 1.442695
  %v695 = vpow.pop %v694
  %v696 = vadd.f32 %v695, 1.0
  %v697 = vrcp.pop %v696
  %v698 = vmul.f32 %v696, %v697
  %v699 = vsub.f32 1.0, %v698
  %v700 = vmul.f32 %v697, %v699
  %v701 = vadd.f32 %v697, %v700
  %vm702 = vweird.f32 %v696
  %vm703 = vweird.f32 %v697
  %vm704 = vmor %vm702, %vm703
  %v705 = vsel %vm704, %v697, %v701
  %v706 = vand.u32 2147483647, %v696
  %vm707 = vcmp.eq.f32.partialorder %v706, 8.507059e+37
  %v708 = vand.u32 %v696, 2147483648
  %v709 = vor.u32 1.1754944e-38, %v708
  %v710 = vsel %vm707, %v709, %v705
  %v711 = vmul.f32 1.0, %v710
  %v712 = vadd.f32 %v689, %v290
  %714 = vrot.lane.b32.xlu0 %v712, 64
  %v715 = vpop.permute.xlu0 %714
  %v717 = vmul.f32 %v711, %v715
  %719 = vrot.lane.b32.xlu0 %v717, 64
  %v720 = vpop.permute.xlu0 %719
  %v722 = vadd.f32 %v230, %v720
  %v723 = vtanh.pop %v722
  %v724 = vsub.f32 1.0, %v711
  %726 = vrot.lane.b32.xlu0 %v723, 96
  %v727 = vpop.permute.xlu0 %726
  %v729 = vmul.f32 %v724, %v727
  %v730 = vmul.f32 %v711, %v671
  %v731 = vadd.f32 %v729, %v730
  %v732 = vld [vmem:[%s6] sm:$0xf]
  %v733 = vld [vmem:[%s6 + $0x4] sm:$0xf]
  %v734 = vld [vmem:[%s6 + $0x8] sm:$0xf]
  %v735 = vld [vmem:[%s6 + $0xc] sm:$0xf]
  %v736 = vld [vmem:[%s8] sm:$0x1]
  %v738 = vperm.slane %v736, 0
  %v744 = vunpack.c.l.b16 %v732
  %v745 = vunpack.c.l.b16 %v733
  %v746 = vunpack.c.l.b16 %v734
  %v747 = vunpack.c.l.b16 %v735
  %v748 = vpack.c.b16 %v745, %v744
  %v749 = vpack.c.b16 %v747, %v746
  %752 = vmatpush.bf16.msra.mxu0 0
  %753 = vmatpush.bf16.msra.mxu0 0
  %754 = vmatpush.bf16.msra.mxu0 0
  %755 = vmatpush.bf16.msra.mxu0 0
  %756 = vmatpush.bf16.msra.mxu0 0
  %757 = vmatpush.bf16.msra.mxu0 0
  %758 = vmatpush.bf16.msra.mxu0 %v749
  %759 = vmatpush.bf16.msra.mxu0 %v748
  %760 = vmatmul.bf16.gmra.mxu0 %v317
  %v761 = vpop.f32.mrf.mxu0
  %v762 = vadd.f32 %v738, %v761
  %v763 = vpop.f32.mrf.mxu0
  %764 = vdwg.mxu0
  %765 = vmatpush.bf16.msra.mxu0 0
  %766 = vmatpush.bf16.msra.mxu0 0
  %767 = vmatpush.bf16.msra.mxu0 0
  %768 = vmatpush.bf16.msra.mxu0 0
  %769 = vmatpush.bf16.msra.mxu0 0
  %770 = vmatpush.bf16.msra.mxu0 0
  %771 = vmatpush.bf16.msra.mxu0 %v749
  %772 = vmatpush.bf16.msra.mxu0 %v748
  %773 = vmatmul.bf16.gmra.mxu0 %v377
  %v774 = vpop.f32.mrf.mxu0
  %v775 = vadd.f32 %v738, %v774
  %v776 = vpop.f32.mrf.mxu0
  %777 = vdwg.mxu0
  %778 = vmatpush.bf16.msra.mxu0 0
  %779 = vmatpush.bf16.msra.mxu0 0
  %780 = vmatpush.bf16.msra.mxu0 0
  %781 = vmatpush.bf16.msra.mxu0 0
  %782 = vmatpush.bf16.msra.mxu0 0
  %783 = vmatpush.bf16.msra.mxu0 0
  %784 = vmatpush.bf16.msra.mxu0 %v749
  %785 = vmatpush.bf16.msra.mxu0 %v748
  %786 = vmatmul.bf16.gmra.mxu0 %v437
  %v787 = vpop.f32.mrf.mxu0
  %v788 = vadd.f32 %v738, %v787
  %v789 = vpop.f32.mrf.mxu0
  %790 = vdwg.mxu0
  %791 = vmatpush.bf16.msra.mxu0 0
  %792 = vmatpush.bf16.msra.mxu0 0
  %793 = vmatpush.bf16.msra.mxu0 0
  %794 = vmatpush.bf16.msra.mxu0 0
  %795 = vmatpush.bf16.msra.mxu0 0
  %796 = vmatpush.bf16.msra.mxu0 0
  %797 = vmatpush.bf16.msra.mxu0 %v749
  %798 = vmatpush.bf16.msra.mxu0 %v748
  %799 = vmatmul.bf16.gmra.mxu0 %v497
  %v800 = vpop.f32.mrf.mxu0
  %v801 = vadd.f32 %v738, %v800
  %v802 = vpop.f32.mrf.mxu0
  %803 = vdwg.mxu0
  %804 = vmatpush.bf16.msra.mxu0 0
  %805 = vmatpush.bf16.msra.mxu0 0
  %806 = vmatpush.bf16.msra.mxu0 0
  %807 = vmatpush.bf16.msra.mxu0 0
  %808 = vmatpush.bf16.msra.mxu0 0
  %809 = vmatpush.bf16.msra.mxu0 0
  %810 = vmatpush.bf16.msra.mxu0 %v749
  %811 = vmatpush.bf16.msra.mxu0 %v748
  %812 = vmatmul.bf16.gmra.mxu0 %v557
  %v813 = vpop.f32.mrf.mxu0
  %v814 = vadd.f32 %v738, %v813
  %v815 = vpop.f32.mrf.mxu0
  %816 = vdwg.mxu0
  %817 = vmatpush.bf16.msra.mxu0 0
  %818 = vmatpush.bf16.msra.mxu0 0
  %819 = vmatpush.bf16.msra.mxu0 0
  %820 = vmatpush.bf16.msra.mxu0 0
  %821 = vmatpush.bf16.msra.mxu0 0
  %822 = vmatpush.bf16.msra.mxu0 0
  %823 = vmatpush.bf16.msra.mxu0 %v749
  %824 = vmatpush.bf16.msra.mxu0 %v748
  %825 = vmatmul.bf16.gmra.mxu0 %v617
  %v826 = vpop.f32.mrf.mxu0
  %v827 = vadd.f32 %v738, %v826
  %v828 = vpop.f32.mrf.mxu0
  %829 = vdwg.mxu0
  %830 = vmatpush.bf16.msra.mxu0 0
  %831 = vmatpush.bf16.msra.mxu0 0
  %832 = vmatpush.bf16.msra.mxu0 0
  %833 = vmatpush.bf16.msra.mxu0 0
  %834 = vmatpush.bf16.msra.mxu0 0
  %835 = vmatpush.bf16.msra.mxu0 0
  %836 = vmatpush.bf16.msra.mxu0 %v749
  %837 = vmatpush.bf16.msra.mxu0 %v748
  %838 = vmatmul.bf16.gmra.mxu0 %v677
  %v839 = vpop.f32.mrf.mxu0
  %v840 = vadd.f32 %v738, %v839
  %v841 = vpop.f32.mrf.mxu0
  %842 = vdwg.mxu0
  %v843 = vpack.c.bf16 %v731, %v731
  %845 = vrot.lane.b32.xlu0 %v843, 96
  %v846 = vpop.permute.xlu0 %845
  %v848 = vsel %vm252, %v846, 0
  %850 = vmatpush.bf16.msra.mxu0 0
  %851 = vmatpush.bf16.msra.mxu0 0
  %852 = vmatpush.bf16.msra.mxu0 0
  %853 = vmatpush.bf16.msra.mxu0 0
  %854 = vmatpush.bf16.msra.mxu0 0
  %855 = vmatpush.bf16.msra.mxu0 0
  %856 = vmatpush.bf16.msra.mxu0 %v749
  %857 = vmatpush.bf16.msra.mxu0 %v748
  %858 = vmatmul.bf16.gmra.mxu0 %v848
  %v859 = vpop.f32.mrf.mxu0
  %v860 = vadd.f32 %v738, %v859
  %v861 = vpop.f32.mrf.mxu0
  %862 = vdwg.mxu0
  %v863 = vld [vmem:[%s7] sm:$0xf]
  %v864 = vld [vmem:[%s7 + $0x4] sm:$0xf]
  %v865 = vld [vmem:[%s7 + $0x8] sm:$0xf]
  %v866 = vld [vmem:[%s7 + $0xc] sm:$0xf]
  %v867 = vld [vmem:[%s9] sm:$0x1]
  %v869 = vperm.slane %v867, 0
  %v874 = vunpack.c.l.b16 %v863
  %v875 = vunpack.c.l.b16 %v864
  %v876 = vunpack.c.l.b16 %v865
  %v877 = vunpack.c.l.b16 %v866
  %v878 = vpack.c.b16 %v875, %v874
  %v879 = vpack.c.b16 %v877, %v876
  %882 = vmatpush.bf16.msra.mxu0 0
  %883 = vmatpush.bf16.msra.mxu0 0
  %884 = vmatpush.bf16.msra.mxu0 0
  %885 = vmatpush.bf16.msra.mxu0 0
  %886 = vmatpush.bf16.msra.mxu0 0
  %887 = vmatpush.bf16.msra.mxu0 0
  %888 = vmatpush.bf16.msra.mxu0 %v879
  %889 = vmatpush.bf16.msra.mxu0 %v878
  %890 = vmatmul.bf16.gmra.mxu0 %v254
  %v891 = vpop.f32.mrf.mxu0
  %v892 = vadd.f32 0.0, %v891
  %v893 = vpop.f32.mrf.mxu0
  %894 = vdwg.mxu0
  %v895 = vadd.f32 %v762, %v892
  %v896 = vxor.u32 %v895, 2147483648
  %v897 = vmul.f32 %v896, 1.442695
  %v898 = vpow.pop %v897
  %v899 = vadd.f32 %v898, 1.0
  %v900 = vrcp.pop %v899
  %v901 = vmul.f32 %v899, %v900
  %v902 = vsub.f32 1.0, %v901
  %v903 = vmul.f32 %v900, %v902
  %v904 = vadd.f32 %v900, %v903
  %vm905 = vweird.f32 %v899
  %vm906 = vweird.f32 %v900
  %vm907 = vmor %vm905, %vm906
  %v908 = vsel %vm907, %v900, %v904
  %v909 = vand.u32 2147483647, %v899
  %vm910 = vcmp.eq.f32.partialorder %v909, 8.507059e+37
  %v911 = vand.u32 %v899, 2147483648
  %v912 = vor.u32 1.1754944e-38, %v911
  %v913 = vsel %vm910, %v912, %v908
  %v914 = vmul.f32 1.0, %v913
  %915 = vrot.lane.b32.xlu0 %v869, 64
  %v916 = vpop.permute.xlu0 %915
  %v918 = vadd.f32 %v892, %v916
  %920 = vrot.lane.b32.xlu0 %v918, 64
  %v921 = vpop.permute.xlu0 %920
  %v923 = vmul.f32 %v914, %v921
  %925 = vrot.lane.b32.xlu0 %v923, 64
  %v926 = vpop.permute.xlu0 %925
  %v928 = vadd.f32 %v762, %v926
  %v929 = vtanh.pop %v928
  %v930 = vsub.f32 1.0, %v914
  %932 = vrot.lane.b32.xlu0 %v929, 96
  %v933 = vpop.permute.xlu0 %932
  %v935 = vmul.f32 %v930, %v933
  %v936 = vmul.f32 %v914, 0.0
  %v937 = vadd.f32 %v935, %v936
  %v938 = vpack.c.bf16 %v937, %v937
  %940 = vrot.lane.b32.xlu0 %v938, 96
  %v941 = vpop.permute.xlu0 %940
  %v943 = vsel %vm252, %v941, 0
  %945 = vmatpush.bf16.msra.mxu0 0
  %946 = vmatpush.bf16.msra.mxu0 0
  %947 = vmatpush.bf16.msra.mxu0 0
  %948 = vmatpush.bf16.msra.mxu0 0
  %949 = vmatpush.bf16.msra.mxu0 0
  %950 = vmatpush.bf16.msra.mxu0 0
  %951 = vmatpush.bf16.msra.mxu0 %v879
  %952 = vmatpush.bf16.msra.mxu0 %v878
  %953 = vmatmul.bf16.gmra.mxu0 %v943
  %v954 = vpop.f32.mrf.mxu0
  %v955 = vadd.f32 0.0, %v954
  %v956 = vpop.f32.mrf.mxu0
  %957 = vdwg.mxu0
  %v958 = vadd.f32 %v775, %v955
  %v959 = vxor.u32 %v958, 2147483648
  %v960 = vmul.f32 %v959, 1.442695
  %v961 = vpow.pop %v960
  %v962 = vadd.f32 %v961, 1.0
  %v963 = vrcp.pop %v962
  %v964 = vmul.f32 %v962, %v963
  %v965 = vsub.f32 1.0, %v964
  %v966 = vmul.f32 %v963, %v965
  %v967 = vadd.f32 %v963, %v966
  %vm968 = vweird.f32 %v962
  %vm969 = vweird.f32 %v963
  %vm970 = vmor %vm968, %vm969
  %v971 = vsel %vm970, %v963, %v967
  %v972 = vand.u32 2147483647, %v962
  %vm973 = vcmp.eq.f32.partialorder %v972, 8.507059e+37
  %v974 = vand.u32 %v962, 2147483648
  %v975 = vor.u32 1.1754944e-38, %v974
  %v976 = vsel %vm973, %v975, %v971
  %v977 = vmul.f32 1.0, %v976
  %v978 = vadd.f32 %v955, %v916
  %980 = vrot.lane.b32.xlu0 %v978, 64
  %v981 = vpop.permute.xlu0 %980
  %v983 = vmul.f32 %v977, %v981
  %985 = vrot.lane.b32.xlu0 %v983, 64
  %v986 = vpop.permute.xlu0 %985
  %v988 = vadd.f32 %v775, %v986
  %v989 = vtanh.pop %v988
  %v990 = vsub.f32 1.0, %v977
  %992 = vrot.lane.b32.xlu0 %v989, 96
  %v993 = vpop.permute.xlu0 %992
  %v995 = vmul.f32 %v990, %v993
  %v996 = vmul.f32 %v977, %v937
  %v997 = vadd.f32 %v995, %v996
  %v998 = vpack.c.bf16 %v997, %v997
  %1000 = vrot.lane.b32.xlu0 %v998, 96
  %v1001 = vpop.permute.xlu0 %1000
  %v1003 = vsel %vm252, %v1001, 0
  %1005 = vmatpush.bf16.msra.mxu0 0
  %1006 = vmatpush.bf16.msra.mxu0 0
  %1007 = vmatpush.bf16.msra.mxu0 0
  %1008 = vmatpush.bf16.msra.mxu0 0
  %1009 = vmatpush.bf16.msra.mxu0 0
  %1010 = vmatpush.bf16.msra.mxu0 0
  %1011 = vmatpush.bf16.msra.mxu0 %v879
  %1012 = vmatpush.bf16.msra.mxu0 %v878
  %1013 = vmatmul.bf16.gmra.mxu0 %v1003
  %v1014 = vpop.f32.mrf.mxu0
  %v1015 = vadd.f32 0.0, %v1014
  %v1016 = vpop.f32.mrf.mxu0
  %1017 = vdwg.mxu0
  %v1018 = vadd.f32 %v788, %v1015
  %v1019 = vxor.u32 %v1018, 2147483648
  %v1020 = vmul.f32 %v1019, 1.442695
  %v1021 = vpow.pop %v1020
  %v1022 = vadd.f32 %v1021, 1.0
  %v1023 = vrcp.pop %v1022
  %v1024 = vmul.f32 %v1022, %v1023
  %v1025 = vsub.f32 1.0, %v1024
  %v1026 = vmul.f32 %v1023, %v1025
  %v1027 = vadd.f32 %v1023, %v1026
  %vm1028 = vweird.f32 %v1022
  %vm1029 = vweird.f32 %v1023
  %vm1030 = vmor %vm1028, %vm1029
  %v1031 = vsel %vm1030, %v1023, %v1027
  %v1032 = vand.u32 2147483647, %v1022
  %vm1033 = vcmp.eq.f32.partialorder %v1032, 8.507059e+37
  %v1034 = vand.u32 %v1022, 2147483648
  %v1035 = vor.u32 1.1754944e-38, %v1034
  %v1036 = vsel %vm1033, %v1035, %v1031
  %v1037 = vmul.f32 1.0, %v1036
  %v1038 = vadd.f32 %v1015, %v916
  %1040 = vrot.lane.b32.xlu0 %v1038, 64
  %v1041 = vpop.permute.xlu0 %1040
  %v1043 = vmul.f32 %v1037, %v1041
  %1045 = vrot.lane.b32.xlu0 %v1043, 64
  %v1046 = vpop.permute.xlu0 %1045
  %v1048 = vadd.f32 %v788, %v1046
  %v1049 = vtanh.pop %v1048
  %v1050 = vsub.f32 1.0, %v1037
  %1052 = vrot.lane.b32.xlu0 %v1049, 96
  %v1053 = vpop.permute.xlu0 %1052
  %v1055 = vmul.f32 %v1050, %v1053
  %v1056 = vmul.f32 %v1037, %v997
  %v1057 = vadd.f32 %v1055, %v1056
  %v1058 = vpack.c.bf16 %v1057, %v1057
  %1060 = vrot.lane.b32.xlu0 %v1058, 96
  %v1061 = vpop.permute.xlu0 %1060
  %v1063 = vsel %vm252, %v1061, 0
  %1065 = vmatpush.bf16.msra.mxu0 0
  %1066 = vmatpush.bf16.msra.mxu0 0
  %1067 = vmatpush.bf16.msra.mxu0 0
  %1068 = vmatpush.bf16.msra.mxu0 0
  %1069 = vmatpush.bf16.msra.mxu0 0
  %1070 = vmatpush.bf16.msra.mxu0 0
  %1071 = vmatpush.bf16.msra.mxu0 %v879
  %1072 = vmatpush.bf16.msra.mxu0 %v878
  %1073 = vmatmul.bf16.gmra.mxu0 %v1063
  %v1074 = vpop.f32.mrf.mxu0
  %v1075 = vadd.f32 0.0, %v1074
  %v1076 = vpop.f32.mrf.mxu0
  %1077 = vdwg.mxu0
  %v1078 = vadd.f32 %v801, %v1075
  %v1079 = vxor.u32 %v1078, 2147483648
  %v1080 = vmul.f32 %v1079, 1.442695
  %v1081 = vpow.pop %v1080
  %v1082 = vadd.f32 %v1081, 1.0
  %v1083 = vrcp.pop %v1082
  %v1084 = vmul.f32 %v1082, %v1083
  %v1085 = vsub.f32 1.0, %v1084
  %v1086 = vmul.f32 %v1083, %v1085
  %v1087 = vadd.f32 %v1083, %v1086
  %vm1088 = vweird.f32 %v1082
  %vm1089 = vweird.f32 %v1083
  %vm1090 = vmor %vm1088, %vm1089
  %v1091 = vsel %vm1090, %v1083, %v1087
  %v1092 = vand.u32 2147483647, %v1082
  %vm1093 = vcmp.eq.f32.partialorder %v1092, 8.507059e+37
  %v1094 = vand.u32 %v1082, 2147483648
  %v1095 = vor.u32 1.1754944e-38, %v1094
  %v1096 = vsel %vm1093, %v1095, %v1091
  %v1097 = vmul.f32 1.0, %v1096
  %v1098 = vadd.f32 %v1075, %v916
  %1100 = vrot.lane.b32.xlu0 %v1098, 64
  %v1101 = vpop.permute.xlu0 %1100
  %v1103 = vmul.f32 %v1097, %v1101
  %1105 = vrot.lane.b32.xlu0 %v1103, 64
  %v1106 = vpop.permute.xlu0 %1105
  %v1108 = vadd.f32 %v801, %v1106
  %v1109 = vtanh.pop %v1108
  %v1110 = vsub.f32 1.0, %v1097
  %1112 = vrot.lane.b32.xlu0 %v1109, 96
  %v1113 = vpop.permute.xlu0 %1112
  %v1115 = vmul.f32 %v1110, %v1113
  %v1116 = vmul.f32 %v1097, %v1057
  %v1117 = vadd.f32 %v1115, %v1116
  %v1118 = vpack.c.bf16 %v1117, %v1117
  %1120 = vrot.lane.b32.xlu0 %v1118, 96
  %v1121 = vpop.permute.xlu0 %1120
  %v1123 = vsel %vm252, %v1121, 0
  %1125 = vmatpush.bf16.msra.mxu0 0
  %1126 = vmatpush.bf16.msra.mxu0 0
  %1127 = vmatpush.bf16.msra.mxu0 0
  %1128 = vmatpush.bf16.msra.mxu0 0
  %1129 = vmatpush.bf16.msra.mxu0 0
  %1130 = vmatpush.bf16.msra.mxu0 0
  %1131 = vmatpush.bf16.msra.mxu0 %v879
  %1132 = vmatpush.bf16.msra.mxu0 %v878
  %1133 = vmatmul.bf16.gmra.mxu0 %v1123
  %v1134 = vpop.f32.mrf.mxu0
  %v1135 = vadd.f32 0.0, %v1134
  %v1136 = vpop.f32.mrf.mxu0
  %1137 = vdwg.mxu0
  %v1138 = vadd.f32 %v814, %v1135
  %v1139 = vxor.u32 %v1138, 2147483648
  %v1140 = vmul.f32 %v1139, 1.442695
  %v1141 = vpow.pop %v1140
  %v1142 = vadd.f32 %v1141, 1.0
  %v1143 = vrcp.pop %v1142
  %v1144 = vmul.f32 %v1142, %v1143
  %v1145 = vsub.f32 1.0, %v1144
  %v1146 = vmul.f32 %v1143, %v1145
  %v1147 = vadd.f32 %v1143, %v1146
  %vm1148 = vweird.f32 %v1142
  %vm1149 = vweird.f32 %v1143
  %vm1150 = vmor %vm1148, %vm1149
  %v1151 = vsel %vm1150, %v1143, %v1147
  %v1152 = vand.u32 2147483647, %v1142
  %vm1153 = vcmp.eq.f32.partialorder %v1152, 8.507059e+37
  %v1154 = vand.u32 %v1142, 2147483648
  %v1155 = vor.u32 1.1754944e-38, %v1154
  %v1156 = vsel %vm1153, %v1155, %v1151
  %v1157 = vmul.f32 1.0, %v1156
  %v1158 = vadd.f32 %v1135, %v916
  %1160 = vrot.lane.b32.xlu0 %v1158, 64
  %v1161 = vpop.permute.xlu0 %1160
  %v1163 = vmul.f32 %v1157, %v1161
  %1165 = vrot.lane.b32.xlu0 %v1163, 64
  %v1166 = vpop.permute.xlu0 %1165
  %v1168 = vadd.f32 %v814, %v1166
  %v1169 = vtanh.pop %v1168
  %v1170 = vsub.f32 1.0, %v1157
  %1172 = vrot.lane.b32.xlu0 %v1169, 96
  %v1173 = vpop.permute.xlu0 %1172
  %v1175 = vmul.f32 %v1170, %v1173
  %v1176 = vmul.f32 %v1157, %v1117
  %v1177 = vadd.f32 %v1175, %v1176
  %v1178 = vpack.c.bf16 %v1177, %v1177
  %1180 = vrot.lane.b32.xlu0 %v1178, 96
  %v1181 = vpop.permute.xlu0 %1180
  %v1183 = vsel %vm252, %v1181, 0
  %1185 = vmatpush.bf16.msra.mxu0 0
  %1186 = vmatpush.bf16.msra.mxu0 0
  %1187 = vmatpush.bf16.msra.mxu0 0
  %1188 = vmatpush.bf16.msra.mxu0 0
  %1189 = vmatpush.bf16.msra.mxu0 0
  %1190 = vmatpush.bf16.msra.mxu0 0
  %1191 = vmatpush.bf16.msra.mxu0 %v879
  %1192 = vmatpush.bf16.msra.mxu0 %v878
  %1193 = vmatmul.bf16.gmra.mxu0 %v1183
  %v1194 = vpop.f32.mrf.mxu0
  %v1195 = vadd.f32 0.0, %v1194
  %v1196 = vpop.f32.mrf.mxu0
  %1197 = vdwg.mxu0
  %v1198 = vadd.f32 %v827, %v1195
  %v1199 = vxor.u32 %v1198, 2147483648
  %v1200 = vmul.f32 %v1199, 1.442695
  %v1201 = vpow.pop %v1200
  %v1202 = vadd.f32 %v1201, 1.0
  %v1203 = vrcp.pop %v1202
  %v1204 = vmul.f32 %v1202, %v1203
  %v1205 = vsub.f32 1.0, %v1204
  %v1206 = vmul.f32 %v1203, %v1205
  %v1207 = vadd.f32 %v1203, %v1206
  %vm1208 = vweird.f32 %v1202
  %vm1209 = vweird.f32 %v1203
  %vm1210 = vmor %vm1208, %vm1209
  %v1211 = vsel %vm1210, %v1203, %v1207
  %v1212 = vand.u32 2147483647, %v1202
  %vm1213 = vcmp.eq.f32.partialorder %v1212, 8.507059e+37
  %v1214 = vand.u32 %v1202, 2147483648
  %v1215 = vor.u32 1.1754944e-38, %v1214
  %v1216 = vsel %vm1213, %v1215, %v1211
  %v1217 = vmul.f32 1.0, %v1216
  %v1218 = vadd.f32 %v1195, %v916
  %1220 = vrot.lane.b32.xlu0 %v1218, 64
  %v1221 = vpop.permute.xlu0 %1220
  %v1223 = vmul.f32 %v1217, %v1221
  %1225 = vrot.lane.b32.xlu0 %v1223, 64
  %v1226 = vpop.permute.xlu0 %1225
  %v1228 = vadd.f32 %v827, %v1226
  %v1229 = vtanh.pop %v1228
  %v1230 = vsub.f32 1.0, %v1217
  %1232 = vrot.lane.b32.xlu0 %v1229, 96
  %v1233 = vpop.permute.xlu0 %1232
  %v1235 = vmul.f32 %v1230, %v1233
  %v1236 = vmul.f32 %v1217, %v1177
  %v1237 = vadd.f32 %v1235, %v1236
  %v1238 = vpack.c.bf16 %v1237, %v1237
  %1240 = vrot.lane.b32.xlu0 %v1238, 96
  %v1241 = vpop.permute.xlu0 %1240
  %v1243 = vsel %vm252, %v1241, 0
  %1245 = vmatpush.bf16.msra.mxu0 0
  %1246 = vmatpush.bf16.msra.mxu0 0
  %1247 = vmatpush.bf16.msra.mxu0 0
  %1248 = vmatpush.bf16.msra.mxu0 0
  %1249 = vmatpush.bf16.msra.mxu0 0
  %1250 = vmatpush.bf16.msra.mxu0 0
  %1251 = vmatpush.bf16.msra.mxu0 %v879
  %1252 = vmatpush.bf16.msra.mxu0 %v878
  %1253 = vmatmul.bf16.gmra.mxu0 %v1243
  %v1254 = vpop.f32.mrf.mxu0
  %v1255 = vadd.f32 0.0, %v1254
  %v1256 = vpop.f32.mrf.mxu0
  %1257 = vdwg.mxu0
  %v1258 = vadd.f32 %v840, %v1255
  %v1259 = vxor.u32 %v1258, 2147483648
  %v1260 = vmul.f32 %v1259, 1.442695
  %v1261 = vpow.pop %v1260
  %v1262 = vadd.f32 %v1261, 1.0
  %v1263 = vrcp.pop %v1262
  %v1264 = vmul.f32 %v1262, %v1263
  %v1265 = vsub.f32 1.0, %v1264
  %v1266 = vmul.f32 %v1263, %v1265
  %v1267 = vadd.f32 %v1263, %v1266
  %vm1268 = vweird.f32 %v1262
  %vm1269 = vweird.f32 %v1263
  %vm1270 = vmor %vm1268, %vm1269
  %v1271 = vsel %vm1270, %v1263, %v1267
  %v1272 = vand.u32 2147483647, %v1262
  %vm1273 = vcmp.eq.f32.partialorder %v1272, 8.507059e+37
  %v1274 = vand.u32 %v1262, 2147483648
  %v1275 = vor.u32 1.1754944e-38, %v1274
  %v1276 = vsel %vm1273, %v1275, %v1271
  %v1277 = vmul.f32 1.0, %v1276
  %v1278 = vadd.f32 %v1255, %v916
  %1280 = vrot.lane.b32.xlu0 %v1278, 64
  %v1281 = vpop.permute.xlu0 %1280
  %v1283 = vmul.f32 %v1277, %v1281
  %1285 = vrot.lane.b32.xlu0 %v1283, 64
  %v1286 = vpop.permute.xlu0 %1285
  %v1288 = vadd.f32 %v840, %v1286
  %v1289 = vtanh.pop %v1288
  %v1290 = vsub.f32 1.0, %v1277
  %1292 = vrot.lane.b32.xlu0 %v1289, 96
  %v1293 = vpop.permute.xlu0 %1292
  %v1295 = vmul.f32 %v1290, %v1293
  %v1296 = vmul.f32 %v1277, %v1237
  %v1297 = vadd.f32 %v1295, %v1296
  %v1298 = vpack.c.bf16 %v1297, %v1297
  %1300 = vrot.lane.b32.xlu0 %v1298, 96
  %v1301 = vpop.permute.xlu0 %1300
  %v1303 = vsel %vm252, %v1301, 0
  %1305 = vmatpush.bf16.msra.mxu0 0
  %1306 = vmatpush.bf16.msra.mxu0 0
  %1307 = vmatpush.bf16.msra.mxu0 0
  %1308 = vmatpush.bf16.msra.mxu0 0
  %1309 = vmatpush.bf16.msra.mxu0 0
  %1310 = vmatpush.bf16.msra.mxu0 0
  %1311 = vmatpush.bf16.msra.mxu0 %v879
  %1312 = vmatpush.bf16.msra.mxu0 %v878
  %1313 = vmatmul.bf16.gmra.mxu0 %v1303
  %v1314 = vpop.f32.mrf.mxu0
  %v1315 = vadd.f32 0.0, %v1314
  %v1316 = vpop.f32.mrf.mxu0
  %1317 = vdwg.mxu0
  %v1318 = vadd.f32 %v860, %v1315
  %v1319 = vxor.u32 %v1318, 2147483648
  %v1320 = vmul.f32 %v1319, 1.442695
  %v1321 = vpow.pop %v1320
  %v1322 = vadd.f32 %v1321, 1.0
  %v1323 = vrcp.pop %v1322
  %v1324 = vmul.f32 %v1322, %v1323
  %v1325 = vsub.f32 1.0, %v1324
  %v1326 = vmul.f32 %v1323, %v1325
  %v1327 = vadd.f32 %v1323, %v1326
  %vm1328 = vweird.f32 %v1322
  %vm1329 = vweird.f32 %v1323
  %vm1330 = vmor %vm1328, %vm1329
  %v1331 = vsel %vm1330, %v1323, %v1327
  %v1332 = vand.u32 2147483647, %v1322
  %vm1333 = vcmp.eq.f32.partialorder %v1332, 8.507059e+37
  %v1334 = vand.u32 %v1322, 2147483648
  %v1335 = vor.u32 1.1754944e-38, %v1334
  %v1336 = vsel %vm1333, %v1335, %v1331
  %v1337 = vmul.f32 1.0, %v1336
  %v1338 = vadd.f32 %v1315, %v916
  %1340 = vrot.lane.b32.xlu0 %v1338, 64
  %v1341 = vpop.permute.xlu0 %1340
  %v1343 = vmul.f32 %v1337, %v1341
  %1345 = vrot.lane.b32.xlu0 %v1343, 64
  %v1346 = vpop.permute.xlu0 %1345
  %v1348 = vadd.f32 %v860, %v1346
  %v1349 = vtanh.pop %v1348
  %v1350 = vsub.f32 1.0, %v1337
  %1352 = vrot.lane.b32.xlu0 %v1349, 96
  %v1353 = vpop.permute.xlu0 %1352
  %v1355 = vmul.f32 %v1350, %v1353
  %v1356 = vmul.f32 %v1337, %v1297
  %v1357 = vadd.f32 %v1355, %v1356
  %v1358 = vld [vmem:[%s10] sm:$0xf]
  %v1359 = vld [vmem:[%s10 + $0x4] sm:$0xf]
  %v1360 = vld [vmem:[%s10 + $0x8] sm:$0xf]
  %v1361 = vld [vmem:[%s10 + $0xc] sm:$0xf]
  %v1362 = vpack.c.bf16 %v1357, %v1357
  %v1363 = vld [vmem:[%s11] sm:$0x1]
  %v1365 = vperm.slane %v1363, 0
  %1368 = vrot.lane.b32.xlu0 %v1362, 96
  %v1369 = vpop.permute.xlu0 %1368
  %v1374 = vunpack.c.l.b16 %v1358
  %v1375 = vunpack.c.l.b16 %v1359
  %v1376 = vunpack.c.l.b16 %v1360
  %v1377 = vunpack.c.l.b16 %v1361
  %v1378 = vpack.c.b16 %v1375, %v1374
  %v1379 = vpack.c.b16 %v1377, %v1376
  %v1383 = vsel %vm252, %v1369, 0
  %1385 = vmatpush.bf16.msra.mxu0 0
  %1386 = vmatpush.bf16.msra.mxu0 0
  %1387 = vmatpush.bf16.msra.mxu0 0
  %1388 = vmatpush.bf16.msra.mxu0 0
  %1389 = vmatpush.bf16.msra.mxu0 0
  %1390 = vmatpush.bf16.msra.mxu0 0
  %1391 = vmatpush.bf16.msra.mxu0 %v1379
  %1392 = vmatpush.bf16.msra.mxu0 %v1378
  %1393 = vmatmul.bf16.gmra.mxu0 %v1383
  %v1394 = vpop.f32.mrf.mxu0
  %v1395 = vadd.f32 %v1365, %v1394
  %v1396 = vpop.f32.mrf.mxu0
  %1397 = vdwg.mxu0
  %1398 = vst.msk [vmem:[%s23] sm:$0xff] %vm87, %v1395
  %v1399 = vmul.f32 %v1395, 0.5
  %v1400 = vmul.f32 %v1399, 1.442695
  %v1401 = vpow.pop %v1400
  %v1402 = vld [vmem:[%s1] sm:$0xff]
  %1404 = vrot.lane.b32.xlu0 %v1402, 8
  %v1405 = vpop.permute.xlu0 %1404
  %v1407 = vmul.f32 %v1401, %v1405
  %1409 = vrot.lane.b32.xlu0 %v1407, 120
  %v1410 = vpop.permute.xlu0 %1409
  %v1412 = vadd.f32 %v1395, %v1410
  %v1413 = vld [vmem:[%s12] sm:$0xf]
  %v1414 = vpack.c.bf16 %v1412, %v1412
  %v1415 = vld [vmem:[%s14] sm:$0x1]
  %v1417 = vperm.slane %v1415, 0
  %vm1419 = vcmask 64512
  %v1421 = vsel %vm1419, %v1414, 0
  %vm1423 = vcmask 1043456
  %v1425 = vsel %vm1423, %v1413, 0
  %1427 = vmatpush.bf16.msra.mxu0 0
  %1428 = vmatpush.bf16.msra.mxu0 0
  %1429 = vmatpush.bf16.msra.mxu0 0
  %1430 = vmatpush.bf16.msra.mxu0 0
  %1431 = vmatpush.bf16.msra.mxu0 0
  %1432 = vmatpush.bf16.msra.mxu0 0
  %1433 = vmatpush.bf16.msra.mxu0 0
  %1434 = vmatpush.bf16.msra.mxu0 %v1425
  %1435 = vmatmul.bf16.gmra.mxu0 %v1421
  %v1436 = vpop.f32.mrf.mxu0
  %v1437 = vadd.f32 %v1417, %v1436
  %v1438 = vpop.f32.mrf.mxu0
  %1439 = vdwg.mxu0
  %v1440 = vld [vmem:[%s13] sm:$0xf]
  %v1441 = vld [vmem:[%s13 + $0x4] sm:$0xf]
  %v1442 = vld [vmem:[%s13 + $0x8] sm:$0xf]
  %v1443 = vld [vmem:[%s13 + $0xc] sm:$0xf]
  %v1444 = vld [vmem:[%s15] sm:$0x1]
  %v1446 = vperm.slane %v1444, 0
  %v1451 = vunpack.c.l.b16 %v1440
  %v1452 = vunpack.c.l.b16 %v1441
  %v1453 = vunpack.c.l.b16 %v1442
  %v1454 = vunpack.c.l.b16 %v1443
  %v1455 = vpack.c.b16 %v1452, %v1451
  %v1456 = vpack.c.b16 %v1454, %v1453
  %1459 = vmatpush.bf16.msra.mxu0 0
  %1460 = vmatpush.bf16.msra.mxu0 0
  %1461 = vmatpush.bf16.msra.mxu0 0
  %1462 = vmatpush.bf16.msra.mxu0 0
  %1463 = vmatpush.bf16.msra.mxu0 0
  %1464 = vmatpush.bf16.msra.mxu0 0
  %1465 = vmatpush.bf16.msra.mxu0 %v1456
  %1466 = vmatpush.bf16.msra.mxu0 %v1455
  %1467 = vmatmul.bf16.gmra.mxu0 %v254
  %v1468 = vpop.f32.mrf.mxu0
  %v1469 = vadd.f32 0.0, %v1468
  %v1470 = vpop.f32.mrf.mxu0
  %1471 = vdwg.mxu0
  %v1472 = vadd.f32 %v1437, %v1469
  %v1473 = vxor.u32 %v1472, 2147483648
  %v1474 = vmul.f32 %v1473, 1.442695
  %v1475 = vpow.pop %v1474
  %v1476 = vadd.f32 %v1475, 1.0
  %v1477 = vrcp.pop %v1476
  %v1478 = vmul.f32 %v1476, %v1477
  %v1479 = vsub.f32 1.0, %v1478
  %v1480 = vmul.f32 %v1477, %v1479
  %v1481 = vadd.f32 %v1477, %v1480
  %vm1482 = vweird.f32 %v1476
  %vm1483 = vweird.f32 %v1477
  %vm1484 = vmor %vm1482, %vm1483
  %v1485 = vsel %vm1484, %v1477, %v1481
  %v1486 = vand.u32 2147483647, %v1476
  %vm1487 = vcmp.eq.f32.partialorder %v1486, 8.507059e+37
  %v1488 = vand.u32 %v1476, 2147483648
  %v1489 = vor.u32 1.1754944e-38, %v1488
  %v1490 = vsel %vm1487, %v1489, %v1485
  %v1491 = vmul.f32 1.0, %v1490
  %1492 = vrot.lane.b32.xlu0 %v1446, 64
  %v1493 = vpop.permute.xlu0 %1492
  %v1495 = vadd.f32 %v1469, %v1493
  %1497 = vrot.lane.b32.xlu0 %v1495, 64
  %v1498 = vpop.permute.xlu0 %1497
  %v1500 = vmul.f32 %v1491, %v1498
  %1502 = vrot.lane.b32.xlu0 %v1500, 64
  %v1503 = vpop.permute.xlu0 %1502
  %v1505 = vadd.f32 %v1437, %v1503
  %v1506 = vtanh.pop %v1505
  %v1507 = vsub.f32 1.0, %v1491
  %1509 = vrot.lane.b32.xlu0 %v1506, 96
  %v1510 = vpop.permute.xlu0 %1509
  %v1512 = vmul.f32 %v1507, %v1510
  %v1513 = vmul.f32 %v1491, 0.0
  %v1514 = vadd.f32 %v1512, %v1513
  %v1515 = vpack.c.bf16 %v1514, %v1514
  %1517 = vrot.lane.b32.xlu0 %v1515, 96
  %v1518 = vpop.permute.xlu0 %1517
  %v1520 = vsel %vm252, %v1518, 0
  %1522 = vmatpush.bf16.msra.mxu0 0
  %1523 = vmatpush.bf16.msra.mxu0 0
  %1524 = vmatpush.bf16.msra.mxu0 0
  %1525 = vmatpush.bf16.msra.mxu0 0
  %1526 = vmatpush.bf16.msra.mxu0 0
  %1527 = vmatpush.bf16.msra.mxu0 0
  %1528 = vmatpush.bf16.msra.mxu0 %v1456
  %1529 = vmatpush.bf16.msra.mxu0 %v1455
  %1530 = vmatmul.bf16.gmra.mxu0 %v1520
  %v1531 = vpop.f32.mrf.mxu0
  %v1532 = vadd.f32 0.0, %v1531
  %v1533 = vpop.f32.mrf.mxu0
  %1534 = vdwg.mxu0
  %v1535 = vadd.f32 %v1437, %v1532
  %v1536 = vxor.u32 %v1535, 2147483648
  %v1537 = vmul.f32 %v1536, 1.442695
  %v1538 = vpow.pop %v1537
  %v1539 = vadd.f32 %v1538, 1.0
  %v1540 = vrcp.pop %v1539
  %v1541 = vmul.f32 %v1539, %v1540
  %v1542 = vsub.f32 1.0, %v1541
  %v1543 = vmul.f32 %v1540, %v1542
  %v1544 = vadd.f32 %v1540, %v1543
  %vm1545 = vweird.f32 %v1539
  %vm1546 = vweird.f32 %v1540
  %vm1547 = vmor %vm1545, %vm1546
  %v1548 = vsel %vm1547, %v1540, %v1544
  %v1549 = vand.u32 2147483647, %v1539
  %vm1550 = vcmp.eq.f32.partialorder %v1549, 8.507059e+37
  %v1551 = vand.u32 %v1539, 2147483648
  %v1552 = vor.u32 1.1754944e-38, %v1551
  %v1553 = vsel %vm1550, %v1552, %v1548
  %v1554 = vmul.f32 1.0, %v1553
  %v1555 = vadd.f32 %v1532, %v1493
  %1557 = vrot.lane.b32.xlu0 %v1555, 64
  %v1558 = vpop.permute.xlu0 %1557
  %v1560 = vmul.f32 %v1554, %v1558
  %1562 = vrot.lane.b32.xlu0 %v1560, 64
  %v1563 = vpop.permute.xlu0 %1562
  %v1565 = vadd.f32 %v1437, %v1563
  %v1566 = vtanh.pop %v1565
  %v1567 = vsub.f32 1.0, %v1554
  %1569 = vrot.lane.b32.xlu0 %v1566, 96
  %v1570 = vpop.permute.xlu0 %1569
  %v1572 = vmul.f32 %v1567, %v1570
  %v1573 = vmul.f32 %v1554, %v1514
  %v1574 = vadd.f32 %v1572, %v1573
  %v1575 = vpack.c.bf16 %v1574, %v1574
  %1577 = vrot.lane.b32.xlu0 %v1575, 96
  %v1578 = vpop.permute.xlu0 %1577
  %v1580 = vsel %vm252, %v1578, 0
  %1582 = vmatpush.bf16.msra.mxu0 0
  %1583 = vmatpush.bf16.msra.mxu0 0
  %1584 = vmatpush.bf16.msra.mxu0 0
  %1585 = vmatpush.bf16.msra.mxu0 0
  %1586 = vmatpush.bf16.msra.mxu0 0
  %1587 = vmatpush.bf16.msra.mxu0 0
  %1588 = vmatpush.bf16.msra.mxu0 %v1456
  %1589 = vmatpush.bf16.msra.mxu0 %v1455
  %1590 = vmatmul.bf16.gmra.mxu0 %v1580
  %v1591 = vpop.f32.mrf.mxu0
  %v1592 = vadd.f32 0.0, %v1591
  %v1593 = vpop.f32.mrf.mxu0
  %1594 = vdwg.mxu0
  %v1595 = vadd.f32 %v1437, %v1592
  %v1596 = vxor.u32 %v1595, 2147483648
  %v1597 = vmul.f32 %v1596, 1.442695
  %v1598 = vpow.pop %v1597
  %v1599 = vadd.f32 %v1598, 1.0
  %v1600 = vrcp.pop %v1599
  %v1601 = vmul.f32 %v1599, %v1600
  %v1602 = vsub.f32 1.0, %v1601
  %v1603 = vmul.f32 %v1600, %v1602
  %v1604 = vadd.f32 %v1600, %v1603
  %vm1605 = vweird.f32 %v1599
  %vm1606 = vweird.f32 %v1600
  %vm1607 = vmor %vm1605, %vm1606
  %v1608 = vsel %vm1607, %v1600, %v1604
  %v1609 = vand.u32 2147483647, %v1599
  %vm1610 = vcmp.eq.f32.partialorder %v1609, 8.507059e+37
  %v1611 = vand.u32 %v1599, 2147483648
  %v1612 = vor.u32 1.1754944e-38, %v1611
  %v1613 = vsel %vm1610, %v1612, %v1608
  %v1614 = vmul.f32 1.0, %v1613
  %v1615 = vadd.f32 %v1592, %v1493
  %1617 = vrot.lane.b32.xlu0 %v1615, 64
  %v1618 = vpop.permute.xlu0 %1617
  %v1620 = vmul.f32 %v1614, %v1618
  %1622 = vrot.lane.b32.xlu0 %v1620, 64
  %v1623 = vpop.permute.xlu0 %1622
  %v1625 = vadd.f32 %v1437, %v1623
  %v1626 = vtanh.pop %v1625
  %v1627 = vsub.f32 1.0, %v1614
  %1629 = vrot.lane.b32.xlu0 %v1626, 96
  %v1630 = vpop.permute.xlu0 %1629
  %v1632 = vmul.f32 %v1627, %v1630
  %v1633 = vmul.f32 %v1614, %v1574
  %v1634 = vadd.f32 %v1632, %v1633
  %v1635 = vpack.c.bf16 %v1634, %v1634
  %1637 = vrot.lane.b32.xlu0 %v1635, 96
  %v1638 = vpop.permute.xlu0 %1637
  %v1640 = vsel %vm252, %v1638, 0
  %1642 = vmatpush.bf16.msra.mxu0 0
  %1643 = vmatpush.bf16.msra.mxu0 0
  %1644 = vmatpush.bf16.msra.mxu0 0
  %1645 = vmatpush.bf16.msra.mxu0 0
  %1646 = vmatpush.bf16.msra.mxu0 0
  %1647 = vmatpush.bf16.msra.mxu0 0
  %1648 = vmatpush.bf16.msra.mxu0 %v1456
  %1649 = vmatpush.bf16.msra.mxu0 %v1455
  %1650 = vmatmul.bf16.gmra.mxu0 %v1640
  %v1651 = vpop.f32.mrf.mxu0
  %v1652 = vadd.f32 0.0, %v1651
  %v1653 = vpop.f32.mrf.mxu0
  %1654 = vdwg.mxu0
  %v1655 = vadd.f32 %v1437, %v1652
  %v1656 = vxor.u32 %v1655, 2147483648
  %v1657 = vmul.f32 %v1656, 1.442695
  %v1658 = vpow.pop %v1657
  %v1659 = vadd.f32 %v1658, 1.0
  %v1660 = vrcp.pop %v1659
  %v1661 = vmul.f32 %v1659, %v1660
  %v1662 = vsub.f32 1.0, %v1661
  %v1663 = vmul.f32 %v1660, %v1662
  %v1664 = vadd.f32 %v1660, %v1663
  %vm1665 = vweird.f32 %v1659
  %vm1666 = vweird.f32 %v1660
  %vm1667 = vmor %vm1665, %vm1666
  %v1668 = vsel %vm1667, %v1660, %v1664
  %v1669 = vand.u32 2147483647, %v1659
  %vm1670 = vcmp.eq.f32.partialorder %v1669, 8.507059e+37
  %v1671 = vand.u32 %v1659, 2147483648
  %v1672 = vor.u32 1.1754944e-38, %v1671
  %v1673 = vsel %vm1670, %v1672, %v1668
  %v1674 = vmul.f32 1.0, %v1673
  %v1675 = vadd.f32 %v1652, %v1493
  %1677 = vrot.lane.b32.xlu0 %v1675, 64
  %v1678 = vpop.permute.xlu0 %1677
  %v1680 = vmul.f32 %v1674, %v1678
  %1682 = vrot.lane.b32.xlu0 %v1680, 64
  %v1683 = vpop.permute.xlu0 %1682
  %v1685 = vadd.f32 %v1437, %v1683
  %v1686 = vtanh.pop %v1685
  %v1687 = vsub.f32 1.0, %v1674
  %1689 = vrot.lane.b32.xlu0 %v1686, 96
  %v1690 = vpop.permute.xlu0 %1689
  %v1692 = vmul.f32 %v1687, %v1690
  %v1693 = vmul.f32 %v1674, %v1634
  %v1694 = vadd.f32 %v1692, %v1693
  %v1695 = vpack.c.bf16 %v1694, %v1694
  %1697 = vrot.lane.b32.xlu0 %v1695, 96
  %v1698 = vpop.permute.xlu0 %1697
  %v1700 = vsel %vm252, %v1698, 0
  %1702 = vmatpush.bf16.msra.mxu0 0
  %1703 = vmatpush.bf16.msra.mxu0 0
  %1704 = vmatpush.bf16.msra.mxu0 0
  %1705 = vmatpush.bf16.msra.mxu0 0
  %1706 = vmatpush.bf16.msra.mxu0 0
  %1707 = vmatpush.bf16.msra.mxu0 0
  %1708 = vmatpush.bf16.msra.mxu0 %v1456
  %1709 = vmatpush.bf16.msra.mxu0 %v1455
  %1710 = vmatmul.bf16.gmra.mxu0 %v1700
  %v1711 = vpop.f32.mrf.mxu0
  %v1712 = vadd.f32 0.0, %v1711
  %v1713 = vpop.f32.mrf.mxu0
  %1714 = vdwg.mxu0
  %v1715 = vadd.f32 %v1437, %v1712
  %v1716 = vxor.u32 %v1715, 2147483648
  %v1717 = vmul.f32 %v1716, 1.442695
  %v1718 = vpow.pop %v1717
  %v1719 = vadd.f32 %v1718, 1.0
  %v1720 = vrcp.pop %v1719
  %v1721 = vmul.f32 %v1719, %v1720
  %v1722 = vsub.f32 1.0, %v1721
  %v1723 = vmul.f32 %v1720, %v1722
  %v1724 = vadd.f32 %v1720, %v1723
  %vm1725 = vweird.f32 %v1719
  %vm1726 = vweird.f32 %v1720
  %vm1727 = vmor %vm1725, %vm1726
  %v1728 = vsel %vm1727, %v1720, %v1724
  %v1729 = vand.u32 2147483647, %v1719
  %vm1730 = vcmp.eq.f32.partialorder %v1729, 8.507059e+37
  %v1731 = vand.u32 %v1719, 2147483648
  %v1732 = vor.u32 1.1754944e-38, %v1731
  %v1733 = vsel %vm1730, %v1732, %v1728
  %v1734 = vmul.f32 1.0, %v1733
  %v1735 = vadd.f32 %v1712, %v1493
  %1737 = vrot.lane.b32.xlu0 %v1735, 64
  %v1738 = vpop.permute.xlu0 %1737
  %v1740 = vmul.f32 %v1734, %v1738
  %1742 = vrot.lane.b32.xlu0 %v1740, 64
  %v1743 = vpop.permute.xlu0 %1742
  %v1745 = vadd.f32 %v1437, %v1743
  %v1746 = vtanh.pop %v1745
  %v1747 = vsub.f32 1.0, %v1734
  %1749 = vrot.lane.b32.xlu0 %v1746, 96
  %v1750 = vpop.permute.xlu0 %1749
  %v1752 = vmul.f32 %v1747, %v1750
  %v1753 = vmul.f32 %v1734, %v1694
  %v1754 = vadd.f32 %v1752, %v1753
  %v1755 = vpack.c.bf16 %v1754, %v1754
  %1757 = vrot.lane.b32.xlu0 %v1755, 96
  %v1758 = vpop.permute.xlu0 %1757
  %v1760 = vsel %vm252, %v1758, 0
  %1762 = vmatpush.bf16.msra.mxu0 0
  %1763 = vmatpush.bf16.msra.mxu0 0
  %1764 = vmatpush.bf16.msra.mxu0 0
  %1765 = vmatpush.bf16.msra.mxu0 0
  %1766 = vmatpush.bf16.msra.mxu0 0
  %1767 = vmatpush.bf16.msra.mxu0 0
  %1768 = vmatpush.bf16.msra.mxu0 %v1456
  %1769 = vmatpush.bf16.msra.mxu0 %v1455
  %1770 = vmatmul.bf16.gmra.mxu0 %v1760
  %v1771 = vpop.f32.mrf.mxu0
  %v1772 = vadd.f32 0.0, %v1771
  %v1773 = vpop.f32.mrf.mxu0
  %1774 = vdwg.mxu0
  %v1775 = vadd.f32 %v1437, %v1772
  %v1776 = vxor.u32 %v1775, 2147483648
  %v1777 = vmul.f32 %v1776, 1.442695
  %v1778 = vpow.pop %v1777
  %v1779 = vadd.f32 %v1778, 1.0
  %v1780 = vrcp.pop %v1779
  %v1781 = vmul.f32 %v1779, %v1780
  %v1782 = vsub.f32 1.0, %v1781
  %v1783 = vmul.f32 %v1780, %v1782
  %v1784 = vadd.f32 %v1780, %v1783
  %vm1785 = vweird.f32 %v1779
  %vm1786 = vweird.f32 %v1780
  %vm1787 = vmor %vm1785, %vm1786
  %v1788 = vsel %vm1787, %v1780, %v1784
  %v1789 = vand.u32 2147483647, %v1779
  %vm1790 = vcmp.eq.f32.partialorder %v1789, 8.507059e+37
  %v1791 = vand.u32 %v1779, 2147483648
  %v1792 = vor.u32 1.1754944e-38, %v1791
  %v1793 = vsel %vm1790, %v1792, %v1788
  %v1794 = vmul.f32 1.0, %v1793
  %v1795 = vadd.f32 %v1772, %v1493
  %1797 = vrot.lane.b32.xlu0 %v1795, 64
  %v1798 = vpop.permute.xlu0 %1797
  %v1800 = vmul.f32 %v1794, %v1798
  %1802 = vrot.lane.b32.xlu0 %v1800, 64
  %v1803 = vpop.permute.xlu0 %1802
  %v1805 = vadd.f32 %v1437, %v1803
  %v1806 = vtanh.pop %v1805
  %v1807 = vsub.f32 1.0, %v1794
  %1809 = vrot.lane.b32.xlu0 %v1806, 96
  %v1810 = vpop.permute.xlu0 %1809
  %v1812 = vmul.f32 %v1807, %v1810
  %v1813 = vmul.f32 %v1794, %v1754
  %v1814 = vadd.f32 %v1812, %v1813
  %v1815 = vpack.c.bf16 %v1814, %v1814
  %1817 = vrot.lane.b32.xlu0 %v1815, 96
  %v1818 = vpop.permute.xlu0 %1817
  %v1820 = vsel %vm252, %v1818, 0
  %1822 = vmatpush.bf16.msra.mxu0 0
  %1823 = vmatpush.bf16.msra.mxu0 0
  %1824 = vmatpush.bf16.msra.mxu0 0
  %1825 = vmatpush.bf16.msra.mxu0 0
  %1826 = vmatpush.bf16.msra.mxu0 0
  %1827 = vmatpush.bf16.msra.mxu0 0
  %1828 = vmatpush.bf16.msra.mxu0 %v1456
  %1829 = vmatpush.bf16.msra.mxu0 %v1455
  %1830 = vmatmul.bf16.gmra.mxu0 %v1820
  %v1831 = vpop.f32.mrf.mxu0
  %v1832 = vadd.f32 0.0, %v1831
  %v1833 = vpop.f32.mrf.mxu0
  %1834 = vdwg.mxu0
  %v1835 = vadd.f32 %v1437, %v1832
  %v1836 = vxor.u32 %v1835, 2147483648
  %v1837 = vmul.f32 %v1836, 1.442695
  %v1838 = vpow.pop %v1837
  %v1839 = vadd.f32 %v1838, 1.0
  %v1840 = vrcp.pop %v1839
  %v1841 = vmul.f32 %v1839, %v1840
  %v1842 = vsub.f32 1.0, %v1841
  %v1843 = vmul.f32 %v1840, %v1842
  %v1844 = vadd.f32 %v1840, %v1843
  %vm1845 = vweird.f32 %v1839
  %vm1846 = vweird.f32 %v1840
  %vm1847 = vmor %vm1845, %vm1846
  %v1848 = vsel %vm1847, %v1840, %v1844
  %v1849 = vand.u32 2147483647, %v1839
  %vm1850 = vcmp.eq.f32.partialorder %v1849, 8.507059e+37
  %v1851 = vand.u32 %v1839, 2147483648
  %v1852 = vor.u32 1.1754944e-38, %v1851
  %v1853 = vsel %vm1850, %v1852, %v1848
  %v1854 = vmul.f32 1.0, %v1853
  %v1855 = vadd.f32 %v1832, %v1493
  %1857 = vrot.lane.b32.xlu0 %v1855, 64
  %v1858 = vpop.permute.xlu0 %1857
  %v1860 = vmul.f32 %v1854, %v1858
  %1862 = vrot.lane.b32.xlu0 %v1860, 64
  %v1863 = vpop.permute.xlu0 %1862
  %v1865 = vadd.f32 %v1437, %v1863
  %v1866 = vtanh.pop %v1865
  %v1867 = vsub.f32 1.0, %v1854
  %1869 = vrot.lane.b32.xlu0 %v1866, 96
  %v1870 = vpop.permute.xlu0 %1869
  %v1872 = vmul.f32 %v1867, %v1870
  %v1873 = vmul.f32 %v1854, %v1814
  %v1874 = vadd.f32 %v1872, %v1873
  %v1875 = vpack.c.bf16 %v1874, %v1874
  %1877 = vrot.lane.b32.xlu0 %v1875, 96
  %v1878 = vpop.permute.xlu0 %1877
  %v1880 = vsel %vm252, %v1878, 0
  %1882 = vmatpush.bf16.msra.mxu0 0
  %1883 = vmatpush.bf16.msra.mxu0 0
  %1884 = vmatpush.bf16.msra.mxu0 0
  %1885 = vmatpush.bf16.msra.mxu0 0
  %1886 = vmatpush.bf16.msra.mxu0 0
  %1887 = vmatpush.bf16.msra.mxu0 0
  %1888 = vmatpush.bf16.msra.mxu0 %v1456
  %1889 = vmatpush.bf16.msra.mxu0 %v1455
  %1890 = vmatmul.bf16.gmra.mxu0 %v1880
  %v1891 = vpop.f32.mrf.mxu0
  %v1892 = vadd.f32 0.0, %v1891
  %v1893 = vpop.f32.mrf.mxu0
  %1894 = vdwg.mxu0
  %v1895 = vadd.f32 %v1437, %v1892
  %v1896 = vxor.u32 %v1895, 2147483648
  %v1897 = vmul.f32 %v1896, 1.442695
  %v1898 = vpow.pop %v1897
  %v1899 = vadd.f32 %v1898, 1.0
  %v1900 = vrcp.pop %v1899
  %v1901 = vmul.f32 %v1899, %v1900
  %v1902 = vsub.f32 1.0, %v1901
  %v1903 = vmul.f32 %v1900, %v1902
  %v1904 = vadd.f32 %v1900, %v1903
  %vm1905 = vweird.f32 %v1899
  %vm1906 = vweird.f32 %v1900
  %vm1907 = vmor %vm1905, %vm1906
  %v1908 = vsel %vm1907, %v1900, %v1904
  %v1909 = vand.u32 2147483647, %v1899
  %vm1910 = vcmp.eq.f32.partialorder %v1909, 8.507059e+37
  %v1911 = vand.u32 %v1899, 2147483648
  %v1912 = vor.u32 1.1754944e-38, %v1911
  %v1913 = vsel %vm1910, %v1912, %v1908
  %v1914 = vmul.f32 1.0, %v1913
  %v1915 = vadd.f32 %v1892, %v1493
  %1917 = vrot.lane.b32.xlu0 %v1915, 64
  %v1918 = vpop.permute.xlu0 %1917
  %v1920 = vmul.f32 %v1914, %v1918
  %1922 = vrot.lane.b32.xlu0 %v1920, 64
  %v1923 = vpop.permute.xlu0 %1922
  %v1925 = vadd.f32 %v1437, %v1923
  %v1926 = vtanh.pop %v1925
  %v1927 = vsub.f32 1.0, %v1914
  %1929 = vrot.lane.b32.xlu0 %v1926, 96
  %v1930 = vpop.permute.xlu0 %1929
  %v1932 = vmul.f32 %v1927, %v1930
  %v1933 = vmul.f32 %v1914, %v1874
  %v1934 = vadd.f32 %v1932, %v1933
  %v1935 = vld [vmem:[%s16] sm:$0xf]
  %v1936 = vld [vmem:[%s16 + $0x4] sm:$0xf]
  %v1937 = vld [vmem:[%s16 + $0x8] sm:$0xf]
  %v1938 = vld [vmem:[%s16 + $0xc] sm:$0xf]
  %v1939 = vld [vmem:[%s18] sm:$0x1]
  %v1941 = vperm.slane %v1939, 0
  %v1947 = vunpack.c.l.b16 %v1935
  %v1948 = vunpack.c.l.b16 %v1936
  %v1949 = vunpack.c.l.b16 %v1937
  %v1950 = vunpack.c.l.b16 %v1938
  %v1951 = vpack.c.b16 %v1948, %v1947
  %v1952 = vpack.c.b16 %v1950, %v1949
  %1955 = vmatpush.bf16.msra.mxu0 0
  %1956 = vmatpush.bf16.msra.mxu0 0
  %1957 = vmatpush.bf16.msra.mxu0 0
  %1958 = vmatpush.bf16.msra.mxu0 0
  %1959 = vmatpush.bf16.msra.mxu0 0
  %1960 = vmatpush.bf16.msra.mxu0 0
  %1961 = vmatpush.bf16.msra.mxu0 %v1952
  %1962 = vmatpush.bf16.msra.mxu0 %v1951
  %1963 = vmatmul.bf16.gmra.mxu0 %v1520
  %v1964 = vpop.f32.mrf.mxu0
  %v1965 = vadd.f32 %v1941, %v1964
  %v1966 = vpop.f32.mrf.mxu0
  %1967 = vdwg.mxu0
  %1968 = vmatpush.bf16.msra.mxu0 0
  %1969 = vmatpush.bf16.msra.mxu0 0
  %1970 = vmatpush.bf16.msra.mxu0 0
  %1971 = vmatpush.bf16.msra.mxu0 0
  %1972 = vmatpush.bf16.msra.mxu0 0
  %1973 = vmatpush.bf16.msra.mxu0 0
  %1974 = vmatpush.bf16.msra.mxu0 %v1952
  %1975 = vmatpush.bf16.msra.mxu0 %v1951
  %1976 = vmatmul.bf16.gmra.mxu0 %v1580
  %v1977 = vpop.f32.mrf.mxu0
  %v1978 = vadd.f32 %v1941, %v1977
  %v1979 = vpop.f32.mrf.mxu0
  %1980 = vdwg.mxu0
  %1981 = vmatpush.bf16.msra.mxu0 0
  %1982 = vmatpush.bf16.msra.mxu0 0
  %1983 = vmatpush.bf16.msra.mxu0 0
  %1984 = vmatpush.bf16.msra.mxu0 0
  %1985 = vmatpush.bf16.msra.mxu0 0
  %1986 = vmatpush.bf16.msra.mxu0 0
  %1987 = vmatpush.bf16.msra.mxu0 %v1952
  %1988 = vmatpush.bf16.msra.mxu0 %v1951
  %1989 = vmatmul.bf16.gmra.mxu0 %v1640
  %v1990 = vpop.f32.mrf.mxu0
  %v1991 = vadd.f32 %v1941, %v1990
  %v1992 = vpop.f32.mrf.mxu0
  %1993 = vdwg.mxu0
  %1994 = vmatpush.bf16.msra.mxu0 0
  %1995 = vmatpush.bf16.msra.mxu0 0
  %1996 = vmatpush.bf16.msra.mxu0 0
  %1997 = vmatpush.bf16.msra.mxu0 0
  %1998 = vmatpush.bf16.msra.mxu0 0
  %1999 = vmatpush.bf16.msra.mxu0 0
  %2000 = vmatpush.bf16.msra.mxu0 %v1952
  %2001 = vmatpush.bf16.msra.mxu0 %v1951
  %2002 = vmatmul.bf16.gmra.mxu0 %v1700
  %v2003 = vpop.f32.mrf.mxu0
  %v2004 = vadd.f32 %v1941, %v2003
  %v2005 = vpop.f32.mrf.mxu0
  %2006 = vdwg.mxu0
  %2007 = vmatpush.bf16.msra.mxu0 0
  %2008 = vmatpush.bf16.msra.mxu0 0
  %2009 = vmatpush.bf16.msra.mxu0 0
  %2010 = vmatpush.bf16.msra.mxu0 0
  %2011 = vmatpush.bf16.msra.mxu0 0
  %2012 = vmatpush.bf16.msra.mxu0 0
  %2013 = vmatpush.bf16.msra.mxu0 %v1952
  %2014 = vmatpush.bf16.msra.mxu0 %v1951
  %2015 = vmatmul.bf16.gmra.mxu0 %v1760
  %v2016 = vpop.f32.mrf.mxu0
  %v2017 = vadd.f32 %v1941, %v2016
  %v2018 = vpop.f32.mrf.mxu0
  %2019 = vdwg.mxu0
  %2020 = vmatpush.bf16.msra.mxu0 0
  %2021 = vmatpush.bf16.msra.mxu0 0
  %2022 = vmatpush.bf16.msra.mxu0 0
  %2023 = vmatpush.bf16.msra.mxu0 0
  %2024 = vmatpush.bf16.msra.mxu0 0
  %2025 = vmatpush.bf16.msra.mxu0 0
  %2026 = vmatpush.bf16.msra.mxu0 %v1952
  %2027 = vmatpush.bf16.msra.mxu0 %v1951
  %2028 = vmatmul.bf16.gmra.mxu0 %v1820
  %v2029 = vpop.f32.mrf.mxu0
  %v2030 = vadd.f32 %v1941, %v2029
  %v2031 = vpop.f32.mrf.mxu0
  %2032 = vdwg.mxu0
  %2033 = vmatpush.bf16.msra.mxu0 0
  %2034 = vmatpush.bf16.msra.mxu0 0
  %2035 = vmatpush.bf16.msra.mxu0 0
  %2036 = vmatpush.bf16.msra.mxu0 0
  %2037 = vmatpush.bf16.msra.mxu0 0
  %2038 = vmatpush.bf16.msra.mxu0 0
  %2039 = vmatpush.bf16.msra.mxu0 %v1952
  %2040 = vmatpush.bf16.msra.mxu0 %v1951
  %2041 = vmatmul.bf16.gmra.mxu0 %v1880
  %v2042 = vpop.f32.mrf.mxu0
  %v2043 = vadd.f32 %v1941, %v2042
  %v2044 = vpop.f32.mrf.mxu0
  %2045 = vdwg.mxu0
  %v2046 = vpack.c.bf16 %v1934, %v1934
  %2048 = vrot.lane.b32.xlu0 %v2046, 96
  %v2049 = vpop.permute.xlu0 %2048
  %v2051 = vsel %vm252, %v2049, 0
  %2053 = vmatpush.bf16.msra.mxu0 0
  %2054 = vmatpush.bf16.msra.mxu0 0
  %2055 = vmatpush.bf16.msra.mxu0 0
  %2056 = vmatpush.bf16.msra.mxu0 0
  %2057 = vmatpush.bf16.msra.mxu0 0
  %2058 = vmatpush.bf16.msra.mxu0 0
  %2059 = vmatpush.bf16.msra.mxu0 %v1952
  %2060 = vmatpush.bf16.msra.mxu0 %v1951
  %2061 = vmatmul.bf16.gmra.mxu0 %v2051
  %v2062 = vpop.f32.mrf.mxu0
  %v2063 = vadd.f32 %v1941, %v2062
  %v2064 = vpop.f32.mrf.mxu0
  %2065 = vdwg.mxu0
  %v2066 = vld [vmem:[%s17] sm:$0xf]
  %v2067 = vld [vmem:[%s17 + $0x4] sm:$0xf]
  %v2068 = vld [vmem:[%s17 + $0x8] sm:$0xf]
  %v2069 = vld [vmem:[%s17 + $0xc] sm:$0xf]
  %v2070 = vld [vmem:[%s19] sm:$0x1]
  %v2072 = vperm.slane %v2070, 0
  %v2077 = vunpack.c.l.b16 %v2066
  %v2078 = vunpack.c.l.b16 %v2067
  %v2079 = vunpack.c.l.b16 %v2068
  %v2080 = vunpack.c.l.b16 %v2069
  %v2081 = vpack.c.b16 %v2078, %v2077
  %v2082 = vpack.c.b16 %v2080, %v2079
  %2085 = vmatpush.bf16.msra.mxu0 0
  %2086 = vmatpush.bf16.msra.mxu0 0
  %2087 = vmatpush.bf16.msra.mxu0 0
  %2088 = vmatpush.bf16.msra.mxu0 0
  %2089 = vmatpush.bf16.msra.mxu0 0
  %2090 = vmatpush.bf16.msra.mxu0 0
  %2091 = vmatpush.bf16.msra.mxu0 %v2082
  %2092 = vmatpush.bf16.msra.mxu0 %v2081
  %2093 = vmatmul.bf16.gmra.mxu0 %v254
  %v2094 = vpop.f32.mrf.mxu0
  %v2095 = vadd.f32 0.0, %v2094
  %v2096 = vpop.f32.mrf.mxu0
  %2097 = vdwg.mxu0
  %v2098 = vadd.f32 %v1965, %v2095
  %v2099 = vxor.u32 %v2098, 2147483648
  %v2100 = vmul.f32 %v2099, 1.442695
  %v2101 = vpow.pop %v2100
  %v2102 = vadd.f32 %v2101, 1.0
  %v2103 = vrcp.pop %v2102
  %v2104 = vmul.f32 %v2102, %v2103
  %v2105 = vsub.f32 1.0, %v2104
  %v2106 = vmul.f32 %v2103, %v2105
  %v2107 = vadd.f32 %v2103, %v2106
  %vm2108 = vweird.f32 %v2102
  %vm2109 = vweird.f32 %v2103
  %vm2110 = vmor %vm2108, %vm2109
  %v2111 = vsel %vm2110, %v2103, %v2107
  %v2112 = vand.u32 2147483647, %v2102
  %vm2113 = vcmp.eq.f32.partialorder %v2112, 8.507059e+37
  %v2114 = vand.u32 %v2102, 2147483648
  %v2115 = vor.u32 1.1754944e-38, %v2114
  %v2116 = vsel %vm2113, %v2115, %v2111
  %v2117 = vmul.f32 1.0, %v2116
  %2118 = vrot.lane.b32.xlu0 %v2072, 64
  %v2119 = vpop.permute.xlu0 %2118
  %v2121 = vadd.f32 %v2095, %v2119
  %2123 = vrot.lane.b32.xlu0 %v2121, 64
  %v2124 = vpop.permute.xlu0 %2123
  %v2126 = vmul.f32 %v2117, %v2124
  %2128 = vrot.lane.b32.xlu0 %v2126, 64
  %v2129 = vpop.permute.xlu0 %2128
  %v2131 = vadd.f32 %v1965, %v2129
  %v2132 = vtanh.pop %v2131
  %v2133 = vsub.f32 1.0, %v2117
  %2135 = vrot.lane.b32.xlu0 %v2132, 96
  %v2136 = vpop.permute.xlu0 %2135
  %v2138 = vmul.f32 %v2133, %v2136
  %v2139 = vmul.f32 %v2117, 0.0
  %v2140 = vadd.f32 %v2138, %v2139
  %v2141 = vpack.c.bf16 %v2140, %v2140
  %2143 = vrot.lane.b32.xlu0 %v2141, 96
  %v2144 = vpop.permute.xlu0 %2143
  %v2146 = vsel %vm252, %v2144, 0
  %2148 = vmatpush.bf16.msra.mxu0 0
  %2149 = vmatpush.bf16.msra.mxu0 0
  %2150 = vmatpush.bf16.msra.mxu0 0
  %2151 = vmatpush.bf16.msra.mxu0 0
  %2152 = vmatpush.bf16.msra.mxu0 0
  %2153 = vmatpush.bf16.msra.mxu0 0
  %2154 = vmatpush.bf16.msra.mxu0 %v2082
  %2155 = vmatpush.bf16.msra.mxu0 %v2081
  %2156 = vmatmul.bf16.gmra.mxu0 %v2146
  %v2157 = vpop.f32.mrf.mxu0
  %v2158 = vadd.f32 0.0, %v2157
  %v2159 = vpop.f32.mrf.mxu0
  %2160 = vdwg.mxu0
  %v2161 = vadd.f32 %v1978, %v2158
  %v2162 = vxor.u32 %v2161, 2147483648
  %v2163 = vmul.f32 %v2162, 1.442695
  %v2164 = vpow.pop %v2163
  %v2165 = vadd.f32 %v2164, 1.0
  %v2166 = vrcp.pop %v2165
  %v2167 = vmul.f32 %v2165, %v2166
  %v2168 = vsub.f32 1.0, %v2167
  %v2169 = vmul.f32 %v2166, %v2168
  %v2170 = vadd.f32 %v2166, %v2169
  %vm2171 = vweird.f32 %v2165
  %vm2172 = vweird.f32 %v2166
  %vm2173 = vmor %vm2171, %vm2172
  %v2174 = vsel %vm2173, %v2166, %v2170
  %v2175 = vand.u32 2147483647, %v2165
  %vm2176 = vcmp.eq.f32.partialorder %v2175, 8.507059e+37
  %v2177 = vand.u32 %v2165, 2147483648
  %v2178 = vor.u32 1.1754944e-38, %v2177
  %v2179 = vsel %vm2176, %v2178, %v2174
  %v2180 = vmul.f32 1.0, %v2179
  %v2181 = vadd.f32 %v2158, %v2119
  %2183 = vrot.lane.b32.xlu0 %v2181, 64
  %v2184 = vpop.permute.xlu0 %2183
  %v2186 = vmul.f32 %v2180, %v2184
  %2188 = vrot.lane.b32.xlu0 %v2186, 64
  %v2189 = vpop.permute.xlu0 %2188
  %v2191 = vadd.f32 %v1978, %v2189
  %v2192 = vtanh.pop %v2191
  %v2193 = vsub.f32 1.0, %v2180
  %2195 = vrot.lane.b32.xlu0 %v2192, 96
  %v2196 = vpop.permute.xlu0 %2195
  %v2198 = vmul.f32 %v2193, %v2196
  %v2199 = vmul.f32 %v2180, %v2140
  %v2200 = vadd.f32 %v2198, %v2199
  %v2201 = vpack.c.bf16 %v2200, %v2200
  %2203 = vrot.lane.b32.xlu0 %v2201, 96
  %v2204 = vpop.permute.xlu0 %2203
  %v2206 = vsel %vm252, %v2204, 0
  %2208 = vmatpush.bf16.msra.mxu0 0
  %2209 = vmatpush.bf16.msra.mxu0 0
  %2210 = vmatpush.bf16.msra.mxu0 0
  %2211 = vmatpush.bf16.msra.mxu0 0
  %2212 = vmatpush.bf16.msra.mxu0 0
  %2213 = vmatpush.bf16.msra.mxu0 0
  %2214 = vmatpush.bf16.msra.mxu0 %v2082
  %2215 = vmatpush.bf16.msra.mxu0 %v2081
  %2216 = vmatmul.bf16.gmra.mxu0 %v2206
  %v2217 = vpop.f32.mrf.mxu0
  %v2218 = vadd.f32 0.0, %v2217
  %v2219 = vpop.f32.mrf.mxu0
  %2220 = vdwg.mxu0
  %v2221 = vadd.f32 %v1991, %v2218
  %v2222 = vxor.u32 %v2221, 2147483648
  %v2223 = vmul.f32 %v2222, 1.442695
  %v2224 = vpow.pop %v2223
  %v2225 = vadd.f32 %v2224, 1.0
  %v2226 = vrcp.pop %v2225
  %v2227 = vmul.f32 %v2225, %v2226
  %v2228 = vsub.f32 1.0, %v2227
  %v2229 = vmul.f32 %v2226, %v2228
  %v2230 = vadd.f32 %v2226, %v2229
  %vm2231 = vweird.f32 %v2225
  %vm2232 = vweird.f32 %v2226
  %vm2233 = vmor %vm2231, %vm2232
  %v2234 = vsel %vm2233, %v2226, %v2230
  %v2235 = vand.u32 2147483647, %v2225
  %vm2236 = vcmp.eq.f32.partialorder %v2235, 8.507059e+37
  %v2237 = vand.u32 %v2225, 2147483648
  %v2238 = vor.u32 1.1754944e-38, %v2237
  %v2239 = vsel %vm2236, %v2238, %v2234
  %v2240 = vmul.f32 1.0, %v2239
  %v2241 = vadd.f32 %v2218, %v2119
  %2243 = vrot.lane.b32.xlu0 %v2241, 64
  %v2244 = vpop.permute.xlu0 %2243
  %v2246 = vmul.f32 %v2240, %v2244
  %2248 = vrot.lane.b32.xlu0 %v2246, 64
  %v2249 = vpop.permute.xlu0 %2248
  %v2251 = vadd.f32 %v1991, %v2249
  %v2252 = vtanh.pop %v2251
  %v2253 = vsub.f32 1.0, %v2240
  %2255 = vrot.lane.b32.xlu0 %v2252, 96
  %v2256 = vpop.permute.xlu0 %2255
  %v2258 = vmul.f32 %v2253, %v2256
  %v2259 = vmul.f32 %v2240, %v2200
  %v2260 = vadd.f32 %v2258, %v2259
  %v2261 = vpack.c.bf16 %v2260, %v2260
  %2263 = vrot.lane.b32.xlu0 %v2261, 96
  %v2264 = vpop.permute.xlu0 %2263
  %v2266 = vsel %vm252, %v2264, 0
  %2268 = vmatpush.bf16.msra.mxu0 0
  %2269 = vmatpush.bf16.msra.mxu0 0
  %2270 = vmatpush.bf16.msra.mxu0 0
  %2271 = vmatpush.bf16.msra.mxu0 0
  %2272 = vmatpush.bf16.msra.mxu0 0
  %2273 = vmatpush.bf16.msra.mxu0 0
  %2274 = vmatpush.bf16.msra.mxu0 %v2082
  %2275 = vmatpush.bf16.msra.mxu0 %v2081
  %2276 = vmatmul.bf16.gmra.mxu0 %v2266
  %v2277 = vpop.f32.mrf.mxu0
  %v2278 = vadd.f32 0.0, %v2277
  %v2279 = vpop.f32.mrf.mxu0
  %2280 = vdwg.mxu0
  %v2281 = vadd.f32 %v2004, %v2278
  %v2282 = vxor.u32 %v2281, 2147483648
  %v2283 = vmul.f32 %v2282, 1.442695
  %v2284 = vpow.pop %v2283
  %v2285 = vadd.f32 %v2284, 1.0
  %v2286 = vrcp.pop %v2285
  %v2287 = vmul.f32 %v2285, %v2286
  %v2288 = vsub.f32 1.0, %v2287
  %v2289 = vmul.f32 %v2286, %v2288
  %v2290 = vadd.f32 %v2286, %v2289
  %vm2291 = vweird.f32 %v2285
  %vm2292 = vweird.f32 %v2286
  %vm2293 = vmor %vm2291, %vm2292
  %v2294 = vsel %vm2293, %v2286, %v2290
  %v2295 = vand.u32 2147483647, %v2285
  %vm2296 = vcmp.eq.f32.partialorder %v2295, 8.507059e+37
  %v2297 = vand.u32 %v2285, 2147483648
  %v2298 = vor.u32 1.1754944e-38, %v2297
  %v2299 = vsel %vm2296, %v2298, %v2294
  %v2300 = vmul.f32 1.0, %v2299
  %v2301 = vadd.f32 %v2278, %v2119
  %2303 = vrot.lane.b32.xlu0 %v2301, 64
  %v2304 = vpop.permute.xlu0 %2303
  %v2306 = vmul.f32 %v2300, %v2304
  %2308 = vrot.lane.b32.xlu0 %v2306, 64
  %v2309 = vpop.permute.xlu0 %2308
  %v2311 = vadd.f32 %v2004, %v2309
  %v2312 = vtanh.pop %v2311
  %v2313 = vsub.f32 1.0, %v2300
  %2315 = vrot.lane.b32.xlu0 %v2312, 96
  %v2316 = vpop.permute.xlu0 %2315
  %v2318 = vmul.f32 %v2313, %v2316
  %v2319 = vmul.f32 %v2300, %v2260
  %v2320 = vadd.f32 %v2318, %v2319
  %v2321 = vpack.c.bf16 %v2320, %v2320
  %2323 = vrot.lane.b32.xlu0 %v2321, 96
  %v2324 = vpop.permute.xlu0 %2323
  %v2326 = vsel %vm252, %v2324, 0
  %2328 = vmatpush.bf16.msra.mxu0 0
  %2329 = vmatpush.bf16.msra.mxu0 0
  %2330 = vmatpush.bf16.msra.mxu0 0
  %2331 = vmatpush.bf16.msra.mxu0 0
  %2332 = vmatpush.bf16.msra.mxu0 0
  %2333 = vmatpush.bf16.msra.mxu0 0
  %2334 = vmatpush.bf16.msra.mxu0 %v2082
  %2335 = vmatpush.bf16.msra.mxu0 %v2081
  %2336 = vmatmul.bf16.gmra.mxu0 %v2326
  %v2337 = vpop.f32.mrf.mxu0
  %v2338 = vadd.f32 0.0, %v2337
  %v2339 = vpop.f32.mrf.mxu0
  %2340 = vdwg.mxu0
  %v2341 = vadd.f32 %v2017, %v2338
  %v2342 = vxor.u32 %v2341, 2147483648
  %v2343 = vmul.f32 %v2342, 1.442695
  %v2344 = vpow.pop %v2343
  %v2345 = vadd.f32 %v2344, 1.0
  %v2346 = vrcp.pop %v2345
  %v2347 = vmul.f32 %v2345, %v2346
  %v2348 = vsub.f32 1.0, %v2347
  %v2349 = vmul.f32 %v2346, %v2348
  %v2350 = vadd.f32 %v2346, %v2349
  %vm2351 = vweird.f32 %v2345
  %vm2352 = vweird.f32 %v2346
  %vm2353 = vmor %vm2351, %vm2352
  %v2354 = vsel %vm2353, %v2346, %v2350
  %v2355 = vand.u32 2147483647, %v2345
  %vm2356 = vcmp.eq.f32.partialorder %v2355, 8.507059e+37
  %v2357 = vand.u32 %v2345, 2147483648
  %v2358 = vor.u32 1.1754944e-38, %v2357
  %v2359 = vsel %vm2356, %v2358, %v2354
  %v2360 = vmul.f32 1.0, %v2359
  %v2361 = vadd.f32 %v2338, %v2119
  %2363 = vrot.lane.b32.xlu0 %v2361, 64
  %v2364 = vpop.permute.xlu0 %2363
  %v2366 = vmul.f32 %v2360, %v2364
  %2368 = vrot.lane.b32.xlu0 %v2366, 64
  %v2369 = vpop.permute.xlu0 %2368
  %v2371 = vadd.f32 %v2017, %v2369
  %v2372 = vtanh.pop %v2371
  %v2373 = vsub.f32 1.0, %v2360
  %2375 = vrot.lane.b32.xlu0 %v2372, 96
  %v2376 = vpop.permute.xlu0 %2375
  %v2378 = vmul.f32 %v2373, %v2376
  %v2379 = vmul.f32 %v2360, %v2320
  %v2380 = vadd.f32 %v2378, %v2379
  %v2381 = vpack.c.bf16 %v2380, %v2380
  %2383 = vrot.lane.b32.xlu0 %v2381, 96
  %v2384 = vpop.permute.xlu0 %2383
  %v2386 = vsel %vm252, %v2384, 0
  %2388 = vmatpush.bf16.msra.mxu0 0
  %2389 = vmatpush.bf16.msra.mxu0 0
  %2390 = vmatpush.bf16.msra.mxu0 0
  %2391 = vmatpush.bf16.msra.mxu0 0
  %2392 = vmatpush.bf16.msra.mxu0 0
  %2393 = vmatpush.bf16.msra.mxu0 0
  %2394 = vmatpush.bf16.msra.mxu0 %v2082
  %2395 = vmatpush.bf16.msra.mxu0 %v2081
  %2396 = vmatmul.bf16.gmra.mxu0 %v2386
  %v2397 = vpop.f32.mrf.mxu0
  %v2398 = vadd.f32 0.0, %v2397
  %v2399 = vpop.f32.mrf.mxu0
  %2400 = vdwg.mxu0
  %v2401 = vadd.f32 %v2030, %v2398
  %v2402 = vxor.u32 %v2401, 2147483648
  %v2403 = vmul.f32 %v2402, 1.442695
  %v2404 = vpow.pop %v2403
  %v2405 = vadd.f32 %v2404, 1.0
  %v2406 = vrcp.pop %v2405
  %v2407 = vmul.f32 %v2405, %v2406
  %v2408 = vsub.f32 1.0, %v2407
  %v2409 = vmul.f32 %v2406, %v2408
  %v2410 = vadd.f32 %v2406, %v2409
  %vm2411 = vweird.f32 %v2405
  %vm2412 = vweird.f32 %v2406
  %vm2413 = vmor %vm2411, %vm2412
  %v2414 = vsel %vm2413, %v2406, %v2410
  %v2415 = vand.u32 2147483647, %v2405
  %vm2416 = vcmp.eq.f32.partialorder %v2415, 8.507059e+37
  %v2417 = vand.u32 %v2405, 2147483648
  %v2418 = vor.u32 1.1754944e-38, %v2417
  %v2419 = vsel %vm2416, %v2418, %v2414
  %v2420 = vmul.f32 1.0, %v2419
  %v2421 = vadd.f32 %v2398, %v2119
  %2423 = vrot.lane.b32.xlu0 %v2421, 64
  %v2424 = vpop.permute.xlu0 %2423
  %v2426 = vmul.f32 %v2420, %v2424
  %2428 = vrot.lane.b32.xlu0 %v2426, 64
  %v2429 = vpop.permute.xlu0 %2428
  %v2431 = vadd.f32 %v2030, %v2429
  %v2432 = vtanh.pop %v2431
  %v2433 = vsub.f32 1.0, %v2420
  %2435 = vrot.lane.b32.xlu0 %v2432, 96
  %v2436 = vpop.permute.xlu0 %2435
  %v2438 = vmul.f32 %v2433, %v2436
  %v2439 = vmul.f32 %v2420, %v2380
  %v2440 = vadd.f32 %v2438, %v2439
  %v2441 = vpack.c.bf16 %v2440, %v2440
  %2443 = vrot.lane.b32.xlu0 %v2441, 96
  %v2444 = vpop.permute.xlu0 %2443
  %v2446 = vsel %vm252, %v2444, 0
  %2448 = vmatpush.bf16.msra.mxu0 0
  %2449 = vmatpush.bf16.msra.mxu0 0
  %2450 = vmatpush.bf16.msra.mxu0 0
  %2451 = vmatpush.bf16.msra.mxu0 0
  %2452 = vmatpush.bf16.msra.mxu0 0
  %2453 = vmatpush.bf16.msra.mxu0 0
  %2454 = vmatpush.bf16.msra.mxu0 %v2082
  %2455 = vmatpush.bf16.msra.mxu0 %v2081
  %2456 = vmatmul.bf16.gmra.mxu0 %v2446
  %v2457 = vpop.f32.mrf.mxu0
  %v2458 = vadd.f32 0.0, %v2457
  %v2459 = vpop.f32.mrf.mxu0
  %2460 = vdwg.mxu0
  %v2461 = vadd.f32 %v2043, %v2458
  %v2462 = vxor.u32 %v2461, 2147483648
  %v2463 = vmul.f32 %v2462, 1.442695
  %v2464 = vpow.pop %v2463
  %v2465 = vadd.f32 %v2464, 1.0
  %v2466 = vrcp.pop %v2465
  %v2467 = vmul.f32 %v2465, %v2466
  %v2468 = vsub.f32 1.0, %v2467
  %v2469 = vmul.f32 %v2466, %v2468
  %v2470 = vadd.f32 %v2466, %v2469
  %vm2471 = vweird.f32 %v2465
  %vm2472 = vweird.f32 %v2466
  %vm2473 = vmor %vm2471, %vm2472
  %v2474 = vsel %vm2473, %v2466, %v2470
  %v2475 = vand.u32 2147483647, %v2465
  %vm2476 = vcmp.eq.f32.partialorder %v2475, 8.507059e+37
  %v2477 = vand.u32 %v2465, 2147483648
  %v2478 = vor.u32 1.1754944e-38, %v2477
  %v2479 = vsel %vm2476, %v2478, %v2474
  %v2480 = vmul.f32 1.0, %v2479
  %v2481 = vadd.f32 %v2458, %v2119
  %2483 = vrot.lane.b32.xlu0 %v2481, 64
  %v2484 = vpop.permute.xlu0 %2483
  %v2486 = vmul.f32 %v2480, %v2484
  %2488 = vrot.lane.b32.xlu0 %v2486, 64
  %v2489 = vpop.permute.xlu0 %2488
  %v2491 = vadd.f32 %v2043, %v2489
  %v2492 = vtanh.pop %v2491
  %v2493 = vsub.f32 1.0, %v2480
  %2495 = vrot.lane.b32.xlu0 %v2492, 96
  %v2496 = vpop.permute.xlu0 %2495
  %v2498 = vmul.f32 %v2493, %v2496
  %v2499 = vmul.f32 %v2480, %v2440
  %v2500 = vadd.f32 %v2498, %v2499
  %v2501 = vpack.c.bf16 %v2500, %v2500
  %2503 = vrot.lane.b32.xlu0 %v2501, 96
  %v2504 = vpop.permute.xlu0 %2503
  %v2506 = vsel %vm252, %v2504, 0
  %2508 = vmatpush.bf16.msra.mxu0 0
  %2509 = vmatpush.bf16.msra.mxu0 0
  %2510 = vmatpush.bf16.msra.mxu0 0
  %2511 = vmatpush.bf16.msra.mxu0 0
  %2512 = vmatpush.bf16.msra.mxu0 0
  %2513 = vmatpush.bf16.msra.mxu0 0
  %2514 = vmatpush.bf16.msra.mxu0 %v2082
  %2515 = vmatpush.bf16.msra.mxu0 %v2081
  %2516 = vmatmul.bf16.gmra.mxu0 %v2506
  %v2517 = vpop.f32.mrf.mxu0
  %v2518 = vadd.f32 0.0, %v2517
  %v2519 = vpop.f32.mrf.mxu0
  %2520 = vdwg.mxu0
  %v2521 = vadd.f32 %v2063, %v2518
  %v2522 = vxor.u32 %v2521, 2147483648
  %v2523 = vmul.f32 %v2522, 1.442695
  %v2524 = vpow.pop %v2523
  %v2525 = vadd.f32 %v2524, 1.0
  %v2526 = vrcp.pop %v2525
  %v2527 = vmul.f32 %v2525, %v2526
  %v2528 = vsub.f32 1.0, %v2527
  %v2529 = vmul.f32 %v2526, %v2528
  %v2530 = vadd.f32 %v2526, %v2529
  %vm2531 = vweird.f32 %v2525
  %vm2532 = vweird.f32 %v2526
  %vm2533 = vmor %vm2531, %vm2532
  %v2534 = vsel %vm2533, %v2526, %v2530
  %v2535 = vand.u32 2147483647, %v2525
  %vm2536 = vcmp.eq.f32.partialorder %v2535, 8.507059e+37
  %v2537 = vand.u32 %v2525, 2147483648
  %v2538 = vor.u32 1.1754944e-38, %v2537
  %v2539 = vsel %vm2536, %v2538, %v2534
  %v2540 = vmul.f32 1.0, %v2539
  %v2541 = vadd.f32 %v2518, %v2119
  %2543 = vrot.lane.b32.xlu0 %v2541, 64
  %v2544 = vpop.permute.xlu0 %2543
  %v2546 = vmul.f32 %v2540, %v2544
  %2548 = vrot.lane.b32.xlu0 %v2546, 64
  %v2549 = vpop.permute.xlu0 %2548
  %v2551 = vadd.f32 %v2063, %v2549
  %v2552 = vtanh.pop %v2551
  %v2553 = vsub.f32 1.0, %v2540
  %2555 = vrot.lane.b32.xlu0 %v2552, 96
  %v2556 = vpop.permute.xlu0 %2555
  %v2558 = vmul.f32 %v2553, %v2556
  %v2559 = vmul.f32 %v2540, %v2500
  %v2560 = vadd.f32 %v2558, %v2559
  %v2561 = vld [vmem:[%s20] sm:$0xf]
  %v2562 = vld [vmem:[%s20 + $0x4] sm:$0xf]
  %v2563 = vld [vmem:[%s20 + $0x8] sm:$0xf]
  %v2564 = vld [vmem:[%s20 + $0xc] sm:$0xf]
  %v2565 = vld [vmem:[%s21] sm:$0x1]
  %v2567 = vperm.slane %v2565, 0
  %v2573 = vunpack.c.l.b16 %v2561
  %v2574 = vunpack.c.l.b16 %v2562
  %v2575 = vunpack.c.l.b16 %v2563
  %v2576 = vunpack.c.l.b16 %v2564
  %v2577 = vpack.c.b16 %v2574, %v2573
  %v2578 = vpack.c.b16 %v2576, %v2575
  %2581 = vmatpush.bf16.msra.mxu0 0
  %2582 = vmatpush.bf16.msra.mxu0 0
  %2583 = vmatpush.bf16.msra.mxu0 0
  %2584 = vmatpush.bf16.msra.mxu0 0
  %2585 = vmatpush.bf16.msra.mxu0 0
  %2586 = vmatpush.bf16.msra.mxu0 0
  %2587 = vmatpush.bf16.msra.mxu0 %v2578
  %2588 = vmatpush.bf16.msra.mxu0 %v2577
  %2589 = vmatmul.bf16.gmra.mxu0 %v2146
  %v2590 = vpop.f32.mrf.mxu0
  %v2591 = vadd.f32 %v2567, %v2590
  %v2592 = vpop.f32.mrf.mxu0
  %2593 = vdwg.mxu0
  %2594 = vmatpush.bf16.msra.mxu0 0
  %2595 = vmatpush.bf16.msra.mxu0 0
  %2596 = vmatpush.bf16.msra.mxu0 0
  %2597 = vmatpush.bf16.msra.mxu0 0
  %2598 = vmatpush.bf16.msra.mxu0 0
  %2599 = vmatpush.bf16.msra.mxu0 0
  %2600 = vmatpush.bf16.msra.mxu0 %v2578
  %2601 = vmatpush.bf16.msra.mxu0 %v2577
  %2602 = vmatmul.bf16.gmra.mxu0 %v2206
  %v2603 = vpop.f32.mrf.mxu0
  %v2604 = vadd.f32 %v2567, %v2603
  %v2605 = vpop.f32.mrf.mxu0
  %2606 = vdwg.mxu0
  %2607 = vmatpush.bf16.msra.mxu0 0
  %2608 = vmatpush.bf16.msra.mxu0 0
  %2609 = vmatpush.bf16.msra.mxu0 0
  %2610 = vmatpush.bf16.msra.mxu0 0
  %2611 = vmatpush.bf16.msra.mxu0 0
  %2612 = vmatpush.bf16.msra.mxu0 0
  %2613 = vmatpush.bf16.msra.mxu0 %v2578
  %2614 = vmatpush.bf16.msra.mxu0 %v2577
  %2615 = vmatmul.bf16.gmra.mxu0 %v2266
  %v2616 = vpop.f32.mrf.mxu0
  %v2617 = vadd.f32 %v2567, %v2616
  %v2618 = vpop.f32.mrf.mxu0
  %2619 = vdwg.mxu0
  %2620 = vmatpush.bf16.msra.mxu0 0
  %2621 = vmatpush.bf16.msra.mxu0 0
  %2622 = vmatpush.bf16.msra.mxu0 0
  %2623 = vmatpush.bf16.msra.mxu0 0
  %2624 = vmatpush.bf16.msra.mxu0 0
  %2625 = vmatpush.bf16.msra.mxu0 0
  %2626 = vmatpush.bf16.msra.mxu0 %v2578
  %2627 = vmatpush.bf16.msra.mxu0 %v2577
  %2628 = vmatmul.bf16.gmra.mxu0 %v2326
  %v2629 = vpop.f32.mrf.mxu0
  %v2630 = vadd.f32 %v2567, %v2629
  %v2631 = vpop.f32.mrf.mxu0
  %2632 = vdwg.mxu0
  %2633 = vmatpush.bf16.msra.mxu0 0
  %2634 = vmatpush.bf16.msra.mxu0 0
  %2635 = vmatpush.bf16.msra.mxu0 0
  %2636 = vmatpush.bf16.msra.mxu0 0
  %2637 = vmatpush.bf16.msra.mxu0 0
  %2638 = vmatpush.bf16.msra.mxu0 0
  %2639 = vmatpush.bf16.msra.mxu0 %v2578
  %2640 = vmatpush.bf16.msra.mxu0 %v2577
  %2641 = vmatmul.bf16.gmra.mxu0 %v2386
  %v2642 = vpop.f32.mrf.mxu0
  %v2643 = vadd.f32 %v2567, %v2642
  %v2644 = vpop.f32.mrf.mxu0
  %2645 = vdwg.mxu0
  %2646 = vmatpush.bf16.msra.mxu0 0
  %2647 = vmatpush.bf16.msra.mxu0 0
  %2648 = vmatpush.bf16.msra.mxu0 0
  %2649 = vmatpush.bf16.msra.mxu0 0
  %2650 = vmatpush.bf16.msra.mxu0 0
  %2651 = vmatpush.bf16.msra.mxu0 0
  %2652 = vmatpush.bf16.msra.mxu0 %v2578
  %2653 = vmatpush.bf16.msra.mxu0 %v2577
  %2654 = vmatmul.bf16.gmra.mxu0 %v2446
  %v2655 = vpop.f32.mrf.mxu0
  %v2656 = vadd.f32 %v2567, %v2655
  %v2657 = vpop.f32.mrf.mxu0
  %2658 = vdwg.mxu0
  %2659 = vmatpush.bf16.msra.mxu0 0
  %2660 = vmatpush.bf16.msra.mxu0 0
  %2661 = vmatpush.bf16.msra.mxu0 0
  %2662 = vmatpush.bf16.msra.mxu0 0
  %2663 = vmatpush.bf16.msra.mxu0 0
  %2664 = vmatpush.bf16.msra.mxu0 0
  %2665 = vmatpush.bf16.msra.mxu0 %v2578
  %2666 = vmatpush.bf16.msra.mxu0 %v2577
  %2667 = vmatmul.bf16.gmra.mxu0 %v2506
  %v2668 = vpop.f32.mrf.mxu0
  %v2669 = vadd.f32 %v2567, %v2668
  %v2670 = vpop.f32.mrf.mxu0
  %2671 = vdwg.mxu0
  %v2672 = vpack.c.bf16 %v2560, %v2560
  %2674 = vrot.lane.b32.xlu0 %v2672, 96
  %v2675 = vpop.permute.xlu0 %2674
  %v2677 = vsel %vm252, %v2675, 0
  %2679 = vmatpush.bf16.msra.mxu0 0
  %2680 = vmatpush.bf16.msra.mxu0 0
  %2681 = vmatpush.bf16.msra.mxu0 0
  %2682 = vmatpush.bf16.msra.mxu0 0
  %2683 = vmatpush.bf16.msra.mxu0 0
  %2684 = vmatpush.bf16.msra.mxu0 0
  %2685 = vmatpush.bf16.msra.mxu0 %v2578
  %2686 = vmatpush.bf16.msra.mxu0 %v2577
  %2687 = vmatmul.bf16.gmra.mxu0 %v2677
  %v2688 = vpop.f32.mrf.mxu0
  %v2689 = vadd.f32 %v2567, %v2688
  %v2690 = vpop.f32.mrf.mxu0
  %2691 = vdwg.mxu0
  %2693 = vrot.lane.b32.xlu0 %v2604, 16
  %v2694 = vpop.permute.xlu0 %2693
  %2697 = vrot.lane.b32.xlu0 %v2617, 32
  %v2698 = vpop.permute.xlu0 %2697
  %2701 = vrot.lane.b32.xlu0 %v2630, 48
  %v2702 = vpop.permute.xlu0 %2701
  %2705 = vrot.lane.b32.xlu0 %v2643, 64
  %v2706 = vpop.permute.xlu0 %2705
  %2709 = vrot.lane.b32.xlu0 %v2656, 80
  %v2710 = vpop.permute.xlu0 %2709
  %2713 = vrot.lane.b32.xlu0 %v2669, 96
  %v2714 = vpop.permute.xlu0 %2713
  %2717 = vrot.lane.b32.xlu0 %v2689, 112
  %v2718 = vpop.permute.xlu0 %2717
  %v2720 = vsel %vm87, %v2591, %v2694
  %v2721 = vsel %vm252, %v2720, %v2698
  %vm2722 = vcmask 392192
  %v2723 = vsel %vm2722, %v2721, %v2702
  %vm2724 = vcmask 523264
  %v2725 = vsel %vm2724, %v2723, %v2706
  %vm2726 = vcmask 654336
  %v2727 = vsel %vm2726, %v2725, %v2710
  %vm2728 = vcmask 785408
  %v2729 = vsel %vm2728, %v2727, %v2714
  %vm2730 = vcmask 916480
  %v2731 = vsel %vm2730, %v2729, %v2718
  %2732 = vst [vmem:[%s22] sm:$0xff] %v2731
  // Predicated region
  $region90: #{gru_vae_forward.1} parent=0 // pred_check
    _
  $region91: #{gru_vae_forward.1} parent=0 // pred_check_branch
    %2734 = sbr.rel (0) target = $region93
  $region92: #{gru_vae_forward.1} parent=0 // pred_region
    _
  $region93: #{gru_vae_forward.1} parent=0 // pred_fallthru
    _
  // Predicated region
  $region94: #{gru_vae_forward.1} parent=0 // pred_check
    _
  $region95: #{gru_vae_forward.1} parent=0 // pred_check_branch
    %2736 = sbr.rel (0) target = $region97
  $region96: #{gru_vae_forward.1} parent=0 // pred_region
    _
  $region97: #{gru_vae_forward.1} parent=0 // pred_fallthru
    _
  // Predicated region
  $region98: #{gru_vae_forward.1} parent=0 // pred_check
    _
  $region99: #{gru_vae_forward.1} parent=0 // pred_check_branch
    %2738 = sbr.rel (0) target = $region101
  $region100: #{gru_vae_forward.1} parent=0 // pred_region
    _
  $region101: #{gru_vae_forward.1} parent=0 // pred_fallthru
    _
  // Predicated region
  $region102: #{gru_vae_forward.1} parent=0 // pred_check
    _
  $region103: #{gru_vae_forward.1} parent=0 // pred_check_branch
    %2740 = sbr.rel (0) target = $region105
  $region104: #{gru_vae_forward.1} parent=0 // pred_region
    _
  $region105: #{gru_vae_forward.1} parent=0 // pred_fallthru
    _

</llo_original>
